<compile_context>
chip_gen: v7x
topology: tpu7x:2x2x1
jax: 0.10.0
libtpu: 0.0.40
codegen_flags: <defaults>
</compile_context>

<pallas_src>
import functools
import math

import jax
import jax.numpy as jnp
from jax.experimental import pallas as pl
from jax.experimental.pallas import tpu as pltpu

_VMEM_LIMIT = 32 * 1024 * 1024   # > v5e's 16 MiB scoped default, safe on all chips


def _round_up(x, m):
    return (x + m - 1) // m * m


def _largest_divisor(n, multiple, cap):
    """Largest d <= cap with d % multiple == 0 and n % d == 0 (None if absent)."""
    d = min(cap, n)
    d -= d % multiple
    while d >= multiple:
        if n % d == 0:
            return d
        d -= multiple
    return None


# ----------------------------- linear kernel -------------------------------

def _linear_kernel(x_ref, w_ref, b_ref, o_ref, *, activation):
    y = jnp.dot(x_ref[...], w_ref[...], preferred_element_type=jnp.float32)
    y = y + b_ref[...].astype(jnp.float32)
    if activation == "gelu":
        # TODO(synk): HF BERT's default GELU is erf-based; the tanh form ("gelu_new")
        # keeps the transcendental on the EUP slot but drifts slightly.
        y = 0.5 * y * (1.0 + jnp.tanh(0.7978845608028654 * (y + 0.044715 * y * y * y)))
    o_ref[...] = y.astype(o_ref.dtype)


def pallas_linear(x, w, b, activation=None, out_dtype=jnp.bfloat16):
    M, K = x.shape
    N = w.shape[1]
    x = x.astype(jnp.bfloat16)
    w = w.astype(jnp.bfloat16)
    b = b.astype(jnp.float32).reshape(1, N)

    # Exact-divisor tiles: no padding, no post-slice glue.
    tm = _largest_divisor(M, 8, 512) or M
    tn = _largest_divisor(N, 128, 512) or N

    # Weight-stationary grid order: weight/bias block index on the slow (outer)
    # axis -> each (K, tn) weight tile is fetched once and reused across every
    # row tile (only activations get re-streamed).
    return pl.pallas_call(
        functools.partial(_linear_kernel, activation=activation),
        out_shape=jax.ShapeDtypeStruct((M, N), out_dtype),
        grid=(N // tn, M // tm),
        in_specs=[
            pl.BlockSpec((tm, K), lambda j, i: (i, 0)),
            pl.BlockSpec((K, tn), lambda j, i: (0, j)),
            pl.BlockSpec((1, tn), lambda j, i: (0, j)),
        ],
        out_specs=pl.BlockSpec((tm, tn), lambda j, i: (i, j)),
        compiler_params=pltpu.CompilerParams(
            dimension_semantics=("parallel", "parallel"),
            vmem_limit_bytes=_VMEM_LIMIT),
    )(x, w, b)


# --------------------------- LayerNorm kernels ------------------------------

def _ln_finish(x, g_ref, b_ref, o_ref, eps):
    mu = jnp.mean(x, axis=-1, keepdims=True)
    var = jnp.mean((x - mu) ** 2, axis=-1, keepdims=True)
    inv = jax.lax.rsqrt(var + eps)
    o_ref[...] = ((x - mu) * inv * g_ref[...] + b_ref[...]).astype(o_ref.dtype)


def _layernorm_kernel(x_ref, g_ref, b_ref, o_ref, *, eps):
    _ln_finish(x_ref[...].astype(jnp.float32), g_ref, b_ref, o_ref, eps)


def _add_layernorm_kernel(x_ref, r_ref, g_ref, b_ref, o_ref, *, eps):
    x = x_ref[...].astype(jnp.float32) + r_ref[...].astype(jnp.float32)
    _ln_finish(x, g_ref, b_ref, o_ref, eps)


def pallas_layernorm(x, gamma, beta, residual=None, eps=1e-12, out_dtype=jnp.bfloat16):
    M, H = x.shape
    tm = _largest_divisor(M, 8, 256) or M

    row_spec = pl.BlockSpec((tm, H), lambda i: (i, 0))
    vec_spec = pl.BlockSpec((1, H), lambda i: (0, 0))
    gamma = gamma.astype(jnp.float32).reshape(1, H)
    beta = beta.astype(jnp.float32).reshape(1, H)

    if residual is None:
        kernel = functools.partial(_layernorm_kernel, eps=eps)
        in_specs = [row_spec, vec_spec, vec_spec]
        args = (x, gamma, beta)
    else:
        kernel = functools.partial(_add_layernorm_kernel, eps=eps)
        in_specs = [row_spec, row_spec, vec_spec, vec_spec]
        args = (x, residual, gamma, beta)

    return pl.pallas_call(
        kernel,
        out_shape=jax.ShapeDtypeStruct((M, H), out_dtype),
        grid=(M // tm,),
        in_specs=in_specs,
        out_specs=row_spec,
        compiler_params=pltpu.CompilerParams(
            dimension_semantics=("parallel",),
            vmem_limit_bytes=_VMEM_LIMIT),
    )(*args)


# ------------------------- flash attention kernel ---------------------------

def _flash_attention_kernel(q_ref, k_ref, v_ref, bias_ref, o_ref,
                            m_sc, l_sc, acc_sc, *,
                            heads_per_group, head_dim, scale):
    kv = pl.program_id(3)

    @pl.when(kv == 0)
    def _():
        m_sc[...] = jnp.full_like(m_sc, -1e30)
        l_sc[...] = jnp.zeros_like(l_sc)
        acc_sc[...] = jnp.zeros_like(acc_sc)

    bias = bias_ref[0]                                            # (1, tkv) f32
    # Fold the softmax scale into Q: tq*Dh multiplies instead of tq*tkv.
    q_all = (q_ref[0].astype(jnp.float32) * scale).astype(q_ref.dtype)

    for h in range(heads_per_group):                              # 1-2 heads, small tiles
        sl = slice(h * head_dim, (h + 1) * head_dim)
        s = jax.lax.dot_general(q_all[:, sl], k_ref[0, :, sl],
                                (((1,), (1,)), ((), ())),
                                preferred_element_type=jnp.float32)   # (tq, tkv)
        s = s + bias
        m_prev = m_sc[h]                                          # (tq, 1)
        m_new = jnp.maximum(m_prev, jnp.max(s, axis=-1, keepdims=True))
        alpha = jnp.exp(m_prev - m_new)
        p = jnp.exp(s - m_new)
        l_sc[h] = alpha * l_sc[h] + jnp.sum(p, axis=-1, keepdims=True)
        acc_sc[h] = alpha * acc_sc[h] + jnp.dot(
            p.astype(v_ref.dtype), v_ref[0, :, sl],
            preferred_element_type=jnp.float32)
        m_sc[h] = m_new

    @pl.when(kv == pl.num_programs(3) - 1)
    def _():
        parts = [acc_sc[h] / l_sc[h] for h in range(heads_per_group)]   # exact divide
        ctx = parts[0] if heads_per_group == 1 else jnp.concatenate(parts, axis=-1)
        o_ref[0] = ctx.astype(o_ref.dtype)        # single lane-dense (tq, Gd) store


def _q_map(off):
    return lambda b, g, qi, ki: (b, qi, off + g)


def _kv_map(off):
    return lambda b, g, qi, ki: (b, ki, off + g)


def pallas_attention(qkv, bias, heads, hidden, scale):
    """qkv: (B, S, 3H) fused projection (head-major columns). bias: (B, 1, S)."""
    B, S, _ = qkv.shape
    head_dim = hidden // heads
    gd = math.lcm(head_dim, 128)          # head-group width: 128-lane aligned slab

    if hidden % gd == 0:
        # Fast path: carve Q/K/V head-group slabs straight out of the fused QKV
        # activation with BlockSpec column-block offsets (no HBM split/transpose).
        heads_per_group = gd // head_dim
        n_groups = hidden // gd
        arrays = (qkv, qkv, qkv)
        q_off, k_off, v_off = 0, hidden // gd, 2 * (hidden // gd)
    else:
        # Unaligned hidden sizes: split Q/K/V once in JAX; all heads per step.
        gd = hidden
        heads_per_group = heads
        n_groups = 1
        arrays = (qkv[..., :hidden], qkv[..., hidden:2 * hidden], qkv[..., 2 * hidden:])
        q_off = k_off = v_off = 0

    tq = _largest_divisor(S, 8, 128) or S
    tkv = _largest_divisor(S, 128, 128) or S

    kernel = functools.partial(_flash_attention_kernel,
                               heads_per_group=heads_per_group,
                               head_dim=head_dim, scale=scale)
    return pl.pallas_call(
        kernel,
        out_shape=jax.ShapeDtypeStruct((B, S, hidden), jnp.bfloat16),
        grid=(B, n_groups, S // tq, S // tkv),
        in_specs=[
            pl.BlockSpec((1, tq, gd), _q_map(q_off)),
            pl.BlockSpec((1, tkv, gd), _kv_map(k_off)),
            pl.BlockSpec((1, tkv, gd), _kv_map(v_off)),
            pl.BlockSpec((1, 1, tkv), lambda b, g, qi, ki: (b, 0, ki)),
        ],
        out_specs=pl.BlockSpec((1, tq, gd), lambda b, g, qi, ki: (b, qi, g)),
        scratch_shapes=[
            pltpu.VMEM((heads_per_group, tq, 1), jnp.float32),          # m
            pltpu.VMEM((heads_per_group, tq, 1), jnp.float32),          # l
            pltpu.VMEM((heads_per_group, tq, head_dim), jnp.float32),   # acc
        ],
        compiler_params=pltpu.CompilerParams(
            dimension_semantics=("parallel", "parallel", "parallel", "arbitrary"),
            vmem_limit_bytes=_VMEM_LIMIT),
    )(arrays[0].astype(jnp.bfloat16), arrays[1].astype(jnp.bfloat16),
      arrays[2].astype(jnp.bfloat16), bias.astype(jnp.float32))


# --------------------------- cross-entropy kernel ---------------------------

def _cross_entropy_kernel(logits_ref, labels_ref, mask_ref, loss_ref, tot_sc, cnt_sc):
    i = pl.program_id(0)

    @pl.when(i == 0)
    def _():
        tot_sc[...] = jnp.zeros_like(tot_sc)
        cnt_sc[...] = jnp.zeros_like(cnt_sc)

    logits = logits_ref[...].astype(jnp.float32)     # (tm, Cpad); pad cols ~ -1e9
    labels = labels_ref[...]                         # (tm, 1) i32
    mask = mask_ref[...]                             # (tm, 1) f32
    m = jnp.max(logits, axis=-1, keepdims=True)
    shifted = logits - m
    lse = jnp.log(jnp.sum(jnp.exp(shifted), axis=-1, keepdims=True))
    onehot = jax.lax.broadcasted_iota(jnp.int32, logits.shape, 1) == labels
    nll = lse - jnp.sum(jnp.where(onehot, shifted, 0.0), axis=-1, keepdims=True)
    tot_sc[...] += jnp.sum(nll * mask, axis=0, keepdims=True)
    cnt_sc[...] += jnp.sum(mask, axis=0, keepdims=True)

    @pl.when(i == pl.num_programs(0) - 1)
    def _():
        loss_ref[...] = tot_sc[...] / jnp.maximum(cnt_sc[...], 1.0)


def pallas_masked_cross_entropy(logits2d, labels, mask):
    M, C = logits2d.shape
    tm = _largest_divisor(M, 8, 512) or M
    loss = pl.pallas_call(
        _cross_entropy_kernel,
        out_shape=jax.ShapeDtypeStruct((1, 1), jnp.float32),
        grid=(M // tm,),
        in_specs=[
            pl.BlockSpec((tm, C), lambda i: (i, 0)),
            pl.BlockSpec((tm, 1), lambda i: (i, 0)),
            pl.BlockSpec((tm, 1), lambda i: (i, 0)),
        ],
        out_specs=pl.BlockSpec((1, 1), lambda i: (0, 0)),
        scratch_shapes=[pltpu.VMEM((1, 1), jnp.float32),
                        pltpu.VMEM((1, 1), jnp.float32)],
        compiler_params=pltpu.CompilerParams(
            dimension_semantics=("arbitrary",),
            vmem_limit_bytes=_VMEM_LIMIT),
    )(logits2d.astype(jnp.float32),
      labels.reshape(M, 1).astype(jnp.int32),
      mask.reshape(M, 1).astype(jnp.float32))
    return loss[0, 0]


# ----------------------------- model glue (JAX) -----------------------------

def init_bert_params(key, cfg):
    keys = jax.random.split(key, 64)
    cnt = [0]

    def nrm(shape):
        k = keys[cnt[0]]
        cnt[0] += 1
        return 0.02 * jax.random.normal(k, shape, jnp.float32)

    H, I, C = cfg["hidden"], cfg["intermediate"], cfg["num_labels"]
    CPAD = max(128, _round_up(C, 128))

    cls_w = nrm((H, C))
    cls_w_pad = jnp.zeros((H, CPAD), jnp.float32).at[:, :C].set(cls_w)
    cls_b_pad = jnp.full((CPAD,), -1e9, jnp.float32).at[:C].set(0.0)

    params = {
        "word_emb": nrm((cfg["vocab"], H)),
        "pos_emb": nrm((cfg["max_pos"], H)),
        "type_emb": nrm((cfg["type_vocab"], H)),
        "emb_ln_g": jnp.ones((H,), jnp.float32),
        "emb_ln_b": jnp.zeros((H,), jnp.float32),
        "cls_w": cls_w_pad.astype(jnp.bfloat16),     # lane-dense padded classifier
        "cls_b": cls_b_pad,
        "layers": [],
    }
    for _ in range(cfg["layers"]):
        qkv_w = jnp.concatenate([nrm((H, H)), nrm((H, H)), nrm((H, H))], axis=1)
        params["layers"].append({
            "qkv_w": qkv_w.astype(jnp.bfloat16),
            "qkv_b": jnp.zeros((3 * H,), jnp.float32),
            "o_w": nrm((H, H)).astype(jnp.bfloat16), "o_b": jnp.zeros((H,), jnp.float32),
            "ln1_g": jnp.ones((H,), jnp.float32), "ln1_b": jnp.zeros((H,), jnp.float32),
            "i_w": nrm((H, I)).astype(jnp.bfloat16), "i_b": jnp.zeros((I,), jnp.float32),
            "fo_w": nrm((I, H)).astype(jnp.bfloat16), "fo_b": jnp.zeros((H,), jnp.float32),
            "ln2_g": jnp.ones((H,), jnp.float32), "ln2_b": jnp.zeros((H,), jnp.float32),
        })
    return params


def bert_model_forward(params, input_ids, attention_mask, token_type_ids, cfg):
    B, S = input_ids.shape
    H = cfg["hidden"]
    heads = cfg["heads"]
    scale = 1.0 / math.sqrt(H // heads)

    # Embedding gathers are glue (XLA fuses gather + adds); LayerNorm in Pallas.
    word = jnp.take(params["word_emb"], input_ids, axis=0)
    pos = params["pos_emb"][:S][None, :, :]
    tok = jnp.take(params["type_emb"], token_type_ids, axis=0)
    emb = (word + pos + tok).reshape(B * S, H)
    x = pallas_layernorm(emb, params["emb_ln_g"], params["emb_ln_b"])    # bf16

    # Additive attention-mask bias, shared by all heads of a batch element.
    bias = ((1.0 - attention_mask.astype(jnp.float32)) * -10000.0).reshape(B, 1, S)

    for lp in params["layers"]:
        qkv = pallas_linear(x, lp["qkv_w"], lp["qkv_b"])                 # (B*S, 3H)
        ctx = pallas_attention(qkv.reshape(B, S, 3 * H), bias, heads, H, scale)
        attn_out = pallas_linear(ctx.reshape(B * S, H), lp["o_w"], lp["o_b"])
        x = pallas_layernorm(attn_out, lp["ln1_g"], lp["ln1_b"], residual=x)
        inter = pallas_linear(x, lp["i_w"], lp["i_b"], activation="gelu")
        ffn_out = pallas_linear(inter, lp["fo_w"], lp["fo_b"])
        x = pallas_layernorm(ffn_out, lp["ln2_g"], lp["ln2_b"], residual=x)
    return x.reshape(B, S, H)


def valid_sequence_output(sequence_output, valid_mask, attention_mask):
    # JAX equivalent of the reference per-batch compaction: valid positions are
    # moved to the front (order preserved), remainder zero-filled.
    B, S, _ = sequence_output.shape
    order = jnp.argsort(1 - valid_mask, axis=1, stable=True)
    gathered = jnp.take_along_axis(sequence_output, order[:, :, None], axis=1)
    gathered_att = jnp.take_along_axis(attention_mask, order, axis=1)
    nvalid = jnp.sum(valid_mask, axis=1, keepdims=True)
    keep = jnp.arange(S)[None, :] < nvalid
    valid_output = jnp.where(keep[:, :, None], gathered, 0.0)
    valid_attention_mask = jnp.where(keep, gathered_att, 0)
    return valid_output, valid_attention_mask


def bert_token_classifier_forward(params, input_ids, attention_mask, token_type_ids,
                                  valid_mask, label_ids, mode, cfg):
    B, S = input_ids.shape
    H = cfg["hidden"]
    num_labels = cfg["num_labels"]

    sequence_output = bert_model_forward(params, input_ids, attention_mask,
                                         token_type_ids, cfg)
    sequence_output, attention_mask = valid_sequence_output(sequence_output, valid_mask,
                                                            attention_mask)
    # nn.Dropout is identity at inference time.
    # TODO(synk): train-mode dropout (pltpu.prng_*) not implemented.
    logits_pad = pallas_linear(sequence_output.reshape(B * S, H),
                               params["cls_w"], params["cls_b"],
                               out_dtype=jnp.float32)                    # (B*S, 128)
    logits = logits_pad[:, :num_labels].reshape(B, S, num_labels)

    # masked-mean cross-entropy over active positions (padded classes have
    # logit ~ -1e9, so they never contribute).
    active = (attention_mask.reshape(-1) == 1).astype(jnp.float32)
    loss = pallas_masked_cross_entropy(logits_pad, label_ids.reshape(-1), active)
    if mode == "train":
        return loss
    return logits, loss


# ----------------------------------- main -----------------------------------

if __name__ == "__main__":
    # Small but representative shapes: Dh=64 so the lane-dense head-pair /
    # fused-QKV flash path is exercised.
    cfg = dict(vocab=100, hidden=128, heads=2, layers=2, intermediate=256,
               max_pos=64, type_vocab=2, num_labels=5)
    B, S = 2, 16

    key = jax.random.PRNGKey(0)
    kp, kid, klab = jax.random.split(key, 3)
    params = init_bert_params(kp, cfg)

    input_ids = jax.random.randint(kid, (B, S), 0, cfg["vocab"], dtype=jnp.int32)
    token_type_ids = jnp.zeros((B, S), jnp.int32)
    attention_mask = (jnp.arange(S)[None, :] < jnp.array([[13], [11]])).astype(jnp.int32)
    valid_mask = attention_mask * (jnp.arange(S)[None, :] % 4 != 3).astype(jnp.int32)
    label_ids = jax.random.randint(klab, (B, S), 0, cfg["num_labels"], dtype=jnp.int32)

    fwd = jax.jit(functools.partial(bert_token_classifier_forward,
                                    mode="eval", cfg=cfg))
    logits, loss = fwd(params, input_ids, attention_mask, token_type_ids,
                       valid_mask, label_ids)

    jax.block_until_ready((logits, loss))
    assert logits.shape == (B, S, cfg["num_labels"])
    assert loss.shape == ()
    assert bool(jnp.isfinite(loss))
    print("KERNEL_OK")
</pallas_src>

<mosaic_0001>
module attributes {stable_mosaic.version = 11 : i64} {
  func.func @_layernorm_kernel(%arg0: i32, %arg1: memref<32x128xf32, #tpu.memory_space<vmem>>, %arg2: memref<1x128xf32, #tpu.memory_space<vmem>>, %arg3: memref<1x128xf32, #tpu.memory_space<vmem>>, %arg4: memref<32x128xbf16, #tpu.memory_space<vmem>>) attributes {dimension_semantics = [#tpu.dimension_semantics<parallel>], iteration_bounds = array<i64: 1>, scalar_prefetch = 0 : i64, scratch_operands = 0 : i64, tpu.core_type = #tpu.core_type<tc>, window_params = [{transform_indices = @transform_0, window_bounds = array<i64: 32, 128>}, {pipeline_mode = #tpu.pipeline_mode<synchronous>, transform_indices = @transform_1, window_bounds = array<i64: 1, 128>}, {pipeline_mode = #tpu.pipeline_mode<synchronous>, transform_indices = @transform_2, window_bounds = array<i64: 1, 128>}, {transform_indices = @transform_3, window_bounds = array<i64: 32, 128>}]} {
    %c0 = arith.constant 0 : index
    %c0_0 = arith.constant 0 : index
    %0 = vector.load %arg1[%c0, %c0_0] : memref<32x128xf32, #tpu.memory_space<vmem>>, vector<32x128xf32>
    %cst = arith.constant dense<0.000000e+00> : vector<32xf32>
    %1 = vector.multi_reduction <add>, %0, %cst [1] : vector<32x128xf32> to vector<32xf32>
    %2 = vector.shape_cast %1 : vector<32xf32> to vector<32x1xf32>
    %cst_1 = arith.constant 1.280000e+02 : f32
    %3 = vector.broadcast %cst_1 : f32 to vector<32x1xf32>
    %4 = arith.divf %2, %3 : vector<32x1xf32>
    %5 = vector.broadcast %4 : vector<32x1xf32> to vector<32x128xf32>
    %6 = arith.subf %0, %5 : vector<32x128xf32>
    %7 = arith.mulf %6, %6 : vector<32x128xf32>
    %cst_2 = arith.constant dense<0.000000e+00> : vector<32xf32>
    %8 = vector.multi_reduction <add>, %7, %cst_2 [1] : vector<32x128xf32> to vector<32xf32>
    %9 = vector.shape_cast %8 : vector<32xf32> to vector<32x1xf32>
    %cst_3 = arith.constant 1.280000e+02 : f32
    %10 = vector.broadcast %cst_3 : f32 to vector<32x1xf32>
    %11 = arith.divf %9, %10 : vector<32x1xf32>
    %cst_4 = arith.constant 9.99999996E-13 : f32
    %12 = vector.broadcast %cst_4 : f32 to vector<32x1xf32>
    %13 = arith.addf %11, %12 : vector<32x1xf32>
    %14 = math.rsqrt %13 : vector<32x1xf32>
    %15 = vector.broadcast %4 : vector<32x1xf32> to vector<32x128xf32>
    %16 = arith.subf %0, %15 : vector<32x128xf32>
    %17 = vector.broadcast %14 : vector<32x1xf32> to vector<32x128xf32>
    %18 = arith.mulf %16, %17 : vector<32x128xf32>
    %c0_5 = arith.constant 0 : index
    %c0_6 = arith.constant 0 : index
    %19 = vector.load %arg2[%c0_5, %c0_6] : memref<1x128xf32, #tpu.memory_space<vmem>>, vector<1x128xf32>
    %20 = vector.broadcast %19 : vector<1x128xf32> to vector<32x128xf32>
    %21 = arith.mulf %18, %20 : vector<32x128xf32>
    %c0_7 = arith.constant 0 : index
    %c0_8 = arith.constant 0 : index
    %22 = vector.load %arg3[%c0_7, %c0_8] : memref<1x128xf32, #tpu.memory_space<vmem>>, vector<1x128xf32>
    %23 = vector.broadcast %22 : vector<1x128xf32> to vector<32x128xf32>
    %24 = arith.addf %21, %23 : vector<32x128xf32>
    %25 = arith.truncf %24 : vector<32x128xf32> to vector<32x128xbf16>
    %c0_9 = arith.constant 0 : index
    %c0_10 = arith.constant 0 : index
    %26 = vector.load %arg4[%c0_9, %c0_10] : memref<32x128xbf16, #tpu.memory_space<vmem>>, vector<32x128xbf16>
    tpu.vector_store %arg4[%c0_9, %c0_10], %25 {strides = array<i32>} : memref<32x128xbf16, #tpu.memory_space<vmem>>, vector<32x128xbf16>,
    return
  }
  func.func @transform_0(%arg0: i32) -> (i32, i32) {
    %c0_i32 = arith.constant 0 : i32
    %c0_i32_0 = arith.constant 0 : i32
    return %arg0, %c0_i32 : i32, i32
  }
  func.func @transform_1(%arg0: i32) -> (i32, i32) {
    %c0_i32 = arith.constant 0 : i32
    %c0_i32_0 = arith.constant 0 : i32
    %c0_i32_1 = arith.constant 0 : i32
    return %c0_i32, %c0_i32_0 : i32, i32
  }
  func.func @transform_2(%arg0: i32) -> (i32, i32) {
    %c0_i32 = arith.constant 0 : i32
    %c0_i32_0 = arith.constant 0 : i32
    %c0_i32_1 = arith.constant 0 : i32
    return %c0_i32, %c0_i32_0 : i32, i32
  }
  func.func @transform_3(%arg0: i32) -> (i32, i32) {
    %c0_i32 = arith.constant 0 : i32
    %c0_i32_0 = arith.constant 0 : i32
    return %arg0, %c0_i32 : i32, i32
  }
}

module attributes {stable_mosaic.version = 11 : i64} {
  func.func @_linear_kernel(%arg0: i32, %arg1: i32, %arg2: memref<32x128xbf16, #tpu.memory_space<vmem>>, %arg3: memref<128x384xbf16, #tpu.memory_space<vmem>>, %arg4: memref<1x384xf32, #tpu.memory_space<vmem>>, %arg5: memref<32x384xbf16, #tpu.memory_space<vmem>>) attributes {dimension_semantics = [#tpu.dimension_semantics<parallel>, #tpu.dimension_semantics<parallel>], iteration_bounds = array<i64: 1, 1>, scalar_prefetch = 0 : i64, scratch_operands = 0 : i64, tpu.core_type = #tpu.core_type<tc>, window_params = [{transform_indices = @transform_0, window_bounds = array<i64: 32, 128>}, {transform_indices = @transform_1, window_bounds = array<i64: 128, 384>}, {transform_indices = @transform_2, window_bounds = array<i64: 1, 384>}, {transform_indices = @transform_3, window_bounds = array<i64: 32, 384>}]} {
    %c0 = arith.constant 0 : index
    %c0_0 = arith.constant 0 : index
    %0 = vector.load %arg2[%c0, %c0_0] : memref<32x128xbf16, #tpu.memory_space<vmem>>, vector<32x128xbf16>
    %c0_1 = arith.constant 0 : index
    %c0_2 = arith.constant 0 : index
    %1 = vector.load %arg3[%c0_1, %c0_2] : memref<128x384xbf16, #tpu.memory_space<vmem>>, vector<128x384xbf16>
    %cst = arith.constant dense<0.000000e+00> : vector<32x384xf32>
    %2 = tpu.matmul %0, %1, %cst {dimension_numbers = #tpu.dot_dimension_numbers<[1], [0], [0], [1], [0, 0, 1, 1], [], []>} : vector<32x128xbf16>, vector<128x384xbf16>, vector<32x384xf32> -> vector<32x384xf32>
    %c0_3 = arith.constant 0 : index
    %c0_4 = arith.constant 0 : index
    %3 = vector.load %arg4[%c0_3, %c0_4] : memref<1x384xf32, #tpu.memory_space<vmem>>, vector<1x384xf32>
    %4 = vector.broadcast %3 : vector<1x384xf32> to vector<32x384xf32>
    %5 = arith.addf %2, %4 : vector<32x384xf32>
    %6 = arith.truncf %5 : vector<32x384xf32> to vector<32x384xbf16>
    %c0_5 = arith.constant 0 : index
    %c0_6 = arith.constant 0 : index
    %7 = vector.load %arg5[%c0_5, %c0_6] : memref<32x384xbf16, #tpu.memory_space<vmem>>, vector<32x384xbf16>
    tpu.vector_store %arg5[%c0_5, %c0_6], %6 {strides = array<i32>} : memref<32x384xbf16, #tpu.memory_space<vmem>>, vector<32x384xbf16>,
    return
  }
  func.func @transform_0(%arg0: i32, %arg1: i32) -> (i32, i32) {
    %c0_i32 = arith.constant 0 : i32
    %c0_i32_0 = arith.constant 0 : i32
    return %arg1, %c0_i32 : i32, i32
  }
  func.func @transform_1(%arg0: i32, %arg1: i32) -> (i32, i32) {
    %c0_i32 = arith.constant 0 : i32
    %c0_i32_0 = arith.constant 0 : i32
    return %c0_i32, %arg0 : i32, i32
  }
  func.func @transform_2(%arg0: i32, %arg1: i32) -> (i32, i32) {
    %c0_i32 = arith.constant 0 : i32
    %c0_i32_0 = arith.constant 0 : i32
    return %c0_i32, %arg0 : i32, i32
  }
  func.func @transform_3(%arg0: i32, %arg1: i32) -> (i32, i32) {
    %c0_i32 = arith.constant 0 : i32
    return %arg1, %arg0 : i32, i32
  }
}

module attributes {stable_mosaic.version = 11 : i64} {
  func.func @_linear_kernel(%arg0: i32, %arg1: i32, %arg2: memref<32x128xbf16, #tpu.memory_space<vmem>>, %arg3: memref<128x128xbf16, #tpu.memory_space<vmem>>, %arg4: memref<1x128xf32, #tpu.memory_space<vmem>>, %arg5: memref<32x128xbf16, #tpu.memory_space<vmem>>) attributes {dimension_semantics = [#tpu.dimension_semantics<parallel>, #tpu.dimension_semantics<parallel>], iteration_bounds = array<i64: 1, 1>, scalar_prefetch = 0 : i64, scratch_operands = 0 : i64, tpu.core_type = #tpu.core_type<tc>, window_params = [{transform_indices = @transform_0, window_bounds = array<i64: 32, 128>}, {transform_indices = @transform_1, window_bounds = array<i64: 128, 128>}, {transform_indices = @transform_2, window_bounds = array<i64: 1, 128>}, {transform_indices = @transform_3, window_bounds = array<i64: 32, 128>}]} {
    %c0 = arith.constant 0 : index
    %c0_0 = arith.constant 0 : index
    %0 = vector.load %arg2[%c0, %c0_0] : memref<32x128xbf16, #tpu.memory_space<vmem>>, vector<32x128xbf16>
    %c0_1 = arith.constant 0 : index
    %c0_2 = arith.constant 0 : index
    %1 = vector.load %arg3[%c0_1, %c0_2] : memref<128x128xbf16, #tpu.memory_space<vmem>>, vector<128x128xbf16>
    %cst = arith.constant dense<0.000000e+00> : vector<32x128xf32>
    %2 = tpu.matmul %0, %1, %cst {dimension_numbers = #tpu.dot_dimension_numbers<[1], [0], [0], [1], [0, 0, 1, 1], [], []>} : vector<32x128xbf16>, vector<128x128xbf16>, vector<32x128xf32> -> vector<32x128xf32>
    %c0_3 = arith.constant 0 : index
    %c0_4 = arith.constant 0 : index
    %3 = vector.load %arg4[%c0_3, %c0_4] : memref<1x128xf32, #tpu.memory_space<vmem>>, vector<1x128xf32>
    %4 = vector.broadcast %3 : vector<1x128xf32> to vector<32x128xf32>
    %5 = arith.addf %2, %4 : vector<32x128xf32>
    %6 = arith.truncf %5 : vector<32x128xf32> to vector<32x128xbf16>
    %c0_5 = arith.constant 0 : index
    %c0_6 = arith.constant 0 : index
    %7 = vector.load %arg5[%c0_5, %c0_6] : memref<32x128xbf16, #tpu.memory_space<vmem>>, vector<32x128xbf16>
    tpu.vector_store %arg5[%c0_5, %c0_6], %6 {strides = array<i32>} : memref<32x128xbf16, #tpu.memory_space<vmem>>, vector<32x128xbf16>,
    return
  }
  func.func @transform_0(%arg0: i32, %arg1: i32) -> (i32, i32) {
    %c0_i32 = arith.constant 0 : i32
    %c0_i32_0 = arith.constant 0 : i32
    return %arg1, %c0_i32 : i32, i32
  }
  func.func @transform_1(%arg0: i32, %arg1: i32) -> (i32, i32) {
    %c0_i32 = arith.constant 0 : i32
    %c0_i32_0 = arith.constant 0 : i32
    return %c0_i32, %arg0 : i32, i32
  }
  func.func @transform_2(%arg0: i32, %arg1: i32) -> (i32, i32) {
    %c0_i32 = arith.constant 0 : i32
    %c0_i32_0 = arith.constant 0 : i32
    return %c0_i32, %arg0 : i32, i32
  }
  func.func @transform_3(%arg0: i32, %arg1: i32) -> (i32, i32) {
    %c0_i32 = arith.constant 0 : i32
    return %arg1, %arg0 : i32, i32
  }
}

module attributes {stable_mosaic.version = 11 : i64} {
  func.func @_flash_attention_kernel(%arg0: i32, %arg1: i32, %arg2: i32, %arg3: i32, %arg4: memref<1x16x128xbf16, #tpu.memory_space<vmem>>, %arg5: memref<1x16x128xbf16, #tpu.memory_space<vmem>>, %arg6: memref<1x16x128xbf16, #tpu.memory_space<vmem>>, %arg7: memref<1x1x16xf32, #tpu.memory_space<vmem>>, %arg8: memref<1x16x128xbf16, #tpu.memory_space<vmem>>, %arg9: memref<2x16x1xf32, #tpu.memory_space<vmem>>, %arg10: memref<2x16x1xf32, #tpu.memory_space<vmem>>, %arg11: memref<2x16x64xf32, #tpu.memory_space<vmem>>) attributes {dimension_semantics = [#tpu.dimension_semantics<parallel>, #tpu.dimension_semantics<parallel>, #tpu.dimension_semantics<parallel>, #tpu.dimension_semantics<arbitrary>], iteration_bounds = array<i64: 2, 1, 1, 1>, scalar_prefetch = 0 : i64, scratch_operands = 3 : i64, tpu.core_type = #tpu.core_type<tc>, window_params = [{transform_indices = @transform_0, window_bounds = array<i64: 1, 16, 128>}, {transform_indices = @transform_1, window_bounds = array<i64: 1, 16, 128>}, {transform_indices = @transform_2, window_bounds = array<i64: 1, 16, 128>}, {transform_indices = @transform_3, window_bounds = array<i64: 1, 1, 16>}, {transform_indices = @transform_4, window_bounds = array<i64: 1, 16, 128>}]} {
    %c0_i32 = arith.constant 0 : i32
    %0 = arith.cmpi eq, %arg3, %c0_i32 : i32
    %1 = arith.extui %0 : i1 to i32
    %c0_i32_0 = arith.constant 0 : i32
    %2 = arith.cmpi ne, %1, %c0_i32_0 : i32
    scf.if %2 {
      %cst_62 = arith.constant -1.000000e+30 : f32
      %94 = vector.broadcast %cst_62 : f32 to vector<2x16x1xf32>
      %c0_63 = arith.constant 0 : index
      %c0_64 = arith.constant 0 : index
      %c0_65 = arith.constant 0 : index
      %95 = vector.load %arg9[%c0_63, %c0_64, %c0_65] : memref<2x16x1xf32, #tpu.memory_space<vmem>>, vector<2x16x1xf32>
      tpu.vector_store %arg9[%c0_63, %c0_64, %c0_65], %94 {strides = array<i32>} : memref<2x16x1xf32, #tpu.memory_space<vmem>>, vector<2x16x1xf32>,
      %cst_66 = arith.constant 0.000000e+00 : f32
      %96 = vector.broadcast %cst_66 : f32 to vector<2x16x1xf32>
      %c0_67 = arith.constant 0 : index
      %c0_68 = arith.constant 0 : index
      %c0_69 = arith.constant 0 : index
      %97 = vector.load %arg10[%c0_67, %c0_68, %c0_69] : memref<2x16x1xf32, #tpu.memory_space<vmem>>, vector<2x16x1xf32>
      tpu.vector_store %arg10[%c0_67, %c0_68, %c0_69], %96 {strides = array<i32>} : memref<2x16x1xf32, #tpu.memory_space<vmem>>, vector<2x16x1xf32>,
      %cst_70 = arith.constant 0.000000e+00 : f32
      %98 = vector.broadcast %cst_70 : f32 to vector<2x16x64xf32>
      %c0_71 = arith.constant 0 : index
      %c0_72 = arith.constant 0 : index
      %c0_73 = arith.constant 0 : index
      %99 = vector.load %arg11[%c0_71, %c0_72, %c0_73] : memref<2x16x64xf32, #tpu.memory_space<vmem>>, vector<2x16x64xf32>
      tpu.vector_store %arg11[%c0_71, %c0_72, %c0_73], %98 {strides = array<i32>} : memref<2x16x64xf32, #tpu.memory_space<vmem>>, vector<2x16x64xf32>,
    } else {
    }
    %c0 = arith.constant 0 : index
    %c0_1 = arith.constant 0 : index
    %c0_2 = arith.constant 0 : index
    %3 = vector.load %arg7[%c0, %c0_1, %c0_2] : memref<1x1x16xf32, #tpu.memory_space<vmem>>, vector<1x1x16xf32>
    %4 = vector.shape_cast %3 : vector<1x1x16xf32> to vector<1x16xf32>
    %c0_3 = arith.constant 0 : index
    %c0_4 = arith.constant 0 : index
    %c0_5 = arith.constant 0 : index
    %5 = vector.load %arg4[%c0_3, %c0_4, %c0_5] : memref<1x16x128xbf16, #tpu.memory_space<vmem>>, vector<1x16x128xbf16>
    %6 = vector.shape_cast %5 : vector<1x16x128xbf16> to vector<16x128xbf16>
    %7 = arith.extf %6 : vector<16x128xbf16> to vector<16x128xf32>
    %cst = arith.constant 1.250000e-01 : f32
    %8 = vector.broadcast %cst : f32 to vector<16x128xf32>
    %9 = arith.mulf %7, %8 : vector<16x128xf32>
    %10 = arith.truncf %9 : vector<16x128xf32> to vector<16x128xbf16>
    %11 = vector.extract_strided_slice %10 {offsets = [0, 0], sizes = [16, 64], strides = [1, 1]} : vector<16x128xbf16> to vector<16x64xbf16>
    %c0_6 = arith.constant 0 : index
    %c0_7 = arith.constant 0 : index
    %c0_8 = arith.constant 0 : index
    %12 = vector.load %arg5[%c0_6, %c0_7, %c0_8] : memref<1x16x128xbf16, #tpu.memory_space<vmem>>, vector<1x16x64xbf16>
    %13 = vector.shape_cast %12 : vector<1x16x64xbf16> to vector<16x64xbf16>
    %cst_9 = arith.constant dense<0.000000e+00> : vector<16x16xf32>
    %14 = tpu.matmul %11, %13, %cst_9 {dimension_numbers = #tpu.dot_dimension_numbers<[1], [1], [0], [0], [0, 0, 1, 0], [], []>} : vector<16x64xbf16>, vector<16x64xbf16>, vector<16x16xf32> -> vector<16x16xf32>
    %15 = vector.broadcast %4 : vector<1x16xf32> to vector<16x16xf32>
    %16 = arith.addf %14, %15 : vector<16x16xf32>
    %c0_10 = arith.constant 0 : index
    %c0_11 = arith.constant 0 : index
    %c0_12 = arith.constant 0 : index
    %17 = vector.load %arg9[%c0_10, %c0_11, %c0_12] : memref<2x16x1xf32, #tpu.memory_space<vmem>>, vector<1x16x1xf32>
    %18 = vector.shape_cast %17 : vector<1x16x1xf32> to vector<16x1xf32>
    %cst_13 = arith.constant dense<0xFF800000> : vector<16xf32>
    %19 = vector.multi_reduction <maximumf>, %16, %cst_13 [1] : vector<16x16xf32> to vector<16xf32>
    %20 = vector.shape_cast %19 : vector<16xf32> to vector<16x1xf32>
    %21 = arith.maximumf %18, %20 : vector<16x1xf32>
    %22 = arith.subf %18, %21 : vector<16x1xf32>
    %23 = math.exp %22 : vector<16x1xf32>
    %24 = vector.broadcast %21 : vector<16x1xf32> to vector<16x16xf32>
    %25 = arith.subf %16, %24 : vector<16x16xf32>
    %26 = math.exp %25 : vector<16x16xf32>
    %c0_14 = arith.constant 0 : index
    %c0_15 = arith.constant 0 : index
    %c0_16 = arith.constant 0 : index
    %27 = vector.load %arg10[%c0_14, %c0_15, %c0_16] : memref<2x16x1xf32, #tpu.memory_space<vmem>>, vector<1x16x1xf32>
    %28 = vector.shape_cast %27 : vector<1x16x1xf32> to vector<16x1xf32>
    %29 = arith.mulf %23, %28 : vector<16x1xf32>
    %cst_17 = arith.constant dense<0.000000e+00> : vector<16xf32>
    %30 = vector.multi_reduction <add>, %26, %cst_17 [1] : vector<16x16xf32> to vector<16xf32>
    %31 = vector.shape_cast %30 : vector<16xf32> to vector<16x1xf32>
    %32 = arith.addf %29, %31 : vector<16x1xf32>
    %c0_18 = arith.constant 0 : index
    %c0_19 = arith.constant 0 : index
    %c0_20 = arith.constant 0 : index
    %33 = vector.load %arg10[%c0_18, %c0_19, %c0_20] : memref<2x16x1xf32, #tpu.memory_space<vmem>>, vector<1x16x1xf32>
    %34 = vector.shape_cast %33 : vector<1x16x1xf32> to vector<16x1xf32>
    %35 = vector.shape_cast %32 : vector<16x1xf32> to vector<1x16x1xf32>
    tpu.vector_store %arg10[%c0_18, %c0_19, %c0_20], %35 {strides = array<i32>} : memref<2x16x1xf32, #tpu.memory_space<vmem>>, vector<1x16x1xf32>,
    %c0_21 = arith.constant 0 : index
    %c0_22 = arith.constant 0 : index
    %c0_23 = arith.constant 0 : index
    %36 = vector.load %arg11[%c0_21, %c0_22, %c0_23] : memref<2x16x64xf32, #tpu.memory_space<vmem>>, vector<1x16x64xf32>
    %37 = vector.shape_cast %36 : vector<1x16x64xf32> to vector<16x64xf32>
    %38 = vector.broadcast %23 : vector<16x1xf32> to vector<16x64xf32>
    %39 = arith.mulf %38, %37 : vector<16x64xf32>
    %40 = arith.truncf %26 : vector<16x16xf32> to vector<16x16xbf16>
    %c0_24 = arith.constant 0 : index
    %c0_25 = arith.constant 0 : index
    %c0_26 = arith.constant 0 : index
    %41 = vector.load %arg6[%c0_24, %c0_25, %c0_26] : memref<1x16x128xbf16, #tpu.memory_space<vmem>>, vector<1x16x64xbf16>
    %42 = vector.shape_cast %41 : vector<1x16x64xbf16> to vector<16x64xbf16>
    %cst_27 = arith.constant dense<0.000000e+00> : vector<16x64xf32>
    %43 = tpu.matmul %40, %42, %cst_27 {dimension_numbers = #tpu.dot_dimension_numbers<[1], [0], [0], [1], [0, 0, 1, 1], [], []>} : vector<16x16xbf16>, vector<16x64xbf16>, vector<16x64xf32> -> vector<16x64xf32>
    %44 = arith.addf %39, %43 : vector<16x64xf32>
    %c0_28 = arith.constant 0 : index
    %c0_29 = arith.constant 0 : index
    %c0_30 = arith.constant 0 : index
    %45 = vector.load %arg11[%c0_28, %c0_29, %c0_30] : memref<2x16x64xf32, #tpu.memory_space<vmem>>, vector<1x16x64xf32>
    %46 = vector.shape_cast %45 : vector<1x16x64xf32> to vector<16x64xf32>
    %47 = vector.shape_cast %44 : vector<16x64xf32> to vector<1x16x64xf32>
    tpu.vector_store %arg11[%c0_28, %c0_29, %c0_30], %47 {strides = array<i32>} : memref<2x16x64xf32, #tpu.memory_space<vmem>>, vector<1x16x64xf32>,
    %c0_31 = arith.constant 0 : index
    %c0_32 = arith.constant 0 : index
    %c0_33 = arith.constant 0 : index
    %48 = vector.load %arg9[%c0_31, %c0_32, %c0_33] : memref<2x16x1xf32, #tpu.memory_space<vmem>>, vector<1x16x1xf32>
    %49 = vector.shape_cast %48 : vector<1x16x1xf32> to vector<16x1xf32>
    %50 = vector.shape_cast %21 : vector<16x1xf32> to vector<1x16x1xf32>
    tpu.vector_store %arg9[%c0_31, %c0_32, %c0_33], %50 {strides = array<i32>} : memref<2x16x1xf32, #tpu.memory_space<vmem>>, vector<1x16x1xf32>,
    %51 = vector.extract_strided_slice %10 {offsets = [0, 64], sizes = [16, 64], strides = [1, 1]} : vector<16x128xbf16> to vector<16x64xbf16>
    %c0_34 = arith.constant 0 : index
    %c0_35 = arith.constant 0 : index
    %c64 = arith.constant 64 : index
    %52 = vector.load %arg5[%c0_34, %c0_35, %c64] : memref<1x16x128xbf16, #tpu.memory_space<vmem>>, vector<1x16x64xbf16>
    %53 = vector.shape_cast %52 : vector<1x16x64xbf16> to vector<16x64xbf16>
    %cst_36 = arith.constant dense<0.000000e+00> : vector<16x16xf32>
    %54 = tpu.matmul %51, %53, %cst_36 {dimension_numbers = #tpu.dot_dimension_numbers<[1], [1], [0], [0], [0, 0, 1, 0], [], []>} : vector<16x64xbf16>, vector<16x64xbf16>, vector<16x16xf32> -> vector<16x16xf32>
    %55 = vector.broadcast %4 : vector<1x16xf32> to vector<16x16xf32>
    %56 = arith.addf %54, %55 : vector<16x16xf32>
    %c1 = arith.constant 1 : index
    %c0_37 = arith.constant 0 : index
    %c0_38 = arith.constant 0 : index
    %57 = vector.load %arg9[%c1, %c0_37, %c0_38] : memref<2x16x1xf32, #tpu.memory_space<vmem>>, vector<1x16x1xf32>
    %58 = vector.shape_cast %57 : vector<1x16x1xf32> to vector<16x1xf32>
    %cst_39 = arith.constant dense<0xFF800000> : vector<16xf32>
    %59 = vector.multi_reduction <maximumf>, %56, %cst_39 [1] : vector<16x16xf32> to vector<16xf32>
    %60 = vector.shape_cast %59 : vector<16xf32> to vector<16x1xf32>
    %61 = arith.maximumf %58, %60 : vector<16x1xf32>
    %62 = arith.subf %58, %61 : vector<16x1xf32>
    %63 = math.exp %62 : vector<16x1xf32>
    %64 = vector.broadcast %61 : vector<16x1xf32> to vector<16x16xf32>
    %65 = arith.subf %56, %64 : vector<16x16xf32>
    %66 = math.exp %65 : vector<16x16xf32>
    %c1_40 = arith.constant 1 : index
    %c0_41 = arith.constant 0 : index
    %c0_42 = arith.constant 0 : index
    %67 = vector.load %arg10[%c1_40, %c0_41, %c0_42] : memref<2x16x1xf32, #tpu.memory_space<vmem>>, vector<1x16x1xf32>
    %68 = vector.shape_cast %67 : vector<1x16x1xf32> to vector<16x1xf32>
    %69 = arith.mulf %63, %68 : vector<16x1xf32>
    %cst_43 = arith.constant dense<0.000000e+00> : vector<16xf32>
    %70 = vector.multi_reduction <add>, %66, %cst_43 [1] : vector<16x16xf32> to vector<16xf32>
    %71 = vector.shape_cast %70 : vector<16xf32> to vector<16x1xf32>
    %72 = arith.addf %69, %71 : vector<16x1xf32>
    %c1_44 = arith.constant 1 : index
    %c0_45 = arith.constant 0 : index
    %c0_46 = arith.constant 0 : index
    %73 = vector.load %arg10[%c1_44, %c0_45, %c0_46] : memref<2x16x1xf32, #tpu.memory_space<vmem>>, vector<1x16x1xf32>
    %74 = vector.shape_cast %73 : vector<1x16x1xf32> to vector<16x1xf32>
    %75 = vector.shape_cast %72 : vector<16x1xf32> to vector<1x16x1xf32>
    tpu.vector_store %arg10[%c1_44, %c0_45, %c0_46], %75 {strides = array<i32>} : memref<2x16x1xf32, #tpu.memory_space<vmem>>, vector<1x16x1xf32>,
    %c1_47 = arith.constant 1 : index
    %c0_48 = arith.constant 0 : index
    %c0_49 = arith.constant 0 : index
    %76 = vector.load %arg11[%c1_47, %c0_48, %c0_49] : memref<2x16x64xf32, #tpu.memory_space<vmem>>, vector<1x16x64xf32>
    %77 = vector.shape_cast %76 : vector<1x16x64xf32> to vector<16x64xf32>
    %78 = vector.broadcast %63 : vector<16x1xf32> to vector<16x64xf32>
    %79 = arith.mulf %78, %77 : vector<16x64xf32>
    %80 = arith.truncf %66 : vector<16x16xf32> to vector<16x16xbf16>
    %c0_50 = arith.constant 0 : index
    %c0_51 = arith.constant 0 : index
    %c64_52 = arith.constant 64 : index
    %81 = vector.load %arg6[%c0_50, %c0_51, %c64_52] : memref<1x16x128xbf16, #tpu.memory_space<vmem>>, vector<1x16x64xbf16>
    %82 = vector.shape_cast %81 : vector<1x16x64xbf16> to vector<16x64xbf16>
    %cst_53 = arith.constant dense<0.000000e+00> : vector<16x64xf32>
    %83 = tpu.matmul %80, %82, %cst_53 {dimension_numbers = #tpu.dot_dimension_numbers<[1], [0], [0], [1], [0, 0, 1, 1], [], []>} : vector<16x16xbf16>, vector<16x64xbf16>, vector<16x64xf32> -> vector<16x64xf32>
    %84 = arith.addf %79, %83 : vector<16x64xf32>
    %c1_54 = arith.constant 1 : index
    %c0_55 = arith.constant 0 : index
    %c0_56 = arith.constant 0 : index
    %85 = vector.load %arg11[%c1_54, %c0_55, %c0_56] : memref<2x16x64xf32, #tpu.memory_space<vmem>>, vector<1x16x64xf32>
    %86 = vector.shape_cast %85 : vector<1x16x64xf32> to vector<16x64xf32>
    %87 = vector.shape_cast %84 : vector<16x64xf32> to vector<1x16x64xf32>
    tpu.vector_store %arg11[%c1_54, %c0_55, %c0_56], %87 {strides = array<i32>} : memref<2x16x64xf32, #tpu.memory_space<vmem>>, vector<1x16x64xf32>,
    %c1_57 = arith.constant 1 : index
    %c0_58 = arith.constant 0 : index
    %c0_59 = arith.constant 0 : index
    %88 = vector.load %arg9[%c1_57, %c0_58, %c0_59] : memref<2x16x1xf32, #tpu.memory_space<vmem>>, vector<1x16x1xf32>
    %89 = vector.shape_cast %88 : vector<1x16x1xf32> to vector<16x1xf32>
    %90 = vector.shape_cast %61 : vector<16x1xf32> to vector<1x16x1xf32>
    tpu.vector_store %arg9[%c1_57, %c0_58, %c0_59], %90 {strides = array<i32>} : memref<2x16x1xf32, #tpu.memory_space<vmem>>, vector<1x16x1xf32>,
    %c0_i32_60 = arith.constant 0 : i32
    %91 = arith.cmpi eq, %arg3, %c0_i32_60 : i32
    %92 = arith.extui %91 : i1 to i32
    %c0_i32_61 = arith.constant 0 : i32
    %93 = arith.cmpi ne, %92, %c0_i32_61 : i32
    scf.if %93 {
      %c0_62 = arith.constant 0 : index
      %c0_63 = arith.constant 0 : index
      %c0_64 = arith.constant 0 : index
      %94 = vector.load %arg11[%c0_62, %c0_63, %c0_64] : memref<2x16x64xf32, #tpu.memory_space<vmem>>, vector<1x16x64xf32>
      %95 = vector.shape_cast %94 : vector<1x16x64xf32> to vector<16x64xf32>
      %c0_65 = arith.constant 0 : index
      %c0_66 = arith.constant 0 : index
      %c0_67 = arith.constant 0 : index
      %96 = vector.load %arg10[%c0_65, %c0_66, %c0_67] : memref<2x16x1xf32, #tpu.memory_space<vmem>>, vector<1x16x1xf32>
      %97 = vector.shape_cast %96 : vector<1x16x1xf32> to vector<16x1xf32>
      %98 = vector.broadcast %97 : vector<16x1xf32> to vector<16x64xf32>
      %99 = arith.divf %95, %98 : vector<16x64xf32>
      %c1_68 = arith.constant 1 : index
      %c0_69 = arith.constant 0 : index
      %c0_70 = arith.constant 0 : index
      %100 = vector.load %arg11[%c1_68, %c0_69, %c0_70] : memref<2x16x64xf32, #tpu.memory_space<vmem>>, vector<1x16x64xf32>
      %101 = vector.shape_cast %100 : vector<1x16x64xf32> to vector<16x64xf32>
      %c1_71 = arith.constant 1 : index
      %c0_72 = arith.constant 0 : index
      %c0_73 = arith.constant 0 : index
      %102 = vector.load %arg10[%c1_71, %c0_72, %c0_73] : memref<2x16x1xf32, #tpu.memory_space<vmem>>, vector<1x16x1xf32>
      %103 = vector.shape_cast %102 : vector<1x16x1xf32> to vector<16x1xf32>
      %104 = vector.broadcast %103 : vector<16x1xf32> to vector<16x64xf32>
      %105 = arith.divf %101, %104 : vector<16x64xf32>
      %106 = tpu.concatenate %99, %105 in 1 : vector<16x64xf32>, vector<16x64xf32> -> vector<16x128xf32>
      %107 = arith.truncf %106 : vector<16x128xf32> to vector<16x128xbf16>
      %c0_74 = arith.constant 0 : index
      %c0_75 = arith.constant 0 : index
      %c0_76 = arith.constant 0 : index
      %108 = vector.load %arg8[%c0_74, %c0_75, %c0_76] : memref<1x16x128xbf16, #tpu.memory_space<vmem>>, vector<1x16x128xbf16>
      %109 = vector.shape_cast %108 : vector<1x16x128xbf16> to vector<16x128xbf16>
      %110 = vector.shape_cast %107 : vector<16x128xbf16> to vector<1x16x128xbf16>
      tpu.vector_store %arg8[%c0_74, %c0_75, %c0_76], %110 {strides = array<i32>} : memref<1x16x128xbf16, #tpu.memory_space<vmem>>, vector<1x16x128xbf16>,
    } else {
    }
    return
  }
  func.func @transform_0(%arg0: i32, %arg1: i32, %arg2: i32, %arg3: i32) -> (i32, i32, i32) {
    %c0_i32 = arith.constant 0 : i32
    %0 = arith.addi %c0_i32, %arg1 : i32
    %c0_i32_0 = arith.constant 0 : i32
    return %arg0, %arg2, %0 : i32, i32, i32
  }
  func.func @transform_1(%arg0: i32, %arg1: i32, %arg2: i32, %arg3: i32) -> (i32, i32, i32) {
    %c1_i32 = arith.constant 1 : i32
    %0 = arith.addi %c1_i32, %arg1 : i32
    %c0_i32 = arith.constant 0 : i32
    return %arg0, %arg3, %0 : i32, i32, i32
  }
  func.func @transform_2(%arg0: i32, %arg1: i32, %arg2: i32, %arg3: i32) -> (i32, i32, i32) {
    %c2_i32 = arith.constant 2 : i32
    %0 = arith.addi %c2_i32, %arg1 : i32
    %c0_i32 = arith.constant 0 : i32
    return %arg0, %arg3, %0 : i32, i32, i32
  }
  func.func @transform_3(%arg0: i32, %arg1: i32, %arg2: i32, %arg3: i32) -> (i32, i32, i32) {
    %c0_i32 = arith.constant 0 : i32
    %c0_i32_0 = arith.constant 0 : i32
    return %arg0, %c0_i32, %arg3 : i32, i32, i32
  }
  func.func @transform_4(%arg0: i32, %arg1: i32, %arg2: i32, %arg3: i32) -> (i32, i32, i32) {
    %c0_i32 = arith.constant 0 : i32
    return %arg0, %arg2, %arg1 : i32, i32, i32
  }
}

module attributes {stable_mosaic.version = 11 : i64} {
  func.func @_add_layernorm_kernel(%arg0: i32, %arg1: memref<32x128xbf16, #tpu.memory_space<vmem>>, %arg2: memref<32x128xbf16, #tpu.memory_space<vmem>>, %arg3: memref<1x128xf32, #tpu.memory_space<vmem>>, %arg4: memref<1x128xf32, #tpu.memory_space<vmem>>, %arg5: memref<32x128xbf16, #tpu.memory_space<vmem>>) attributes {dimension_semantics = [#tpu.dimension_semantics<parallel>], iteration_bounds = array<i64: 1>, scalar_prefetch = 0 : i64, scratch_operands = 0 : i64, tpu.core_type = #tpu.core_type<tc>, window_params = [{transform_indices = @transform_0, window_bounds = array<i64: 32, 128>}, {transform_indices = @transform_1, window_bounds = array<i64: 32, 128>}, {pipeline_mode = #tpu.pipeline_mode<synchronous>, transform_indices = @transform_2, window_bounds = array<i64: 1, 128>}, {pipeline_mode = #tpu.pipeline_mode<synchronous>, transform_indices = @transform_3, window_bounds = array<i64: 1, 128>}, {transform_indices = @transform_4, window_bounds = array<i64: 32, 128>}]} {
    %c0 = arith.constant 0 : index
    %c0_0 = arith.constant 0 : index
    %0 = vector.load %arg1[%c0, %c0_0] : memref<32x128xbf16, #tpu.memory_space<vmem>>, vector<32x128xbf16>
    %1 = arith.extf %0 : vector<32x128xbf16> to vector<32x128xf32>
    %c0_1 = arith.constant 0 : index
    %c0_2 = arith.constant 0 : index
    %2 = vector.load %arg2[%c0_1, %c0_2] : memref<32x128xbf16, #tpu.memory_space<vmem>>, vector<32x128xbf16>
    %3 = arith.extf %2 : vector<32x128xbf16> to vector<32x128xf32>
    %4 = arith.addf %1, %3 : vector<32x128xf32>
    %cst = arith.constant dense<0.000000e+00> : vector<32xf32>
    %5 = vector.multi_reduction <add>, %4, %cst [1] : vector<32x128xf32> to vector<32xf32>
    %6 = vector.shape_cast %5 : vector<32xf32> to vector<32x1xf32>
    %cst_3 = arith.constant 1.280000e+02 : f32
    %7 = vector.broadcast %cst_3 : f32 to vector<32x1xf32>
    %8 = arith.divf %6, %7 : vector<32x1xf32>
    %9 = vector.broadcast %8 : vector<32x1xf32> to vector<32x128xf32>
    %10 = arith.subf %4, %9 : vector<32x128xf32>
    %11 = arith.mulf %10, %10 : vector<32x128xf32>
    %cst_4 = arith.constant dense<0.000000e+00> : vector<32xf32>
    %12 = vector.multi_reduction <add>, %11, %cst_4 [1] : vector<32x128xf32> to vector<32xf32>
    %13 = vector.shape_cast %12 : vector<32xf32> to vector<32x1xf32>
    %cst_5 = arith.constant 1.280000e+02 : f32
    %14 = vector.broadcast %cst_5 : f32 to vector<32x1xf32>
    %15 = arith.divf %13, %14 : vector<32x1xf32>
    %cst_6 = arith.constant 9.99999996E-13 : f32
    %16 = vector.broadcast %cst_6 : f32 to vector<32x1xf32>
    %17 = arith.addf %15, %16 : vector<32x1xf32>
    %18 = math.rsqrt %17 : vector<32x1xf32>
    %19 = vector.broadcast %8 : vector<32x1xf32> to vector<32x128xf32>
    %20 = arith.subf %4, %19 : vector<32x128xf32>
    %21 = vector.broadcast %18 : vector<32x1xf32> to vector<32x128xf32>
    %22 = arith.mulf %20, %21 : vector<32x128xf32>
    %c0_7 = arith.constant 0 : index
    %c0_8 = arith.constant 0 : index
    %23 = vector.load %arg3[%c0_7, %c0_8] : memref<1x128xf32, #tpu.memory_space<vmem>>, vector<1x128xf32>
    %24 = vector.broadcast %23 : vector<1x128xf32> to vector<32x128xf32>
    %25 = arith.mulf %22, %24 : vector<32x128xf32>
    %c0_9 = arith.constant 0 : index
    %c0_10 = arith.constant 0 : index
    %26 = vector.load %arg4[%c0_9, %c0_10] : memref<1x128xf32, #tpu.memory_space<vmem>>, vector<1x128xf32>
    %27 = vector.broadcast %26 : vector<1x128xf32> to vector<32x128xf32>
    %28 = arith.addf %25, %27 : vector<32x128xf32>
    %29 = arith.truncf %28 : vector<32x128xf32> to vector<32x128xbf16>
    %c0_11 = arith.constant 0 : index
    %c0_12 = arith.constant 0 : index
    %30 = vector.load %arg5[%c0_11, %c0_12] : memref<32x128xbf16, #tpu.memory_space<vmem>>, vector<32x128xbf16>
    tpu.vector_store %arg5[%c0_11, %c0_12], %29 {strides = array<i32>} : memref<32x128xbf16, #tpu.memory_space<vmem>>, vector<32x128xbf16>,
    return
  }
  func.func @transform_0(%arg0: i32) -> (i32, i32) {
    %c0_i32 = arith.constant 0 : i32
    %c0_i32_0 = arith.constant 0 : i32
    return %arg0, %c0_i32 : i32, i32
  }
  func.func @transform_1(%arg0: i32) -> (i32, i32) {
    %c0_i32 = arith.constant 0 : i32
    %c0_i32_0 = arith.constant 0 : i32
    return %arg0, %c0_i32 : i32, i32
  }
  func.func @transform_2(%arg0: i32) -> (i32, i32) {
    %c0_i32 = arith.constant 0 : i32
    %c0_i32_0 = arith.constant 0 : i32
    %c0_i32_1 = arith.constant 0 : i32
    return %c0_i32, %c0_i32_0 : i32, i32
  }
  func.func @transform_3(%arg0: i32) -> (i32, i32) {
    %c0_i32 = arith.constant 0 : i32
    %c0_i32_0 = arith.constant 0 : i32
    %c0_i32_1 = arith.constant 0 : i32
    return %c0_i32, %c0_i32_0 : i32, i32
  }
  func.func @transform_4(%arg0: i32) -> (i32, i32) {
    %c0_i32 = arith.constant 0 : i32
    %c0_i32_0 = arith.constant 0 : i32
    return %arg0, %c0_i32 : i32, i32
  }
}

module attributes {stable_mosaic.version = 11 : i64} {
  func.func @_linear_kernel(%arg0: i32, %arg1: i32, %arg2: memref<32x256xbf16, #tpu.memory_space<vmem>>, %arg3: memref<256x128xbf16, #tpu.memory_space<vmem>>, %arg4: memref<1x128xf32, #tpu.memory_space<vmem>>, %arg5: memref<32x128xbf16, #tpu.memory_space<vmem>>) attributes {dimension_semantics = [#tpu.dimension_semantics<parallel>, #tpu.dimension_semantics<parallel>], iteration_bounds = array<i64: 1, 1>, scalar_prefetch = 0 : i64, scratch_operands = 0 : i64, tpu.core_type = #tpu.core_type<tc>, window_params = [{transform_indices = @transform_0, window_bounds = array<i64: 32, 256>}, {transform_indices = @transform_1, window_bounds = array<i64: 256, 128>}, {transform_indices = @transform_2, window_bounds = array<i64: 1, 128>}, {transform_indices = @transform_3, window_bounds = array<i64: 32, 128>}]} {
    %c0 = arith.constant 0 : index
    %c0_0 = arith.constant 0 : index
    %0 = vector.load %arg2[%c0, %c0_0] : memref<32x256xbf16, #tpu.memory_space<vmem>>, vector<32x256xbf16>
    %c0_1 = arith.constant 0 : index
    %c0_2 = arith.constant 0 : index
    %1 = vector.load %arg3[%c0_1, %c0_2] : memref<256x128xbf16, #tpu.memory_space<vmem>>, vector<256x128xbf16>
    %cst = arith.constant dense<0.000000e+00> : vector<32x128xf32>
    %2 = tpu.matmul %0, %1, %cst {dimension_numbers = #tpu.dot_dimension_numbers<[1], [0], [0], [1], [0, 0, 1, 1], [], []>} : vector<32x256xbf16>, vector<256x128xbf16>, vector<32x128xf32> -> vector<32x128xf32>
    %c0_3 = arith.constant 0 : index
    %c0_4 = arith.constant 0 : index
    %3 = vector.load %arg4[%c0_3, %c0_4] : memref<1x128xf32, #tpu.memory_space<vmem>>, vector<1x128xf32>
    %4 = vector.broadcast %3 : vector<1x128xf32> to vector<32x128xf32>
    %5 = arith.addf %2, %4 : vector<32x128xf32>
    %6 = arith.truncf %5 : vector<32x128xf32> to vector<32x128xbf16>
    %c0_5 = arith.constant 0 : index
    %c0_6 = arith.constant 0 : index
    %7 = vector.load %arg5[%c0_5, %c0_6] : memref<32x128xbf16, #tpu.memory_space<vmem>>, vector<32x128xbf16>
    tpu.vector_store %arg5[%c0_5, %c0_6], %6 {strides = array<i32>} : memref<32x128xbf16, #tpu.memory_space<vmem>>, vector<32x128xbf16>,
    return
  }
  func.func @transform_0(%arg0: i32, %arg1: i32) -> (i32, i32) {
    %c0_i32 = arith.constant 0 : i32
    %c0_i32_0 = arith.constant 0 : i32
    return %arg1, %c0_i32 : i32, i32
  }
  func.func @transform_1(%arg0: i32, %arg1: i32) -> (i32, i32) {
    %c0_i32 = arith.constant 0 : i32
    %c0_i32_0 = arith.constant 0 : i32
    return %c0_i32, %arg0 : i32, i32
  }
  func.func @transform_2(%arg0: i32, %arg1: i32) -> (i32, i32) {
    %c0_i32 = arith.constant 0 : i32
    %c0_i32_0 = arith.constant 0 : i32
    return %c0_i32, %arg0 : i32, i32
  }
  func.func @transform_3(%arg0: i32, %arg1: i32) -> (i32, i32) {
    %c0_i32 = arith.constant 0 : i32
    return %arg1, %arg0 : i32, i32
  }
}

module attributes {stable_mosaic.version = 11 : i64} {
  func.func @_linear_kernel(%arg0: i32, %arg1: i32, %arg2: memref<32x128xbf16, #tpu.memory_space<vmem>>, %arg3: memref<128x256xbf16, #tpu.memory_space<vmem>>, %arg4: memref<1x256xf32, #tpu.memory_space<vmem>>, %arg5: memref<32x256xbf16, #tpu.memory_space<vmem>>) attributes {dimension_semantics = [#tpu.dimension_semantics<parallel>, #tpu.dimension_semantics<parallel>], iteration_bounds = array<i64: 1, 1>, scalar_prefetch = 0 : i64, scratch_operands = 0 : i64, tpu.core_type = #tpu.core_type<tc>, window_params = [{transform_indices = @transform_0, window_bounds = array<i64: 32, 128>}, {transform_indices = @transform_1, window_bounds = array<i64: 128, 256>}, {transform_indices = @transform_2, window_bounds = array<i64: 1, 256>}, {transform_indices = @transform_3, window_bounds = array<i64: 32, 256>}]} {
    %c0 = arith.constant 0 : index
    %c0_0 = arith.constant 0 : index
    %0 = vector.load %arg2[%c0, %c0_0] : memref<32x128xbf16, #tpu.memory_space<vmem>>, vector<32x128xbf16>
    %c0_1 = arith.constant 0 : index
    %c0_2 = arith.constant 0 : index
    %1 = vector.load %arg3[%c0_1, %c0_2] : memref<128x256xbf16, #tpu.memory_space<vmem>>, vector<128x256xbf16>
    %cst = arith.constant dense<0.000000e+00> : vector<32x256xf32>
    %2 = tpu.matmul %0, %1, %cst {dimension_numbers = #tpu.dot_dimension_numbers<[1], [0], [0], [1], [0, 0, 1, 1], [], []>} : vector<32x128xbf16>, vector<128x256xbf16>, vector<32x256xf32> -> vector<32x256xf32>
    %c0_3 = arith.constant 0 : index
    %c0_4 = arith.constant 0 : index
    %3 = vector.load %arg4[%c0_3, %c0_4] : memref<1x256xf32, #tpu.memory_space<vmem>>, vector<1x256xf32>
    %4 = vector.broadcast %3 : vector<1x256xf32> to vector<32x256xf32>
    %5 = arith.addf %2, %4 : vector<32x256xf32>
    %cst_5 = arith.constant 5.000000e-01 : f32
    %6 = vector.broadcast %cst_5 : f32 to vector<32x256xf32>
    %7 = arith.mulf %6, %5 : vector<32x256xf32>
    %cst_6 = arith.constant 4.471500e-02 : f32
    %8 = vector.broadcast %cst_6 : f32 to vector<32x256xf32>
    %9 = arith.mulf %8, %5 : vector<32x256xf32>
    %10 = arith.mulf %9, %5 : vector<32x256xf32>
    %11 = arith.mulf %10, %5 : vector<32x256xf32>
    %12 = arith.addf %5, %11 : vector<32x256xf32>
    %cst_7 = arith.constant 0.797884583 : f32
    %13 = vector.broadcast %cst_7 : f32 to vector<32x256xf32>
    %14 = arith.mulf %13, %12 : vector<32x256xf32>
    %15 = math.tanh %14 : vector<32x256xf32>
    %cst_8 = arith.constant 1.000000e+00 : f32
    %16 = vector.broadcast %cst_8 : f32 to vector<32x256xf32>
    %17 = arith.addf %16, %15 : vector<32x256xf32>
    %18 = arith.mulf %7, %17 : vector<32x256xf32>
    %19 = arith.truncf %18 : vector<32x256xf32> to vector<32x256xbf16>
    %c0_9 = arith.constant 0 : index
    %c0_10 = arith.constant 0 : index
    %20 = vector.load %arg5[%c0_9, %c0_10] : memref<32x256xbf16, #tpu.memory_space<vmem>>, vector<32x256xbf16>
    tpu.vector_store %arg5[%c0_9, %c0_10], %19 {strides = array<i32>} : memref<32x256xbf16, #tpu.memory_space<vmem>>, vector<32x256xbf16>,
    return
  }
  func.func @transform_0(%arg0: i32, %arg1: i32) -> (i32, i32) {
    %c0_i32 = arith.constant 0 : i32
    %c0_i32_0 = arith.constant 0 : i32
    return %arg1, %c0_i32 : i32, i32
  }
  func.func @transform_1(%arg0: i32, %arg1: i32) -> (i32, i32) {
    %c0_i32 = arith.constant 0 : i32
    %c0_i32_0 = arith.constant 0 : i32
    return %c0_i32, %arg0 : i32, i32
  }
  func.func @transform_2(%arg0: i32, %arg1: i32) -> (i32, i32) {
    %c0_i32 = arith.constant 0 : i32
    %c0_i32_0 = arith.constant 0 : i32
    return %c0_i32, %arg0 : i32, i32
  }
  func.func @transform_3(%arg0: i32, %arg1: i32) -> (i32, i32) {
    %c0_i32 = arith.constant 0 : i32
    return %arg1, %arg0 : i32, i32
  }
}

module attributes {stable_mosaic.version = 11 : i64} {
  func.func @_linear_kernel(%arg0: i32, %arg1: i32, %arg2: memref<32x128xbf16, #tpu.memory_space<vmem>>, %arg3: memref<128x128xbf16, #tpu.memory_space<vmem>>, %arg4: memref<1x128xf32, #tpu.memory_space<vmem>>, %arg5: memref<32x128xf32, #tpu.memory_space<vmem>>) attributes {dimension_semantics = [#tpu.dimension_semantics<parallel>, #tpu.dimension_semantics<parallel>], iteration_bounds = array<i64: 1, 1>, scalar_prefetch = 0 : i64, scratch_operands = 0 : i64, tpu.core_type = #tpu.core_type<tc>, window_params = [{transform_indices = @transform_0, window_bounds = array<i64: 32, 128>}, {transform_indices = @transform_1, window_bounds = array<i64: 128, 128>}, {transform_indices = @transform_2, window_bounds = array<i64: 1, 128>}, {transform_indices = @transform_3, window_bounds = array<i64: 32, 128>}]} {
    %c0 = arith.constant 0 : index
    %c0_0 = arith.constant 0 : index
    %0 = vector.load %arg2[%c0, %c0_0] : memref<32x128xbf16, #tpu.memory_space<vmem>>, vector<32x128xbf16>
    %c0_1 = arith.constant 0 : index
    %c0_2 = arith.constant 0 : index
    %1 = vector.load %arg3[%c0_1, %c0_2] : memref<128x128xbf16, #tpu.memory_space<vmem>>, vector<128x128xbf16>
    %cst = arith.constant dense<0.000000e+00> : vector<32x128xf32>
    %2 = tpu.matmul %0, %1, %cst {dimension_numbers = #tpu.dot_dimension_numbers<[1], [0], [0], [1], [0, 0, 1, 1], [], []>} : vector<32x128xbf16>, vector<128x128xbf16>, vector<32x128xf32> -> vector<32x128xf32>
    %c0_3 = arith.constant 0 : index
    %c0_4 = arith.constant 0 : index
    %3 = vector.load %arg4[%c0_3, %c0_4] : memref<1x128xf32, #tpu.memory_space<vmem>>, vector<1x128xf32>
    %4 = vector.broadcast %3 : vector<1x128xf32> to vector<32x128xf32>
    %5 = arith.addf %2, %4 : vector<32x128xf32>
    %c0_5 = arith.constant 0 : index
    %c0_6 = arith.constant 0 : index
    %6 = vector.load %arg5[%c0_5, %c0_6] : memref<32x128xf32, #tpu.memory_space<vmem>>, vector<32x128xf32>
    tpu.vector_store %arg5[%c0_5, %c0_6], %5 {strides = array<i32>} : memref<32x128xf32, #tpu.memory_space<vmem>>, vector<32x128xf32>,
    return
  }
  func.func @transform_0(%arg0: i32, %arg1: i32) -> (i32, i32) {
    %c0_i32 = arith.constant 0 : i32
    %c0_i32_0 = arith.constant 0 : i32
    return %arg1, %c0_i32 : i32, i32
  }
  func.func @transform_1(%arg0: i32, %arg1: i32) -> (i32, i32) {
    %c0_i32 = arith.constant 0 : i32
    %c0_i32_0 = arith.constant 0 : i32
    return %c0_i32, %arg0 : i32, i32
  }
  func.func @transform_2(%arg0: i32, %arg1: i32) -> (i32, i32) {
    %c0_i32 = arith.constant 0 : i32
    %c0_i32_0 = arith.constant 0 : i32
    return %c0_i32, %arg0 : i32, i32
  }
  func.func @transform_3(%arg0: i32, %arg1: i32) -> (i32, i32) {
    %c0_i32 = arith.constant 0 : i32
    return %arg1, %arg0 : i32, i32
  }
}

module attributes {stable_mosaic.version = 11 : i64} {
  func.func @_cross_entropy_kernel(%arg0: i32, %arg1: memref<32x128xf32, #tpu.memory_space<vmem>>, %arg2: memref<32x1xi32, #tpu.memory_space<vmem>>, %arg3: memref<32x1xf32, #tpu.memory_space<vmem>>, %arg4: memref<1x1xf32, #tpu.memory_space<vmem>>, %arg5: memref<1x1xf32, #tpu.memory_space<vmem>>, %arg6: memref<1x1xf32, #tpu.memory_space<vmem>>) attributes {dimension_semantics = [#tpu.dimension_semantics<arbitrary>], iteration_bounds = array<i64: 1>, scalar_prefetch = 0 : i64, scratch_operands = 2 : i64, tpu.core_type = #tpu.core_type<tc>, window_params = [{transform_indices = @transform_0, window_bounds = array<i64: 32, 128>}, {transform_indices = @transform_1, window_bounds = array<i64: 32, 1>}, {transform_indices = @transform_2, window_bounds = array<i64: 32, 1>}, {pipeline_mode = #tpu.pipeline_mode<synchronous>, transform_indices = @transform_3, window_bounds = array<i64: 1, 1>}]} {
    %c0_i32 = arith.constant 0 : i32
    %0 = arith.cmpi eq, %arg0, %c0_i32 : i32
    %1 = arith.extui %0 : i1 to i32
    %c0_i32_0 = arith.constant 0 : i32
    %2 = arith.cmpi ne, %1, %c0_i32_0 : i32
    scf.if %2 {
      %cst_21 = arith.constant 0.000000e+00 : f32
      %36 = vector.broadcast %cst_21 : f32 to vector<1x1xf32>
      %c0_22 = arith.constant 0 : index
      %c0_23 = arith.constant 0 : index
      %37 = vector.load %arg5[%c0_22, %c0_23] : memref<1x1xf32, #tpu.memory_space<vmem>>, vector<1x1xf32>
      tpu.vector_store %arg5[%c0_22, %c0_23], %36 {strides = array<i32>} : memref<1x1xf32, #tpu.memory_space<vmem>>, vector<1x1xf32>,
      %cst_24 = arith.constant 0.000000e+00 : f32
      %38 = vector.broadcast %cst_24 : f32 to vector<1x1xf32>
      %c0_25 = arith.constant 0 : index
      %c0_26 = arith.constant 0 : index
      %39 = vector.load %arg6[%c0_25, %c0_26] : memref<1x1xf32, #tpu.memory_space<vmem>>, vector<1x1xf32>
      tpu.vector_store %arg6[%c0_25, %c0_26], %38 {strides = array<i32>} : memref<1x1xf32, #tpu.memory_space<vmem>>, vector<1x1xf32>,
    } else {
    }
    %c0 = arith.constant 0 : index
    %c0_1 = arith.constant 0 : index
    %3 = vector.load %arg1[%c0, %c0_1] : memref<32x128xf32, #tpu.memory_space<vmem>>, vector<32x128xf32>
    %c0_2 = arith.constant 0 : index
    %c0_3 = arith.constant 0 : index
    %4 = vector.load %arg2[%c0_2, %c0_3] : memref<32x1xi32, #tpu.memory_space<vmem>>, vector<32x1xi32>
    %c0_4 = arith.constant 0 : index
    %c0_5 = arith.constant 0 : index
    %5 = vector.load %arg3[%c0_4, %c0_5] : memref<32x1xf32, #tpu.memory_space<vmem>>, vector<32x1xf32>
    %cst = arith.constant dense<0xFF800000> : vector<32xf32>
    %6 = vector.multi_reduction <maximumf>, %3, %cst [1] : vector<32x128xf32> to vector<32xf32>
    %7 = vector.shape_cast %6 : vector<32xf32> to vector<32x1xf32>
    %8 = vector.broadcast %7 : vector<32x1xf32> to vector<32x128xf32>
    %9 = arith.subf %3, %8 : vector<32x128xf32>
    %10 = math.exp %9 : vector<32x128xf32>
    %cst_6 = arith.constant dense<0.000000e+00> : vector<32xf32>
    %11 = vector.multi_reduction <add>, %10, %cst_6 [1] : vector<32x128xf32> to vector<32xf32>
    %12 = vector.shape_cast %11 : vector<32xf32> to vector<32x1xf32>
    %13 = math.log %12 : vector<32x1xf32>
    %14 = tpu.iota {dimensions = array<i32: 1>} : vector<32x128xi32>
    %15 = vector.broadcast %4 : vector<32x1xi32> to vector<32x128xi32>
    %16 = arith.cmpi eq, %14, %15 : vector<32x128xi32>
    %cst_7 = arith.constant 0.000000e+00 : f32
    %17 = vector.broadcast %cst_7 : f32 to vector<32x128xf32>
    %18 = arith.select %16, %9, %17 : vector<32x128xi1>, vector<32x128xf32>
    %cst_8 = arith.constant dense<0.000000e+00> : vector<32xf32>
    %19 = vector.multi_reduction <add>, %18, %cst_8 [1] : vector<32x128xf32> to vector<32xf32>
    %20 = vector.shape_cast %19 : vector<32xf32> to vector<32x1xf32>
    %21 = arith.subf %13, %20 : vector<32x1xf32>
    %c0_9 = arith.constant 0 : index
    %c0_10 = arith.constant 0 : index
    %22 = vector.load %arg5[%c0_9, %c0_10] : memref<1x1xf32, #tpu.memory_space<vmem>>, vector<1x1xf32>
    %23 = arith.mulf %21, %5 : vector<32x1xf32>
    %cst_11 = arith.constant dense<0.000000e+00> : vector<1xf32>
    %24 = vector.multi_reduction <add>, %23, %cst_11 [0] : vector<32x1xf32> to vector<1xf32>
    %25 = vector.shape_cast %24 : vector<1xf32> to vector<1x1xf32>
    %26 = arith.addf %22, %25 : vector<1x1xf32>
    %c0_12 = arith.constant 0 : index
    %c0_13 = arith.constant 0 : index
    %27 = vector.load %arg5[%c0_12, %c0_13] : memref<1x1xf32, #tpu.memory_space<vmem>>, vector<1x1xf32>
    tpu.vector_store %arg5[%c0_12, %c0_13], %26 {strides = array<i32>} : memref<1x1xf32, #tpu.memory_space<vmem>>, vector<1x1xf32>,
    %c0_14 = arith.constant 0 : index
    %c0_15 = arith.constant 0 : index
    %28 = vector.load %arg6[%c0_14, %c0_15] : memref<1x1xf32, #tpu.memory_space<vmem>>, vector<1x1xf32>
    %cst_16 = arith.constant dense<0.000000e+00> : vector<1xf32>
    %29 = vector.multi_reduction <add>, %5, %cst_16 [0] : vector<32x1xf32> to vector<1xf32>
    %30 = vector.shape_cast %29 : vector<1xf32> to vector<1x1xf32>
    %31 = arith.addf %28, %30 : vector<1x1xf32>
    %c0_17 = arith.constant 0 : index
    %c0_18 = arith.constant 0 : index
    %32 = vector.load %arg6[%c0_17, %c0_18] : memref<1x1xf32, #tpu.memory_space<vmem>>, vector<1x1xf32>
    tpu.vector_store %arg6[%c0_17, %c0_18], %31 {strides = array<i32>} : memref<1x1xf32, #tpu.memory_space<vmem>>, vector<1x1xf32>,
    %c0_i32_19 = arith.constant 0 : i32
    %33 = arith.cmpi eq, %arg0, %c0_i32_19 : i32
    %34 = arith.extui %33 : i1 to i32
    %c0_i32_20 = arith.constant 0 : i32
    %35 = arith.cmpi ne, %34, %c0_i32_20 : i32
    scf.if %35 {
      %c0_21 = arith.constant 0 : index
      %c0_22 = arith.constant 0 : index
      %36 = vector.load %arg5[%c0_21, %c0_22] : memref<1x1xf32, #tpu.memory_space<vmem>>, vector<1x1xf32>
      %c0_23 = arith.constant 0 : index
      %c0_24 = arith.constant 0 : index
      %37 = vector.load %arg6[%c0_23, %c0_24] : memref<1x1xf32, #tpu.memory_space<vmem>>, vector<1x1xf32>
      %cst_25 = arith.constant 1.000000e+00 : f32
      %38 = vector.broadcast %cst_25 : f32 to vector<1x1xf32>
      %39 = arith.maximumf %37, %38 : vector<1x1xf32>
      %40 = arith.divf %36, %39 : vector<1x1xf32>
      %c0_26 = arith.constant 0 : index
      %c0_27 = arith.constant 0 : index
      %41 = vector.load %arg4[%c0_26, %c0_27] : memref<1x1xf32, #tpu.memory_space<vmem>>, vector<1x1xf32>
      tpu.vector_store %arg4[%c0_26, %c0_27], %40 {strides = array<i32>} : memref<1x1xf32, #tpu.memory_space<vmem>>, vector<1x1xf32>,
    } else {
    }
    return
  }
  func.func @transform_0(%arg0: i32) -> (i32, i32) {
    %c0_i32 = arith.constant 0 : i32
    %c0_i32_0 = arith.constant 0 : i32
    return %arg0, %c0_i32 : i32, i32
  }
  func.func @transform_1(%arg0: i32) -> (i32, i32) {
    %c0_i32 = arith.constant 0 : i32
    %c0_i32_0 = arith.constant 0 : i32
    return %arg0, %c0_i32 : i32, i32
  }
  func.func @transform_2(%arg0: i32) -> (i32, i32) {
    %c0_i32 = arith.constant 0 : i32
    %c0_i32_0 = arith.constant 0 : i32
    return %arg0, %c0_i32 : i32, i32
  }
  func.func @transform_3(%arg0: i32) -> (i32, i32) {
    %c0_i32 = arith.constant 0 : i32
    %c0_i32_0 = arith.constant 0 : i32
    %c0_i32_1 = arith.constant 0 : i32
    return %c0_i32, %c0_i32_0 : i32, i32
  }
}

</mosaic_0001>

<llo_original>
// kernel: bert_token_classifier_forward.17
$region0: #{bert_token_classifier_forward.17}
  #allocation0 [shape = 'u32[]', space=smem, size = 0x4, offset = 0x4, fixed_abs, tag = 'smem constant byte address 0x4 - core index']
  #allocation1 [shape = 'u32[144,128]{1,0:T(1,128)}', space=vmem, size = 0x12000, scoped, tag = 'internal scratch']
  %s0 = inlined_call_operand.vmem [shape: f32[32,128], index: 0, kind: input, shape index: {}]
  %s1 = inlined_call_operand.vmem [shape: f32[1,128], index: 1, kind: input, shape index: {}]
  %s2 = inlined_call_operand.vmem [shape: f32[1,128], index: 2, kind: input, shape index: {}]
  %s3 = inlined_call_operand.vmem [shape: bf16[32,128], index: 3, kind: output, shape index: {}]
  %s4 = sld [smem:[#allocation0]]
  $region22: #{bert_token_classifier_forward.17} parent=0
    _
  %s6 = ssub.s32 1, %s4
  %s7 = scalar_select 0, %s6, %s4
  // Predicated region
  $region2: #{bert_token_classifier_forward.17} parent=0 // pred_check
    _
  $region3: #{bert_token_classifier_forward.17} parent=0 // pred_check_branch
    %9 = sbr.rel (0) target = $region5
  $region4: #{bert_token_classifier_forward.17} parent=0 // pred_region
    _
  $region5: #{bert_token_classifier_forward.17} parent=0 // pred_fallthru
    _
  // Predicated region
  $region6: #{bert_token_classifier_forward.17} parent=0 // pred_check
    _
  $region7: #{bert_token_classifier_forward.17} parent=0 // pred_check_branch
    %11 = sbr.rel (0) target = $region9
  $region8: #{bert_token_classifier_forward.17} parent=0 // pred_region
    _
  $region9: #{bert_token_classifier_forward.17} parent=0 // pred_fallthru
    _
  // Predicated region
  $region10: #{bert_token_classifier_forward.17} parent=0 // pred_check
    _
  $region11: #{bert_token_classifier_forward.17} parent=0 // pred_check_branch
    %13 = sbr.rel (0) target = $region13
  $region12: #{bert_token_classifier_forward.17} parent=0 // pred_region
    _
  $region13: #{bert_token_classifier_forward.17} parent=0 // pred_fallthru
    _
  %v14 = vld [vmem:[%s0] sm:$0xff]
  %v15 = vld [vmem:[%s0 + $0x8] sm:$0xff]
  %v16 = vld [vmem:[%s0 + $0x10] sm:$0xff]
  %v17 = vld [vmem:[%s0 + $0x18] sm:$0xff]
  %18 = vadd.xlane.f32.xlu0 %v14
  %v19 = vpop.xlane.xlu0 %18
  %20 = vadd.xlane.f32.xlu0 %v15
  %v21 = vpop.xlane.xlu0 %20
  %22 = vadd.xlane.f32.xlu0 %v16
  %v23 = vpop.xlane.xlu0 %22
  %24 = vadd.xlane.f32.xlu0 %v17
  %v25 = vpop.xlane.xlu0 %24
  %v26 = vrcp.pop 128.0
  %v27 = vmul.f32 %v19, %v26
  %v28 = vmul.f32 %v21, %v26
  %v29 = vmul.f32 %v23, %v26
  %v30 = vmul.f32 %v25, %v26
  %v31 = vsub.f32 %v14, %v27
  %v32 = vsub.f32 %v15, %v28
  %v33 = vsub.f32 %v16, %v29
  %v34 = vsub.f32 %v17, %v30
  %v35 = vmul.f32 %v31, %v31
  %v36 = vmul.f32 %v32, %v32
  %v37 = vmul.f32 %v33, %v33
  %v38 = vmul.f32 %v34, %v34
  %39 = vadd.xlane.f32.xlu0 %v35
  %v40 = vpop.xlane.xlu0 %39
  %41 = vadd.xlane.f32.xlu0 %v36
  %v42 = vpop.xlane.xlu0 %41
  %43 = vadd.xlane.f32.xlu0 %v37
  %v44 = vpop.xlane.xlu0 %43
  %45 = vadd.xlane.f32.xlu0 %v38
  %v46 = vpop.xlane.xlu0 %45
  %v47 = vmul.f32 %v40, %v26
  %v48 = vmul.f32 %v42, %v26
  %v49 = vmul.f32 %v44, %v26
  %v50 = vmul.f32 %v46, %v26
  %v51 = vadd.f32 %v47, 1e-12
  %v52 = vadd.f32 %v48, 1e-12
  %v53 = vadd.f32 %v49, 1e-12
  %v54 = vadd.f32 %v50, 1e-12
  %v55 = vrsqrt.pop %v51
  %v56 = vrsqrt.pop %v52
  %v57 = vrsqrt.pop %v53
  %v58 = vrsqrt.pop %v54
  %v59 = vmul.f32 %v31, %v55
  %v60 = vmul.f32 %v32, %v56
  %v61 = vmul.f32 %v33, %v57
  %v62 = vmul.f32 %v34, %v58
  %v63 = vld [vmem:[%s1] sm:$0x1]
  %v65 = vlaneseq
  %v66 = vshrl.u32 %v65, 7
  %v67 = vsub.s32 0, %v66
  %v68 = vrot.slane %v63, %v67
  %v70 = vmul.f32 %v59, %v68
  %v71 = vmul.f32 %v60, %v68
  %v72 = vmul.f32 %v61, %v68
  %v73 = vmul.f32 %v62, %v68
  %v74 = vld [vmem:[%s2] sm:$0x1]
  %v76 = vlaneseq
  %v77 = vshrl.u32 %v76, 7
  %v78 = vsub.s32 0, %v77
  %v79 = vrot.slane %v74, %v78
  %v81 = vadd.f32 %v70, %v79
  %v82 = vadd.f32 %v71, %v79
  %v83 = vadd.f32 %v72, %v79
  %v84 = vadd.f32 %v73, %v79
  %v85 = vpack.c.bf16 %v82, %v81
  %v86 = vpack.c.bf16 %v84, %v83
  %v89 = vunpack.c.l.b16 %v85
  %v90 = vunpack.c.h.b16 %v85
  %v91 = vunpack.c.l.b16 %v86
  %v92 = vunpack.c.h.b16 %v86
  %v93 = vpack.c.b16 %v89, %v89
  %v94 = vpack.c.b16 %v90, %v90
  %v95 = vpack.c.b16 %v91, %v91
  %v96 = vpack.c.b16 %v92, %v92
  %101 = vst [vmem:[%s3] sm:$0xf] %v93
  %102 = vst [vmem:[%s3 + $0x4] sm:$0xf] %v94
  %103 = vst [vmem:[%s3 + $0x8] sm:$0xf] %v95
  %104 = vst [vmem:[%s3 + $0xc] sm:$0xf] %v96
  // Predicated region
  $region14: #{bert_token_classifier_forward.17} parent=0 // pred_check
    _
  $region15: #{bert_token_classifier_forward.17} parent=0 // pred_check_branch
    %106 = sbr.rel (0) target = $region17
  $region16: #{bert_token_classifier_forward.17} parent=0 // pred_region
    _
  $region17: #{bert_token_classifier_forward.17} parent=0 // pred_fallthru
    _
  // Predicated region
  $region18: #{bert_token_classifier_forward.17} parent=0 // pred_check
    _
  $region19: #{bert_token_classifier_forward.17} parent=0 // pred_check_branch
    %108 = sbr.rel (0) target = $region21
  $region20: #{bert_token_classifier_forward.17} parent=0 // pred_region
    _
  $region21: #{bert_token_classifier_forward.17} parent=0 // pred_fallthru
    _

// kernel: bert_token_classifier_forward.20
$region0: #{bert_token_classifier_forward.20}
  #allocation0 [shape = 'u32[]', space=smem, size = 0x4, offset = 0x4, fixed_abs, tag = 'smem constant byte address 0x4 - core index']
  #allocation1 [shape = 'u32[144,128]{1,0:T(1,128)}', space=vmem, size = 0x12000, scoped, tag = 'internal scratch']
  %s0 = inlined_call_operand.vmem [shape: bf16[32,128], index: 0, kind: input, shape index: {}]
  %s1 = inlined_call_operand.vmem [shape: bf16[128,128], index: 1, kind: input, shape index: {}]
  %s2 = inlined_call_operand.vmem [shape: f32[1,128], index: 2, kind: input, shape index: {}]
  %s3 = inlined_call_operand.vmem [shape: bf16[32,128], index: 3, kind: output, shape index: {}]
  %s4 = sld [smem:[#allocation0]]
  $region22: #{bert_token_classifier_forward.20} parent=0
    _
  %s6 = ssub.s32 1, %s4
  %s7 = scalar_select 0, %s6, %s4
  // Predicated region
  $region2: #{bert_token_classifier_forward.20} parent=0 // pred_check
    _
  $region3: #{bert_token_classifier_forward.20} parent=0 // pred_check_branch
    %9 = sbr.rel (0) target = $region5
  $region4: #{bert_token_classifier_forward.20} parent=0 // pred_region
    _
  $region5: #{bert_token_classifier_forward.20} parent=0 // pred_fallthru
    _
  // Predicated region
  $region6: #{bert_token_classifier_forward.20} parent=0 // pred_check
    _
  $region7: #{bert_token_classifier_forward.20} parent=0 // pred_check_branch
    %11 = sbr.rel (0) target = $region9
  $region8: #{bert_token_classifier_forward.20} parent=0 // pred_region
    _
  $region9: #{bert_token_classifier_forward.20} parent=0 // pred_fallthru
    _
  // Predicated region
  $region10: #{bert_token_classifier_forward.20} parent=0 // pred_check
    _
  $region11: #{bert_token_classifier_forward.20} parent=0 // pred_check_branch
    %13 = sbr.rel (0) target = $region13
  $region12: #{bert_token_classifier_forward.20} parent=0 // pred_region
    _
  $region13: #{bert_token_classifier_forward.20} parent=0 // pred_fallthru
    _
  %v15 = vld [vmem:[%s0] sm:$0xf]
  %v16 = vld [vmem:[%s0 + $0x4] sm:$0xf]
  %v17 = vld [vmem:[%s0 + $0x8] sm:$0xf]
  %v18 = vld [vmem:[%s0 + $0xc] sm:$0xf]
  %v19 = vld [vmem:[%s1] sm:$0xf]
  %v20 = vld [vmem:[%s1 + $0x4] sm:$0xf]
  %v21 = vld [vmem:[%s1 + $0x8] sm:$0xf]
  %v22 = vld [vmem:[%s1 + $0xc] sm:$0xf]
  %v23 = vld [vmem:[%s1 + $0x10] sm:$0xf]
  %v24 = vld [vmem:[%s1 + $0x14] sm:$0xf]
  %v25 = vld [vmem:[%s1 + $0x18] sm:$0xf]
  %v26 = vld [vmem:[%s1 + $0x1c] sm:$0xf]
  %v27 = vld [vmem:[%s1 + $0x20] sm:$0xf]
  %v28 = vld [vmem:[%s1 + $0x24] sm:$0xf]
  %v29 = vld [vmem:[%s1 + $0x28] sm:$0xf]
  %v30 = vld [vmem:[%s1 + $0x2c] sm:$0xf]
  %v31 = vld [vmem:[%s1 + $0x30] sm:$0xf]
  %v32 = vld [vmem:[%s1 + $0x34] sm:$0xf]
  %v33 = vld [vmem:[%s1 + $0x38] sm:$0xf]
  %v34 = vld [vmem:[%s1 + $0x3c] sm:$0xf]
  %v35 = vld [vmem:[%s2] sm:$0x1]
  %v37 = vlaneseq
  %v38 = vshrl.u32 %v37, 7
  %v39 = vsub.s32 0, %v38
  %v40 = vrot.slane %v35, %v39
  %v46 = vunpack.c.l.b16 %v15
  %v47 = vunpack.c.l.b16 %v16
  %v48 = vunpack.c.l.b16 %v17
  %v49 = vunpack.c.l.b16 %v18
  %v50 = vpack.c.b16 %v47, %v46
  %v51 = vpack.c.b16 %v49, %v48
  %v70 = vunpack.c.l.b16 %v19
  %v71 = vunpack.c.l.b16 %v20
  %v72 = vunpack.c.l.b16 %v21
  %v73 = vunpack.c.l.b16 %v22
  %v74 = vunpack.c.l.b16 %v23
  %v75 = vunpack.c.l.b16 %v24
  %v76 = vunpack.c.l.b16 %v25
  %v77 = vunpack.c.l.b16 %v26
  %v78 = vunpack.c.l.b16 %v27
  %v79 = vunpack.c.l.b16 %v28
  %v80 = vunpack.c.l.b16 %v29
  %v81 = vunpack.c.l.b16 %v30
  %v82 = vunpack.c.l.b16 %v31
  %v83 = vunpack.c.l.b16 %v32
  %v84 = vunpack.c.l.b16 %v33
  %v85 = vunpack.c.l.b16 %v34
  %v86 = vpack.c.b16 %v71, %v70
  %v87 = vpack.c.b16 %v73, %v72
  %v88 = vpack.c.b16 %v75, %v74
  %v89 = vpack.c.b16 %v77, %v76
  %v90 = vpack.c.b16 %v79, %v78
  %v91 = vpack.c.b16 %v81, %v80
  %v92 = vpack.c.b16 %v83, %v82
  %v93 = vpack.c.b16 %v85, %v84
  %102 = vmatprep.subr.bf16.mxu0 0
  %103 = vmatpush1.bf16.msra.mxu0 %v86
  %104 = vmatprep.subr.bf16.mxu0 0
  %105 = vmatpush1.bf16.msra.mxu0 %v87
  %106 = vmatprep.subr.bf16.mxu0 0
  %107 = vmatpush1.bf16.msra.mxu0 %v88
  %108 = vmatprep.subr.bf16.mxu0 0
  %109 = vmatpush1.bf16.msra.mxu0 %v89
  %110 = vmatprep.subr.bf16.mxu0 0
  %111 = vmatpush1.bf16.msra.mxu0 %v90
  %112 = vmatprep.subr.bf16.mxu0 0
  %113 = vmatpush1.bf16.msra.mxu0 %v91
  %114 = vmatprep.subr.bf16.mxu0 0
  %115 = vmatpush1.bf16.msra.mxu0 %v92
  %116 = vmatprep.subr.bf16.mxu0 0
  %117 = vmatpush1.bf16.msra.mxu0 %v93
  %118 = vmatprep.subr.bf16.mxu0 0
  %119 = vmatpush1.bf16.msra.mxu0 0
  %120 = vmatprep.subr.bf16.mxu0 0
  %121 = vmatpush1.bf16.msra.mxu0 0
  %122 = vmatprep.subr.bf16.mxu0 0
  %123 = vmatpush1.bf16.msra.mxu0 0
  %124 = vmatprep.subr.bf16.mxu0 0
  %125 = vmatpush1.bf16.msra.mxu0 0
  %126 = vmatprep.subr.bf16.mxu0 0
  %127 = vmatpush1.bf16.msra.mxu0 0
  %128 = vmatprep.subr.bf16.mxu0 0
  %129 = vmatpush1.bf16.msra.mxu0 0
  %130 = vmatprep.subr.bf16.mxu0 0
  %131 = vmatpush1.bf16.msra.mxu0 0
  %132 = vmatprep.subr.bf16.mxu0 0
  %133 = vmatpush1.bf16.msra.mxu0 0
  %134 = vmatprep.mubr.bf16.mxu0 0
  %135 = vmatmul.mubr.bf16.gmra.mrb[0].mxu0 %v50
  %v136 = vpop.f32.mrb[0].mxu0
  %v137 = vadd.f32 %v40, %v136
  %v138 = vpop.f32.mrb[0].mxu0
  %v139 = vpop.f32.mrb[0].mxu0
  %v140 = vadd.f32 %v40, %v139
  %v141 = vpop.f32.mrb[0].mxu0
  %142 = vmatprep.mubr.bf16.mxu0 0
  %143 = vmatmul.mubr.bf16.gmra.mrb[0].mxu0 %v51
  %v144 = vpop.f32.mrb[0].mxu0
  %v145 = vadd.f32 %v40, %v144
  %v146 = vpop.f32.mrb[0].mxu0
  %v147 = vpop.f32.mrb[0].mxu0
  %v148 = vadd.f32 %v40, %v147
  %v149 = vpop.f32.mrb[0].mxu0
  %150 = vdwg.mxu0
  %v151 = vpack.c.bf16 %v140, %v137
  %v152 = vpack.c.bf16 %v148, %v145
  %v155 = vunpack.c.l.b16 %v151
  %v156 = vunpack.c.h.b16 %v151
  %v157 = vunpack.c.l.b16 %v152
  %v158 = vunpack.c.h.b16 %v152
  %v159 = vpack.c.b16 %v155, %v155
  %v160 = vpack.c.b16 %v156, %v156
  %v161 = vpack.c.b16 %v157, %v157
  %v162 = vpack.c.b16 %v158, %v158
  %167 = vst [vmem:[%s3] sm:$0xf] %v159
  %168 = vst [vmem:[%s3 + $0x4] sm:$0xf] %v160
  %169 = vst [vmem:[%s3 + $0x8] sm:$0xf] %v161
  %170 = vst [vmem:[%s3 + $0xc] sm:$0xf] %v162
  // Predicated region
  $region14: #{bert_token_classifier_forward.20} parent=0 // pred_check
    _
  $region15: #{bert_token_classifier_forward.20} parent=0 // pred_check_branch
    %172 = sbr.rel (0) target = $region17
  $region16: #{bert_token_classifier_forward.20} parent=0 // pred_region
    _
  $region17: #{bert_token_classifier_forward.20} parent=0 // pred_fallthru
    _
  // Predicated region
  $region18: #{bert_token_classifier_forward.20} parent=0 // pred_check
    _
  $region19: #{bert_token_classifier_forward.20} parent=0 // pred_check_branch
    %174 = sbr.rel (0) target = $region21
  $region20: #{bert_token_classifier_forward.20} parent=0 // pred_region
    _
  $region21: #{bert_token_classifier_forward.20} parent=0 // pred_fallthru
    _

// kernel: bert_token_classifier_forward.18
$region0: #{bert_token_classifier_forward.18}
  #allocation0 [shape = 'u32[]', space=smem, size = 0x4, offset = 0x4, fixed_abs, tag = 'smem constant byte address 0x4 - core index']
  #allocation1 [shape = 'u32[144,128]{1,0:T(1,128)}', space=vmem, size = 0x12000, scoped, tag = 'internal scratch']
  %s0 = inlined_call_operand.vmem [shape: bf16[32,128], index: 0, kind: input, shape index: {}]
  %s1 = inlined_call_operand.vmem [shape: bf16[128,384], index: 1, kind: input, shape index: {}]
  %s2 = inlined_call_operand.vmem [shape: f32[1,384], index: 2, kind: input, shape index: {}]
  %s3 = inlined_call_operand.vmem [shape: bf16[32,384], index: 3, kind: output, shape index: {}]
  %s4 = sld [smem:[#allocation0]]
  $region22: #{bert_token_classifier_forward.18} parent=0
    _
  %s6 = ssub.s32 1, %s4
  %s7 = scalar_select 0, %s6, %s4
  // Predicated region
  $region2: #{bert_token_classifier_forward.18} parent=0 // pred_check
    _
  $region3: #{bert_token_classifier_forward.18} parent=0 // pred_check_branch
    %9 = sbr.rel (0) target = $region5
  $region4: #{bert_token_classifier_forward.18} parent=0 // pred_region
    _
  $region5: #{bert_token_classifier_forward.18} parent=0 // pred_fallthru
    _
  // Predicated region
  $region6: #{bert_token_classifier_forward.18} parent=0 // pred_check
    _
  $region7: #{bert_token_classifier_forward.18} parent=0 // pred_check_branch
    %11 = sbr.rel (0) target = $region9
  $region8: #{bert_token_classifier_forward.18} parent=0 // pred_region
    _
  $region9: #{bert_token_classifier_forward.18} parent=0 // pred_fallthru
    _
  // Predicated region
  $region10: #{bert_token_classifier_forward.18} parent=0 // pred_check
    _
  $region11: #{bert_token_classifier_forward.18} parent=0 // pred_check_branch
    %13 = sbr.rel (0) target = $region13
  $region12: #{bert_token_classifier_forward.18} parent=0 // pred_region
    _
  $region13: #{bert_token_classifier_forward.18} parent=0 // pred_fallthru
    _
  %v15 = vld [vmem:[%s0] sm:$0xf]
  %v16 = vld [vmem:[%s0 + $0x4] sm:$0xf]
  %v17 = vld [vmem:[%s0 + $0x8] sm:$0xf]
  %v18 = vld [vmem:[%s0 + $0xc] sm:$0xf]
  %v19 = vld [vmem:[%s1] sm:$0xff]
  %v20 = vld [vmem:[%s1 + $0x8] sm:$0xf]
  %v21 = vld [vmem:[%s1 + $0xc] sm:$0xff]
  %v22 = vld [vmem:[%s1 + $0x14] sm:$0xf]
  %v23 = vld [vmem:[%s1 + $0x18] sm:$0xff]
  %v24 = vld [vmem:[%s1 + $0x20] sm:$0xf]
  %v25 = vld [vmem:[%s1 + $0x24] sm:$0xff]
  %v26 = vld [vmem:[%s1 + $0x2c] sm:$0xf]
  %v27 = vld [vmem:[%s1 + $0x30] sm:$0xff]
  %v28 = vld [vmem:[%s1 + $0x38] sm:$0xf]
  %v29 = vld [vmem:[%s1 + $0x3c] sm:$0xff]
  %v30 = vld [vmem:[%s1 + $0x44] sm:$0xf]
  %v31 = vld [vmem:[%s1 + $0x48] sm:$0xff]
  %v32 = vld [vmem:[%s1 + $0x50] sm:$0xf]
  %v33 = vld [vmem:[%s1 + $0x54] sm:$0xff]
  %v34 = vld [vmem:[%s1 + $0x5c] sm:$0xf]
  %v35 = vld [vmem:[%s1 + $0x60] sm:$0xff]
  %v36 = vld [vmem:[%s1 + $0x68] sm:$0xf]
  %v37 = vld [vmem:[%s1 + $0x6c] sm:$0xff]
  %v38 = vld [vmem:[%s1 + $0x74] sm:$0xf]
  %v39 = vld [vmem:[%s1 + $0x78] sm:$0xff]
  %v40 = vld [vmem:[%s1 + $0x80] sm:$0xf]
  %v41 = vld [vmem:[%s1 + $0x84] sm:$0xff]
  %v42 = vld [vmem:[%s1 + $0x8c] sm:$0xf]
  %v43 = vld [vmem:[%s1 + $0x90] sm:$0xff]
  %v44 = vld [vmem:[%s1 + $0x98] sm:$0xf]
  %v45 = vld [vmem:[%s1 + $0x9c] sm:$0xff]
  %v46 = vld [vmem:[%s1 + $0xa4] sm:$0xf]
  %v47 = vld [vmem:[%s1 + $0xa8] sm:$0xff]
  %v48 = vld [vmem:[%s1 + $0xb0] sm:$0xf]
  %v49 = vld [vmem:[%s1 + $0xb4] sm:$0xff]
  %v50 = vld [vmem:[%s1 + $0xbc] sm:$0xf]
  %v51 = vld [vmem:[%s2] sm:$0x7]
  %v53 = vlaneseq
  %v54 = vshrl.u32 %v53, 7
  %v55 = vsub.s32 0, %v54
  %v56 = vrot.slane %v51, %v55
  %v57 = vlaneseq
  %v58 = vshrl.u32 %v57, 7
  %v59 = vsub.s32 1, %v58
  %v60 = vrot.slane %v51, %v59
  %v61 = vlaneseq
  %v62 = vshrl.u32 %v61, 7
  %v63 = vsub.s32 2, %v62
  %v64 = vrot.slane %v51, %v63
  %v72 = vunpack.c.l.b16 %v15
  %v73 = vunpack.c.l.b16 %v16
  %v74 = vunpack.c.l.b16 %v17
  %v75 = vunpack.c.l.b16 %v18
  %v76 = vpack.c.b16 %v73, %v72
  %v77 = vpack.c.b16 %v75, %v74
  %v112 = vunpack.c.l.b16 %v19
  %v113 = vunpack.c.h.b16 %v19
  %v114 = vunpack.c.l.b16 %v20
  %v115 = vunpack.c.l.b16 %v21
  %v116 = vunpack.c.h.b16 %v21
  %v117 = vunpack.c.l.b16 %v22
  %v118 = vunpack.c.l.b16 %v23
  %v119 = vunpack.c.h.b16 %v23
  %v120 = vunpack.c.l.b16 %v24
  %v121 = vunpack.c.l.b16 %v25
  %v122 = vunpack.c.h.b16 %v25
  %v123 = vunpack.c.l.b16 %v26
  %v124 = vunpack.c.l.b16 %v27
  %v125 = vunpack.c.h.b16 %v27
  %v126 = vunpack.c.l.b16 %v28
  %v127 = vunpack.c.l.b16 %v29
  %v128 = vunpack.c.h.b16 %v29
  %v129 = vunpack.c.l.b16 %v30
  %v130 = vunpack.c.l.b16 %v31
  %v131 = vunpack.c.h.b16 %v31
  %v132 = vunpack.c.l.b16 %v32
  %v133 = vunpack.c.l.b16 %v33
  %v134 = vunpack.c.h.b16 %v33
  %v135 = vunpack.c.l.b16 %v34
  %v136 = vunpack.c.l.b16 %v35
  %v137 = vunpack.c.h.b16 %v35
  %v138 = vunpack.c.l.b16 %v36
  %v139 = vunpack.c.l.b16 %v37
  %v140 = vunpack.c.h.b16 %v37
  %v141 = vunpack.c.l.b16 %v38
  %v142 = vunpack.c.l.b16 %v39
  %v143 = vunpack.c.h.b16 %v39
  %v144 = vunpack.c.l.b16 %v40
  %v145 = vunpack.c.l.b16 %v41
  %v146 = vunpack.c.h.b16 %v41
  %v147 = vunpack.c.l.b16 %v42
  %v148 = vunpack.c.l.b16 %v43
  %v149 = vunpack.c.h.b16 %v43
  %v150 = vunpack.c.l.b16 %v44
  %v151 = vunpack.c.l.b16 %v45
  %v152 = vunpack.c.h.b16 %v45
  %v153 = vunpack.c.l.b16 %v46
  %v154 = vunpack.c.l.b16 %v47
  %v155 = vunpack.c.h.b16 %v47
  %v156 = vunpack.c.l.b16 %v48
  %v157 = vunpack.c.l.b16 %v49
  %v158 = vunpack.c.h.b16 %v49
  %v159 = vunpack.c.l.b16 %v50
  %v160 = vpack.c.b16 %v115, %v112
  %v161 = vpack.c.b16 %v116, %v113
  %v162 = vpack.c.b16 %v117, %v114
  %v163 = vpack.c.b16 %v121, %v118
  %v164 = vpack.c.b16 %v122, %v119
  %v165 = vpack.c.b16 %v123, %v120
  %v166 = vpack.c.b16 %v127, %v124
  %v167 = vpack.c.b16 %v128, %v125
  %v168 = vpack.c.b16 %v129, %v126
  %v169 = vpack.c.b16 %v133, %v130
  %v170 = vpack.c.b16 %v134, %v131
  %v171 = vpack.c.b16 %v135, %v132
  %v172 = vpack.c.b16 %v139, %v136
  %v173 = vpack.c.b16 %v140, %v137
  %v174 = vpack.c.b16 %v141, %v138
  %v175 = vpack.c.b16 %v145, %v142
  %v176 = vpack.c.b16 %v146, %v143
  %v177 = vpack.c.b16 %v147, %v144
  %v178 = vpack.c.b16 %v151, %v148
  %v179 = vpack.c.b16 %v152, %v149
  %v180 = vpack.c.b16 %v153, %v150
  %v181 = vpack.c.b16 %v157, %v154
  %v182 = vpack.c.b16 %v158, %v155
  %v183 = vpack.c.b16 %v159, %v156
  %208 = vmatprep.subr.bf16.mxu0 %v161
  %209 = vmatpush1.bf16.msra.mxu0 %v160
  %210 = vmatprep.subr.bf16.mxu0 %v164
  %211 = vmatpush1.bf16.msra.mxu0 %v163
  %212 = vmatprep.subr.bf16.mxu0 %v167
  %213 = vmatpush1.bf16.msra.mxu0 %v166
  %214 = vmatprep.subr.bf16.mxu0 %v170
  %215 = vmatpush1.bf16.msra.mxu0 %v169
  %216 = vmatprep.subr.bf16.mxu0 %v173
  %217 = vmatpush1.bf16.msra.mxu0 %v172
  %218 = vmatprep.subr.bf16.mxu0 %v176
  %219 = vmatpush1.bf16.msra.mxu0 %v175
  %220 = vmatprep.subr.bf16.mxu0 %v179
  %221 = vmatpush1.bf16.msra.mxu0 %v178
  %222 = vmatprep.subr.bf16.mxu0 %v182
  %223 = vmatpush1.bf16.msra.mxu0 %v181
  %224 = vmatprep.subr.bf16.mxu0 0
  %225 = vmatpush1.bf16.msra.mxu0 0
  %226 = vmatprep.subr.bf16.mxu0 0
  %227 = vmatpush1.bf16.msra.mxu0 0
  %228 = vmatprep.subr.bf16.mxu0 0
  %229 = vmatpush1.bf16.msra.mxu0 0
  %230 = vmatprep.subr.bf16.mxu0 0
  %231 = vmatpush1.bf16.msra.mxu0 0
  %232 = vmatprep.subr.bf16.mxu0 0
  %233 = vmatpush1.bf16.msra.mxu0 0
  %234 = vmatprep.subr.bf16.mxu0 0
  %235 = vmatpush1.bf16.msra.mxu0 0
  %236 = vmatprep.subr.bf16.mxu0 0
  %237 = vmatpush1.bf16.msra.mxu0 0
  %238 = vmatprep.subr.bf16.mxu0 0
  %239 = vmatpush1.bf16.msra.mxu0 0
  %240 = vmatprep.mubr.bf16.mxu0 0
  %241 = vmatmul.mubr.bf16.gmra.mrb[0].mxu0 %v76
  %v242 = vpop.f32.mrb[0].mxu0
  %v243 = vadd.f32 %v56, %v242
  %v244 = vpop.f32.mrb[0].mxu0
  %v245 = vadd.f32 %v60, %v244
  %v246 = vpop.f32.mrb[0].mxu0
  %v247 = vadd.f32 %v56, %v246
  %v248 = vpop.f32.mrb[0].mxu0
  %v249 = vadd.f32 %v60, %v248
  %250 = vmatprep.mubr.bf16.mxu0 0
  %251 = vmatmul.mubr.bf16.gmra.mrb[0].mxu0 %v77
  %v252 = vpop.f32.mrb[0].mxu0
  %v253 = vadd.f32 %v56, %v252
  %v254 = vpop.f32.mrb[0].mxu0
  %v255 = vadd.f32 %v60, %v254
  %v256 = vpop.f32.mrb[0].mxu0
  %v257 = vadd.f32 %v56, %v256
  %v258 = vpop.f32.mrb[0].mxu0
  %v259 = vadd.f32 %v60, %v258
  %260 = vdwg.mxu0
  %261 = vmatprep.subr.bf16.mxu0 0
  %262 = vmatpush1.bf16.msra.mxu0 %v162
  %263 = vmatprep.subr.bf16.mxu0 0
  %264 = vmatpush1.bf16.msra.mxu0 %v165
  %265 = vmatprep.subr.bf16.mxu0 0
  %266 = vmatpush1.bf16.msra.mxu0 %v168
  %267 = vmatprep.subr.bf16.mxu0 0
  %268 = vmatpush1.bf16.msra.mxu0 %v171
  %269 = vmatprep.subr.bf16.mxu0 0
  %270 = vmatpush1.bf16.msra.mxu0 %v174
  %271 = vmatprep.subr.bf16.mxu0 0
  %272 = vmatpush1.bf16.msra.mxu0 %v177
  %273 = vmatprep.subr.bf16.mxu0 0
  %274 = vmatpush1.bf16.msra.mxu0 %v180
  %275 = vmatprep.subr.bf16.mxu0 0
  %276 = vmatpush1.bf16.msra.mxu0 %v183
  %277 = vmatprep.subr.bf16.mxu0 0
  %278 = vmatpush1.bf16.msra.mxu0 0
  %279 = vmatprep.subr.bf16.mxu0 0
  %280 = vmatpush1.bf16.msra.mxu0 0
  %281 = vmatprep.subr.bf16.mxu0 0
  %282 = vmatpush1.bf16.msra.mxu0 0
  %283 = vmatprep.subr.bf16.mxu0 0
  %284 = vmatpush1.bf16.msra.mxu0 0
  %285 = vmatprep.subr.bf16.mxu0 0
  %286 = vmatpush1.bf16.msra.mxu0 0
  %287 = vmatprep.subr.bf16.mxu0 0
  %288 = vmatpush1.bf16.msra.mxu0 0
  %289 = vmatprep.subr.bf16.mxu0 0
  %290 = vmatpush1.bf16.msra.mxu0 0
  %291 = vmatprep.subr.bf16.mxu0 0
  %292 = vmatpush1.bf16.msra.mxu0 0
  %293 = vmatprep.mubr.bf16.mxu0 0
  %294 = vmatmul.mubr.bf16.gmra.mrb[0].mxu0 %v76
  %v295 = vpop.f32.mrb[0].mxu0
  %v296 = vadd.f32 %v64, %v295
  %v297 = vpop.f32.mrb[0].mxu0
  %v298 = vpop.f32.mrb[0].mxu0
  %v299 = vadd.f32 %v64, %v298
  %v300 = vpop.f32.mrb[0].mxu0
  %301 = vmatprep.mubr.bf16.mxu0 0
  %302 = vmatmul.mubr.bf16.gmra.mrb[0].mxu0 %v77
  %v303 = vpop.f32.mrb[0].mxu0
  %v304 = vadd.f32 %v64, %v303
  %v305 = vpop.f32.mrb[0].mxu0
  %v306 = vpop.f32.mrb[0].mxu0
  %v307 = vadd.f32 %v64, %v306
  %v308 = vpop.f32.mrb[0].mxu0
  %309 = vdwg.mxu0
  %v310 = vpack.c.bf16 %v247, %v243
  %v311 = vpack.c.bf16 %v249, %v245
  %v312 = vpack.c.bf16 %v299, %v296
  %v313 = vpack.c.bf16 %v257, %v253
  %v314 = vpack.c.bf16 %v259, %v255
  %v315 = vpack.c.bf16 %v307, %v304
  %v322 = vunpack.c.l.b16 %v310
  %v323 = vunpack.c.l.b16 %v311
  %v324 = vunpack.c.l.b16 %v312
  %v325 = vunpack.c.h.b16 %v310
  %v326 = vunpack.c.h.b16 %v311
  %v327 = vunpack.c.h.b16 %v312
  %v328 = vunpack.c.l.b16 %v313
  %v329 = vunpack.c.l.b16 %v314
  %v330 = vunpack.c.l.b16 %v315
  %v331 = vunpack.c.h.b16 %v313
  %v332 = vunpack.c.h.b16 %v314
  %v333 = vunpack.c.h.b16 %v315
  %v334 = vpack.c.b16 %v323, %v322
  %v335 = vpack.c.b16 %v324, %v324
  %v336 = vpack.c.b16 %v326, %v325
  %v337 = vpack.c.b16 %v327, %v327
  %v338 = vpack.c.b16 %v329, %v328
  %v339 = vpack.c.b16 %v330, %v330
  %v340 = vpack.c.b16 %v332, %v331
  %v341 = vpack.c.b16 %v333, %v333
  %350 = vst [vmem:[%s3] sm:$0xff] %v334
  %351 = vst [vmem:[%s3 + $0x8] sm:$0xf] %v335
  %352 = vst [vmem:[%s3 + $0xc] sm:$0xff] %v336
  %353 = vst [vmem:[%s3 + $0x14] sm:$0xf] %v337
  %354 = vst [vmem:[%s3 + $0x18] sm:$0xff] %v338
  %355 = vst [vmem:[%s3 + $0x20] sm:$0xf] %v339
  %356 = vst [vmem:[%s3 + $0x24] sm:$0xff] %v340
  %357 = vst [vmem:[%s3 + $0x2c] sm:$0xf] %v341
  // Predicated region
  $region14: #{bert_token_classifier_forward.18} parent=0 // pred_check
    _
  $region15: #{bert_token_classifier_forward.18} parent=0 // pred_check_branch
    %359 = sbr.rel (0) target = $region17
  $region16: #{bert_token_classifier_forward.18} parent=0 // pred_region
    _
  $region17: #{bert_token_classifier_forward.18} parent=0 // pred_fallthru
    _
  // Predicated region
  $region18: #{bert_token_classifier_forward.18} parent=0 // pred_check
    _
  $region19: #{bert_token_classifier_forward.18} parent=0 // pred_check_branch
    %361 = sbr.rel (0) target = $region21
  $region20: #{bert_token_classifier_forward.18} parent=0 // pred_region
    _
  $region21: #{bert_token_classifier_forward.18} parent=0 // pred_fallthru
    _

// kernel: bert_token_classifier_forward.19
$region0: #{bert_token_classifier_forward.19}
  #allocation0 [shape = 'u32[]', space=smem, size = 0x4, offset = 0x4, fixed_abs, tag = 'smem constant byte address 0x4 - core index']
  #allocation1 [shape = 'u32[144,128]{1,0:T(1,128)}', space=vmem, size = 0x12000, scoped, tag = 'internal scratch']
  #allocation2 [shape = 'f32[2,16,1]{2,1,0:T(8,128)}', space=vmem, size = 0x4000, scoped, tag = 'scratch operand']
  #allocation3 [shape = 'f32[2,16,1]{2,1,0:T(8,128)}', space=vmem, size = 0x4000, scoped, tag = 'scratch operand']
  #allocation4 [shape = 'f32[2,16,64]{2,1,0:T(8,128)}', space=vmem, size = 0x4000, scoped, tag = 'scratch operand']
  %s0 = inlined_call_operand.vmem [shape: bf16[2,16,384], index: 0, kind: input, shape index: {}, may-alias: {0,1,2}]
  %s1 = inlined_call_operand.vmem [shape: bf16[2,16,384], index: 1, kind: input, shape index: {}, may-alias: {0,1,2}]
  %s2 = inlined_call_operand.vmem [shape: bf16[2,16,384], index: 2, kind: input, shape index: {}, may-alias: {0,1,2}]
  %s3 = inlined_call_operand.vmem [shape: f32[2,1,16], index: 3, kind: input, shape index: {}]
  %s4 = inlined_call_operand.vmem [shape: bf16[2,16,128], index: 4, kind: output, shape index: {}]
  %s5 = sld [smem:[#allocation0]]
  $region180: #{bert_token_classifier_forward.19} parent=0
    _
  %s7 = ssub.s32 1, %s5
  %s8 = scalar_select 0, %s7, %s5
  $region1: #{bert_token_classifier_forward.19} parent=0
    #allocation5 [shape = 'u8[8192]{0}', space=vmem, size = 0x2000, scoped, tag = 'input window, operand 0']
    #allocation6 [shape = 'u8[8192]{0}', space=vmem, size = 0x2000, scoped, tag = 'input window, operand 1']
    #allocation7 [shape = 'u8[8192]{0}', space=vmem, size = 0x2000, scoped, tag = 'input window, operand 2']
    loop: start=0, step=1, limit=4
    $region2: #{bert_token_classifier_forward.19} parent=1 // loop_pre_header
      _
    $region3: #{bert_token_classifier_forward.19} parent=1 // loop_header
      %s10 = sphi 0, %s14
      %p11 = scmp.ge.s32.totalorder %s10, 4
      %s17 = sphi 0, %s43
      %s18 = sphi 0, %s39
      %s19 = sphi 0, %s35
      %s20 = sphi 0, %s31
      %s21 = sphi 0, %s17
      %s22 = sphi 0, %s18
      %s23 = sphi 0, %s19
      %s24 = sphi 0, %s20
      %s25 = sphi 0, %s21
      %s26 = sphi 0, %s22
      %s27 = sphi 0, %s23
      %s28 = sphi 0, %s24
      %s50 = sphi 0, %s52
      %s53 = sphi 0, %s50
      %s54 = sphi 0, %s53
      %s70 = sphi 0, %s54
      %s82 = sphi 0, %s84
      %s85 = sphi 0, %s82
      %s86 = sphi 0, %s85
      %s102 = sphi 0, %s86
      %s114 = sphi 0, %s116
      %s117 = sphi 0, %s114
      %s118 = sphi 0, %s117
      %s134 = sphi 0, %s118
      %s142 = sphi 0, %s144
      %s145 = sphi 0, %s142
      %s146 = sphi 0, %s145
      %s162 = sphi 0, %s146
      %s172 = sphi 0, %s174
      %s175 = sphi 0, %s172
      %s176 = sphi 0, %s175
      %s192 = sphi 0, %s176
    $region4: #{bert_token_classifier_forward.19} parent=1 // loop_header_branch
      %13 = sbr.rel (%p11) target = $region8
    $region5: #{bert_token_classifier_forward.19} parent=1 // loop_body
      %s15 = ssub.s32 %s10, 1
      %s16 = ssub.s32 %s10, 2
      %s29 = sadd.s32 1, %s20
      %p30 = scmp.ge.s32.totalorder %s29, 1
      %s31 = scalar_select %p30, 0, %s29
      %s32 = sadd.s32 1, %s19
      %s33 = scalar_select %p30, %s32, %s19
      %p34 = scmp.ge.s32.totalorder %s33, 1
      %s35 = scalar_select %p34, 0, %s33
      %s36 = sadd.s32 1, %s18
      %s37 = scalar_select %p34, %s36, %s18
      %p38 = scmp.ge.s32.totalorder %s37, 1
      %s39 = scalar_select %p38, 0, %s37
      %s40 = sadd.s32 1, %s17
      %s41 = scalar_select %p38, %s40, %s17
      %p42 = scmp.ge.s32.totalorder %s41, 2
      %s43 = scalar_select %p42, 0, %s41
      %s44 = ssub.s32 %s17, %s43
      %s45 = ssub.s32 %s19, %s35
      %s46 = sor.u32 %s44, %s45
      %s47 = ssub.s32 %s18, %s39
      %s48 = sor.u32 %s46, %s47
      %p49 = scmp.eq.s32.totalorder %s48, 0
      %s51 = sadd.s32 %s50, 1
      %s52 = scalar_select %p49, %s50, %s51
      %p55 = pneg %p49
      %p56 = scmp.eq.s32.totalorder %s10, 1
      %p57 = por %p55, %p56
      %p58 = scmp.ne.s32.totalorder %s50, %s53
      %p59 = scmp.eq.s32.totalorder %s10, 0
      %p60 = por %p58, %p59
      %p61 = scmp.ne.s32.totalorder %s50, %s53
      %p62 = scmp.eq.s32.totalorder %s15, 1
      %p63 = por %p61, %p62
      %p64 = scmp.ne.s32.totalorder %s53, %s54
      %p65 = scmp.eq.s32.totalorder %s15, 0
      %p66 = por %p64, %p65
      %p67 = scmp.ne.s32.totalorder %s53, %s54
      %p68 = scmp.eq.s32.totalorder %s16, 1
      %p69 = por %p67, %p68
      %p71 = scmp.ne.s32.totalorder %s54, %s70
      %p72 = scmp.eq.s32.totalorder %s16, 0
      %p73 = por %p71, %p72
      %s74 = sadd.s32 %s18, 1
      %s75 = sadd.s32 %s39, 1
      %s76 = ssub.s32 %s17, %s43
      %s77 = ssub.s32 %s20, %s31
      %s78 = sor.u32 %s76, %s77
      %s79 = ssub.s32 %s74, %s75
      %s80 = sor.u32 %s78, %s79
      %p81 = scmp.eq.s32.totalorder %s80, 0
      %s83 = sadd.s32 %s82, 1
      %s84 = scalar_select %p81, %s82, %s83
      %p87 = pneg %p81
      %p88 = scmp.eq.s32.totalorder %s10, 1
      %p89 = por %p87, %p88
      %p90 = scmp.ne.s32.totalorder %s82, %s85
      %p91 = scmp.eq.s32.totalorder %s10, 0
      %p92 = por %p90, %p91
      %p93 = scmp.ne.s32.totalorder %s82, %s85
      %p94 = scmp.eq.s32.totalorder %s15, 1
      %p95 = por %p93, %p94
      %p96 = scmp.ne.s32.totalorder %s85, %s86
      %p97 = scmp.eq.s32.totalorder %s15, 0
      %p98 = por %p96, %p97
      %p99 = scmp.ne.s32.totalorder %s85, %s86
      %p100 = scmp.eq.s32.totalorder %s16, 1
      %p101 = por %p99, %p100
      %p103 = scmp.ne.s32.totalorder %s86, %s102
      %p104 = scmp.eq.s32.totalorder %s16, 0
      %p105 = por %p103, %p104
      %s106 = sadd.s32 %s18, 2
      %s107 = sadd.s32 %s39, 2
      %s108 = ssub.s32 %s17, %s43
      %s109 = ssub.s32 %s20, %s31
      %s110 = sor.u32 %s108, %s109
      %s111 = ssub.s32 %s106, %s107
      %s112 = sor.u32 %s110, %s111
      %p113 = scmp.eq.s32.totalorder %s112, 0
      %s115 = sadd.s32 %s114, 1
      %s116 = scalar_select %p113, %s114, %s115
      %p119 = pneg %p113
      %p120 = scmp.eq.s32.totalorder %s10, 1
      %p121 = por %p119, %p120
      %p122 = scmp.ne.s32.totalorder %s114, %s117
      %p123 = scmp.eq.s32.totalorder %s10, 0
      %p124 = por %p122, %p123
      %p125 = scmp.ne.s32.totalorder %s114, %s117
      %p126 = scmp.eq.s32.totalorder %s15, 1
      %p127 = por %p125, %p126
      %p128 = scmp.ne.s32.totalorder %s117, %s118
      %p129 = scmp.eq.s32.totalorder %s15, 0
      %p130 = por %p128, %p129
      %p131 = scmp.ne.s32.totalorder %s117, %s118
      %p132 = scmp.eq.s32.totalorder %s16, 1
      %p133 = por %p131, %p132
      %p135 = scmp.ne.s32.totalorder %s118, %s134
      %p136 = scmp.eq.s32.totalorder %s16, 0
      %p137 = por %p135, %p136
      %s138 = ssub.s32 %s17, %s43
      %s139 = ssub.s32 %s20, %s31
      %s140 = sor.u32 %s138, %s139
      %p141 = scmp.eq.s32.totalorder %s140, 0
      %s143 = sadd.s32 %s142, 1
      %s144 = scalar_select %p141, %s142, %s143
      %p147 = pneg %p141
      %p148 = scmp.eq.s32.totalorder %s10, 1
      %p149 = por %p147, %p148
      %p150 = scmp.ne.s32.totalorder %s142, %s145
      %p151 = scmp.eq.s32.totalorder %s10, 0
      %p152 = por %p150, %p151
      %p153 = scmp.ne.s32.totalorder %s142, %s145
      %p154 = scmp.eq.s32.totalorder %s15, 1
      %p155 = por %p153, %p154
      %p156 = scmp.ne.s32.totalorder %s145, %s146
      %p157 = scmp.eq.s32.totalorder %s15, 0
      %p158 = por %p156, %p157
      %p159 = scmp.ne.s32.totalorder %s145, %s146
      %p160 = scmp.eq.s32.totalorder %s16, 1
      %p161 = por %p159, %p160
      %p163 = scmp.ne.s32.totalorder %s146, %s162
      %p164 = scmp.eq.s32.totalorder %s16, 0
      %p165 = por %p163, %p164
      %s166 = ssub.s32 %s17, %s43
      %s167 = ssub.s32 %s19, %s35
      %s168 = sor.u32 %s166, %s167
      %s169 = ssub.s32 %s18, %s39
      %s170 = sor.u32 %s168, %s169
      %p171 = scmp.eq.s32.totalorder %s170, 0
      %s173 = sadd.s32 %s172, 1
      %s174 = scalar_select %p171, %s172, %s173
      %p177 = pneg %p171
      %p178 = scmp.eq.s32.totalorder %s10, 1
      %p179 = por %p177, %p178
      %p180 = scmp.ne.s32.totalorder %s172, %s175
      %p181 = scmp.eq.s32.totalorder %s10, 0
      %p182 = por %p180, %p181
      %p183 = scmp.ne.s32.totalorder %s172, %s175
      %p184 = scmp.eq.s32.totalorder %s15, 1
      %p185 = por %p183, %p184
      %p186 = scmp.ne.s32.totalorder %s175, %s176
      %p187 = scmp.eq.s32.totalorder %s15, 0
      %p188 = por %p186, %p187
      %p189 = scmp.ne.s32.totalorder %s175, %s176
      %p190 = scmp.eq.s32.totalorder %s16, 1
      %p191 = por %p189, %p190
      %p193 = scmp.ne.s32.totalorder %s176, %s192
      %p194 = scmp.eq.s32.totalorder %s16, 0
      %p195 = por %p193, %p194
      %p196 = scmp.le.s32.totalorder 1, %s10
      %p197 = scmp.lt.s32.totalorder %s10, 3
      %p198 = pnand %p196, %p197
      %p199 = pneg %p198
      // Predicated region
      $region9: #{bert_token_classifier_forward.19} parent=5 // pred_check
        _
      $region10: #{bert_token_classifier_forward.19} parent=5 // pred_check_branch
        %201 = sbr.rel (%p198) target = $region12
      $region11: #{bert_token_classifier_forward.19} parent=5 // pred_region
        %s202 = ssub.s32 %s10, 1
      $region12: #{bert_token_classifier_forward.19} parent=5 // pred_fallthru
        _
      %p203 = scmp.lt.s32.totalorder %s10, 2
      // Predicated region
      $region13: #{bert_token_classifier_forward.19} parent=5 // pred_check
        %p204 = pneg %p203
      $region14: #{bert_token_classifier_forward.19} parent=5 // pred_check_branch
        %206 = sbr.rel (%p204) target = $region16
      $region15: #{bert_token_classifier_forward.19} parent=5 // pred_region
        // Predicated region
        $region17: #{bert_token_classifier_forward.19} parent=15 // pred_check
          %p207 = pneg %p60
        $region18: #{bert_token_classifier_forward.19} parent=15 // pred_check_branch
          %209 = sbr.rel (%p207) target = $region20
        $region19: #{bert_token_classifier_forward.19} parent=15 // pred_region
          %s210 = sand.u32 %s50, 1
          %s211 = sand.u32 %s50, 1
          %s212 = smul.addr %s211, 8
          %s213 = scalar_lea.vmem [#allocation5], %s212
          %s214 = smul.u32 2, %s19
          %s215 = smul.addr %s214, 3
          %s216 = sadd.s32 %s18, %s215
          %s217 = smul.addr %s17, 6
          %s218 = sadd.s32 %s216, %s217
          %s219 = smul.addr %s218, 4
          %s220 = scalar_lea.vmem %s0, %s219
          // Predicated region
          $region21: #{bert_token_classifier_forward.19} parent=19 // pred_check
            _
          $region22: #{bert_token_classifier_forward.19} parent=19 // pred_check_branch
            %222 = sbr.rel (0) target = $region24
          $region23: #{bert_token_classifier_forward.19} parent=19 // pred_region
            // Predicated region
            $region25: #{bert_token_classifier_forward.19} parent=23 // pred_check
              _
            $region26: #{bert_token_classifier_forward.19} parent=23 // pred_check_branch
              %224 = sbr.rel target = $region28
            $region27: #{bert_token_classifier_forward.19} parent=23 // pred_region
              // Predicated region
              $region40: #{bert_token_classifier_forward.19} parent=27 // pred_check
                _
              $region41: #{bert_token_classifier_forward.19} parent=27 // pred_check_branch
                %241 = sbr.rel (0) target = $region43
              $region42: #{bert_token_classifier_forward.19} parent=27 // pred_region
                loop: start=0, step=1, limit=1
                $region44: #{bert_token_classifier_forward.19} parent=42 // loop_pre_header
                  _
                $region45: #{bert_token_classifier_forward.19} parent=42 // loop_header
                  %s243 = sphi 0, %s247
                  %p244 = scmp.ge.s32.totalorder %s243, 1
                  %s248 = sphi %s220, %s220
                  %s249 = sphi %s213, %s213
                $region46: #{bert_token_classifier_forward.19} parent=42 // loop_header_branch
                  %246 = sbr.rel (%p244) target = $region50
                $region47: #{bert_token_classifier_forward.19} parent=42 // loop_body
                  _
                $region48: #{bert_token_classifier_forward.19} parent=42 // loop_footer
                  %s247 = sadd.s32 1, %s243
                $region49: #{bert_token_classifier_forward.19} parent=42 // loop_footer_branch
                  %242 = sbr.rel target = $region45
                $region50: #{bert_token_classifier_forward.19} parent=42 // loop_exit
                  _
                loop: start=0, step=1, limit=1
                $region51: #{bert_token_classifier_forward.19} parent=42 // loop_pre_header
                  _
                $region52: #{bert_token_classifier_forward.19} parent=42 // loop_header
                  %s252 = sphi 0, %s256
                  %p253 = scmp.ge.s32.totalorder %s252, 1
                  %s257 = sphi %s220, %s220
                  %s258 = sphi %s213, %s213
                $region53: #{bert_token_classifier_forward.19} parent=42 // loop_header_branch
                  %255 = sbr.rel (%p253) target = $region57
                $region54: #{bert_token_classifier_forward.19} parent=42 // loop_body
                  %v259 = vld [vmem:[%s257] sm:$0xf]
                  %260 = vst [vmem:[%s258] sm:$0xf] %v259
                  %v261 = vld [vmem:[%s257 + $0xc] sm:$0xf]
                  %262 = vst [vmem:[%s258 + $0x4] sm:$0xf] %v261
                $region55: #{bert_token_classifier_forward.19} parent=42 // loop_footer
                  %s256 = sadd.s32 1, %s252
                $region56: #{bert_token_classifier_forward.19} parent=42 // loop_footer_branch
                  %251 = sbr.rel target = $region52
                $region57: #{bert_token_classifier_forward.19} parent=42 // loop_exit
                  _
              $region43: #{bert_token_classifier_forward.19} parent=27 // pred_fallthru
                _
            $region28: #{bert_token_classifier_forward.19} parent=23 // pred_fallthru
              _
            // Predicated region
            $region29: #{bert_token_classifier_forward.19} parent=23 // pred_check
              _
            $region30: #{bert_token_classifier_forward.19} parent=23 // pred_check_branch
              %226 = sbr.rel (0) target = $region32
            $region31: #{bert_token_classifier_forward.19} parent=23 // pred_region
              loop: start=0, step=1, limit=1
              $region33: #{bert_token_classifier_forward.19} parent=31 // loop_pre_header
                _
              $region34: #{bert_token_classifier_forward.19} parent=31 // loop_header
                %s229 = sphi 0, %s233
                %p230 = scmp.ge.s32.totalorder %s229, 1
                %s234 = sphi %s220, %s220
                %s235 = sphi %s213, %s213
              $region35: #{bert_token_classifier_forward.19} parent=31 // loop_header_branch
                %232 = sbr.rel (%p230) target = $region39
              $region36: #{bert_token_classifier_forward.19} parent=31 // loop_body
                %v236 = vld [vmem:[%s234] sm:$0xf]
                %237 = vst [vmem:[%s235] sm:$0xf] %v236
                %v238 = vld [vmem:[%s234 + $0xc] sm:$0xf]
                %239 = vst [vmem:[%s235 + $0x4] sm:$0xf] %v238
              $region37: #{bert_token_classifier_forward.19} parent=31 // loop_footer
                %s233 = sadd.s32 1, %s229
              $region38: #{bert_token_classifier_forward.19} parent=31 // loop_footer_branch
                %228 = sbr.rel target = $region34
              $region39: #{bert_token_classifier_forward.19} parent=31 // loop_exit
                _
            $region32: #{bert_token_classifier_forward.19} parent=23 // pred_fallthru
              _
          $region24: #{bert_token_classifier_forward.19} parent=19 // pred_fallthru
            _
          %263 = vnop
        $region20: #{bert_token_classifier_forward.19} parent=15 // pred_fallthru
          _
        // Predicated region
        $region58: #{bert_token_classifier_forward.19} parent=15 // pred_check
          %p264 = pneg %p92
        $region59: #{bert_token_classifier_forward.19} parent=15 // pred_check_branch
          %266 = sbr.rel (%p264) target = $region61
        $region60: #{bert_token_classifier_forward.19} parent=15 // pred_region
          %s267 = sand.u32 %s82, 1
          %s268 = sand.u32 %s82, 1
          %s269 = smul.addr %s268, 8
          %s270 = scalar_lea.vmem [#allocation6], %s269
          %s271 = sadd.s32 %s18, 1
          %s272 = smul.u32 2, %s20
          %s273 = smul.addr %s272, 3
          %s274 = sadd.s32 %s271, %s273
          %s275 = smul.addr %s17, 6
          %s276 = sadd.s32 %s274, %s275
          %s277 = smul.addr %s276, 4
          %s278 = scalar_lea.vmem %s1, %s277
          // Predicated region
          $region62: #{bert_token_classifier_forward.19} parent=60 // pred_check
            _
          $region63: #{bert_token_classifier_forward.19} parent=60 // pred_check_branch
            %280 = sbr.rel (0) target = $region65
          $region64: #{bert_token_classifier_forward.19} parent=60 // pred_region
            // Predicated region
            $region66: #{bert_token_classifier_forward.19} parent=64 // pred_check
              _
            $region67: #{bert_token_classifier_forward.19} parent=64 // pred_check_branch
              %282 = sbr.rel target = $region69
            $region68: #{bert_token_classifier_forward.19} parent=64 // pred_region
              // Predicated region
              $region81: #{bert_token_classifier_forward.19} parent=68 // pred_check
                _
              $region82: #{bert_token_classifier_forward.19} parent=68 // pred_check_branch
                %299 = sbr.rel (0) target = $region84
              $region83: #{bert_token_classifier_forward.19} parent=68 // pred_region
                loop: start=0, step=1, limit=1
                $region85: #{bert_token_classifier_forward.19} parent=83 // loop_pre_header
                  _
                $region86: #{bert_token_classifier_forward.19} parent=83 // loop_header
                  %s301 = sphi 0, %s305
                  %p302 = scmp.ge.s32.totalorder %s301, 1
                  %s306 = sphi %s278, %s278
                  %s307 = sphi %s270, %s270
                $region87: #{bert_token_classifier_forward.19} parent=83 // loop_header_branch
                  %304 = sbr.rel (%p302) target = $region91
                $region88: #{bert_token_classifier_forward.19} parent=83 // loop_body
                  _
                $region89: #{bert_token_classifier_forward.19} parent=83 // loop_footer
                  %s305 = sadd.s32 1, %s301
                $region90: #{bert_token_classifier_forward.19} parent=83 // loop_footer_branch
                  %300 = sbr.rel target = $region86
                $region91: #{bert_token_classifier_forward.19} parent=83 // loop_exit
                  _
                loop: start=0, step=1, limit=1
                $region92: #{bert_token_classifier_forward.19} parent=83 // loop_pre_header
                  _
                $region93: #{bert_token_classifier_forward.19} parent=83 // loop_header
                  %s310 = sphi 0, %s314
                  %p311 = scmp.ge.s32.totalorder %s310, 1
                  %s315 = sphi %s278, %s278
                  %s316 = sphi %s270, %s270
                $region94: #{bert_token_classifier_forward.19} parent=83 // loop_header_branch
                  %313 = sbr.rel (%p311) target = $region98
                $region95: #{bert_token_classifier_forward.19} parent=83 // loop_body
                  %v317 = vld [vmem:[%s315] sm:$0xf]
                  %318 = vst [vmem:[%s316] sm:$0xf] %v317
                  %v319 = vld [vmem:[%s315 + $0xc] sm:$0xf]
                  %320 = vst [vmem:[%s316 + $0x4] sm:$0xf] %v319
                $region96: #{bert_token_classifier_forward.19} parent=83 // loop_footer
                  %s314 = sadd.s32 1, %s310
                $region97: #{bert_token_classifier_forward.19} parent=83 // loop_footer_branch
                  %309 = sbr.rel target = $region93
                $region98: #{bert_token_classifier_forward.19} parent=83 // loop_exit
                  _
              $region84: #{bert_token_classifier_forward.19} parent=68 // pred_fallthru
                _
            $region69: #{bert_token_classifier_forward.19} parent=64 // pred_fallthru
              _
            // Predicated region
            $region70: #{bert_token_classifier_forward.19} parent=64 // pred_check
              _
            $region71: #{bert_token_classifier_forward.19} parent=64 // pred_check_branch
              %284 = sbr.rel (0) target = $region73
            $region72: #{bert_token_classifier_forward.19} parent=64 // pred_region
              loop: start=0, step=1, limit=1
              $region74: #{bert_token_classifier_forward.19} parent=72 // loop_pre_header
                _
              $region75: #{bert_token_classifier_forward.19} parent=72 // loop_header
                %s287 = sphi 0, %s291
                %p288 = scmp.ge.s32.totalorder %s287, 1
                %s292 = sphi %s278, %s278
                %s293 = sphi %s270, %s270
              $region76: #{bert_token_classifier_forward.19} parent=72 // loop_header_branch
                %290 = sbr.rel (%p288) target = $region80
              $region77: #{bert_token_classifier_forward.19} parent=72 // loop_body
                %v294 = vld [vmem:[%s292] sm:$0xf]
                %295 = vst [vmem:[%s293] sm:$0xf] %v294
                %v296 = vld [vmem:[%s292 + $0xc] sm:$0xf]
                %297 = vst [vmem:[%s293 + $0x4] sm:$0xf] %v296
              $region78: #{bert_token_classifier_forward.19} parent=72 // loop_footer
                %s291 = sadd.s32 1, %s287
              $region79: #{bert_token_classifier_forward.19} parent=72 // loop_footer_branch
                %286 = sbr.rel target = $region75
              $region80: #{bert_token_classifier_forward.19} parent=72 // loop_exit
                _
            $region73: #{bert_token_classifier_forward.19} parent=64 // pred_fallthru
              _
          $region65: #{bert_token_classifier_forward.19} parent=60 // pred_fallthru
            _
          %321 = vnop
        $region61: #{bert_token_classifier_forward.19} parent=15 // pred_fallthru
          _
        // Predicated region
        $region99: #{bert_token_classifier_forward.19} parent=15 // pred_check
          %p322 = pneg %p124
        $region100: #{bert_token_classifier_forward.19} parent=15 // pred_check_branch
          %324 = sbr.rel (%p322) target = $region102
        $region101: #{bert_token_classifier_forward.19} parent=15 // pred_region
          %s325 = sand.u32 %s114, 1
          %s326 = sand.u32 %s114, 1
          %s327 = smul.addr %s326, 8
          %s328 = scalar_lea.vmem [#allocation7], %s327
          %s329 = sadd.s32 %s18, 2
          %s330 = smul.u32 2, %s20
          %s331 = smul.addr %s330, 3
          %s332 = sadd.s32 %s329, %s331
          %s333 = smul.addr %s17, 6
          %s334 = sadd.s32 %s332, %s333
          %s335 = smul.addr %s334, 4
          %s336 = scalar_lea.vmem %s2, %s335
          // Predicated region
          $region103: #{bert_token_classifier_forward.19} parent=101 // pred_check
            _
          $region104: #{bert_token_classifier_forward.19} parent=101 // pred_check_branch
            %338 = sbr.rel (0) target = $region106
          $region105: #{bert_token_classifier_forward.19} parent=101 // pred_region
            // Predicated region
            $region107: #{bert_token_classifier_forward.19} parent=105 // pred_check
              _
            $region108: #{bert_token_classifier_forward.19} parent=105 // pred_check_branch
              %340 = sbr.rel target = $region110
            $region109: #{bert_token_classifier_forward.19} parent=105 // pred_region
              // Predicated region
              $region122: #{bert_token_classifier_forward.19} parent=109 // pred_check
                _
              $region123: #{bert_token_classifier_forward.19} parent=109 // pred_check_branch
                %357 = sbr.rel (0) target = $region125
              $region124: #{bert_token_classifier_forward.19} parent=109 // pred_region
                loop: start=0, step=1, limit=1
                $region126: #{bert_token_classifier_forward.19} parent=124 // loop_pre_header
                  _
                $region127: #{bert_token_classifier_forward.19} parent=124 // loop_header
                  %s359 = sphi 0, %s363
                  %p360 = scmp.ge.s32.totalorder %s359, 1
                  %s364 = sphi %s336, %s336
                  %s365 = sphi %s328, %s328
                $region128: #{bert_token_classifier_forward.19} parent=124 // loop_header_branch
                  %362 = sbr.rel (%p360) target = $region132
                $region129: #{bert_token_classifier_forward.19} parent=124 // loop_body
                  _
                $region130: #{bert_token_classifier_forward.19} parent=124 // loop_footer
                  %s363 = sadd.s32 1, %s359
                $region131: #{bert_token_classifier_forward.19} parent=124 // loop_footer_branch
                  %358 = sbr.rel target = $region127
                $region132: #{bert_token_classifier_forward.19} parent=124 // loop_exit
                  _
                loop: start=0, step=1, limit=1
                $region133: #{bert_token_classifier_forward.19} parent=124 // loop_pre_header
                  _
                $region134: #{bert_token_classifier_forward.19} parent=124 // loop_header
                  %s368 = sphi 0, %s372
                  %p369 = scmp.ge.s32.totalorder %s368, 1
                  %s373 = sphi %s336, %s336
                  %s374 = sphi %s328, %s328
                $region135: #{bert_token_classifier_forward.19} parent=124 // loop_header_branch
                  %371 = sbr.rel (%p369) target = $region139
                $region136: #{bert_token_classifier_forward.19} parent=124 // loop_body
                  %v375 = vld [vmem:[%s373] sm:$0xf]
                  %376 = vst [vmem:[%s374] sm:$0xf] %v375
                  %v377 = vld [vmem:[%s373 + $0xc] sm:$0xf]
                  %378 = vst [vmem:[%s374 + $0x4] sm:$0xf] %v377
                $region137: #{bert_token_classifier_forward.19} parent=124 // loop_footer
                  %s372 = sadd.s32 1, %s368
                $region138: #{bert_token_classifier_forward.19} parent=124 // loop_footer_branch
                  %367 = sbr.rel target = $region134
                $region139: #{bert_token_classifier_forward.19} parent=124 // loop_exit
                  _
              $region125: #{bert_token_classifier_forward.19} parent=109 // pred_fallthru
                _
            $region110: #{bert_token_classifier_forward.19} parent=105 // pred_fallthru
              _
            // Predicated region
            $region111: #{bert_token_classifier_forward.19} parent=105 // pred_check
              _
            $region112: #{bert_token_classifier_forward.19} parent=105 // pred_check_branch
              %342 = sbr.rel (0) target = $region114
            $region113: #{bert_token_classifier_forward.19} parent=105 // pred_region
              loop: start=0, step=1, limit=1
              $region115: #{bert_token_classifier_forward.19} parent=113 // loop_pre_header
                _
              $region116: #{bert_token_classifier_forward.19} parent=113 // loop_header
                %s345 = sphi 0, %s349
                %p346 = scmp.ge.s32.totalorder %s345, 1
                %s350 = sphi %s336, %s336
                %s351 = sphi %s328, %s328
              $region117: #{bert_token_classifier_forward.19} parent=113 // loop_header_branch
                %348 = sbr.rel (%p346) target = $region121
              $region118: #{bert_token_classifier_forward.19} parent=113 // loop_body
                %v352 = vld [vmem:[%s350] sm:$0xf]
                %353 = vst [vmem:[%s351] sm:$0xf] %v352
                %v354 = vld [vmem:[%s350 + $0xc] sm:$0xf]
                %355 = vst [vmem:[%s351 + $0x4] sm:$0xf] %v354
              $region119: #{bert_token_classifier_forward.19} parent=113 // loop_footer
                %s349 = sadd.s32 1, %s345
              $region120: #{bert_token_classifier_forward.19} parent=113 // loop_footer_branch
                %344 = sbr.rel target = $region116
              $region121: #{bert_token_classifier_forward.19} parent=113 // loop_exit
                _
            $region114: #{bert_token_classifier_forward.19} parent=105 // pred_fallthru
              _
          $region106: #{bert_token_classifier_forward.19} parent=101 // pred_fallthru
            _
          %379 = vnop
        $region102: #{bert_token_classifier_forward.19} parent=15 // pred_fallthru
          _
        // Predicated region
        $region140: #{bert_token_classifier_forward.19} parent=15 // pred_check
          %p380 = pneg %p152
        $region141: #{bert_token_classifier_forward.19} parent=15 // pred_check_branch
          %382 = sbr.rel (%p380) target = $region143
        $region142: #{bert_token_classifier_forward.19} parent=15 // pred_region
          %p383 = scmp.lt.s32.totalorder %s17, 1
          %s384 = scalar_select %p383, %s17, 1
          %p385 = scmp.lt.s32.totalorder %s20, 0
          %s386 = scalar_select %p385, %s20, 0
          %s387 = sadd.s32 %s386, %s384
          %s388 = scalar_lea.vmem %s3, %s387
        $region143: #{bert_token_classifier_forward.19} parent=15 // pred_fallthru
          _
      $region16: #{bert_token_classifier_forward.19} parent=5 // pred_fallthru
        _
      %p389 = scmp.le.s32.totalorder 1, %s10
      %p390 = scmp.lt.s32.totalorder %s10, 3
      %p391 = pnand %p389, %p390
      %p392 = pneg %p391
      // Predicated region
      $region144: #{bert_token_classifier_forward.19} parent=5 // pred_check
        _
      $region145: #{bert_token_classifier_forward.19} parent=5 // pred_check_branch
        %394 = sbr.rel (%p391) target = $region147
      $region146: #{bert_token_classifier_forward.19} parent=5 // pred_region
        %s395 = ssub.s32 %s10, 1
        %s396 = sand.u32 %s53, 1
        %s397 = sand.u32 %s53, 1
        %s398 = smul.addr %s397, 8
        %s399 = scalar_lea.vmem [#allocation5], %s398
        // Predicated region
        $region148: #{bert_token_classifier_forward.19} parent=146 // pred_check
          %p400 = pneg %p66
        $region149: #{bert_token_classifier_forward.19} parent=146 // pred_check_branch
          %402 = sbr.rel (%p400) target = $region151
        $region150: #{bert_token_classifier_forward.19} parent=146 // pred_region
          _
        $region151: #{bert_token_classifier_forward.19} parent=146 // pred_fallthru
          _
        %s403 = sand.u32 %s85, 1
        %s404 = sand.u32 %s85, 1
        %s405 = smul.addr %s404, 8
        %s406 = scalar_lea.vmem [#allocation6], %s405
        // Predicated region
        $region152: #{bert_token_classifier_forward.19} parent=146 // pred_check
          %p407 = pneg %p98
        $region153: #{bert_token_classifier_forward.19} parent=146 // pred_check_branch
          %409 = sbr.rel (%p407) target = $region155
        $region154: #{bert_token_classifier_forward.19} parent=146 // pred_region
          _
        $region155: #{bert_token_classifier_forward.19} parent=146 // pred_fallthru
          _
        %s410 = sand.u32 %s117, 1
        %s411 = sand.u32 %s117, 1
        %s412 = smul.addr %s411, 8
        %s413 = scalar_lea.vmem [#allocation7], %s412
        // Predicated region
        $region156: #{bert_token_classifier_forward.19} parent=146 // pred_check
          %p414 = pneg %p130
        $region157: #{bert_token_classifier_forward.19} parent=146 // pred_check_branch
          %416 = sbr.rel (%p414) target = $region159
        $region158: #{bert_token_classifier_forward.19} parent=146 // pred_region
          _
        $region159: #{bert_token_classifier_forward.19} parent=146 // pred_fallthru
          _
        %s417 = sand.u32 %s53, 1
        %s418 = sand.u32 %s53, 1
        %s419 = smul.addr %s418, 8
        %s420 = scalar_lea.vmem [#allocation5], %s419
        %p421 = pneg %p66
        %p422 = pneg %p63
        %s423 = sand.u32 %s85, 1
        %s424 = sand.u32 %s85, 1
        %s425 = smul.addr %s424, 8
        %s426 = scalar_lea.vmem [#allocation6], %s425
        %p427 = pneg %p98
        %p428 = pneg %p95
        %s429 = sand.u32 %s117, 1
        %s430 = sand.u32 %s117, 1
        %s431 = smul.addr %s430, 8
        %s432 = scalar_lea.vmem [#allocation7], %s431
        %p433 = pneg %p130
        %p434 = pneg %p127
        %p435 = scmp.lt.s32.totalorder %s21, 1
        %s436 = scalar_select %p435, %s21, 1
        %p437 = scmp.lt.s32.totalorder %s24, 0
        %s438 = scalar_select %p437, %s24, 0
        %s439 = sadd.s32 %s438, %s436
        %s440 = scalar_lea.vmem %s3, %s439
        %p441 = pneg %p158
        %p442 = pneg %p155
        %p443 = pneg %p188
        %p444 = pneg %p185
        %s445 = smul.u32 2, %s23
        %p446 = scmp.lt.s32.totalorder %s21, 1
        %s447 = scalar_select %p446, %s21, 1
        %p448 = scmp.lt.s32.totalorder %s445, 1
        %s449 = scalar_select %p448, %s445, 1
        %p450 = scmp.lt.s32.totalorder %s22, 0
        %s451 = scalar_select %p450, %s22, 0
        %s452 = sadd.s32 %s451, %s449
        %s453 = smul.addr %s447, 2
        %s454 = sadd.s32 %s452, %s453
        %s455 = smul.addr %s454, 4
        %s456 = scalar_lea.vmem %s4, %s455
        %s457 = smul.u32 2, %s23
        %s458 = sadd.s32 %s22, 1
        %s459 = smul.u32 2, %s24
        %s460 = sadd.s32 %s22, 2
        %s461 = smul.u32 2, %s24
        %p462 = scmp.lt.s32.totalorder %s21, 1
        %s463 = scalar_select %p462, %s21, 1
        %p464 = scmp.lt.s32.totalorder %s24, 0
        %s465 = scalar_select %p464, %s24, 0
        %s466 = sadd.s32 %s465, %s463
        %s467 = scalar_lea.vmem %s3, %s466
        %s468 = smul.u32 2, %s23
        %p469 = scmp.lt.s32.totalorder %s21, 1
        %s470 = scalar_select %p469, %s21, 1
        %p471 = scmp.lt.s32.totalorder %s468, 1
        %s472 = scalar_select %p471, %s468, 1
        %p473 = scmp.lt.s32.totalorder %s22, 0
        %s474 = scalar_select %p473, %s22, 0
        %s475 = sadd.s32 %s474, %s472
        %s476 = smul.addr %s470, 2
        %s477 = sadd.s32 %s475, %s476
        %s478 = smul.addr %s477, 4
        %s479 = scalar_lea.vmem %s4, %s478
        %s480 = smul.u32 2, %s23
        %p482 = scmp.eq.s32.totalorder %s24, 0
        // Predicated region
        $region160: #{bert_token_classifier_forward.19} parent=146 // pred_check
          %p483 = pneg %p482
        $region161: #{bert_token_classifier_forward.19} parent=146 // pred_check_branch
          %485 = sbr.rel (%p483) target = $region163
        $region162: #{bert_token_classifier_forward.19} parent=146 // pred_region
          %vm486 = vcmask 7168
          %487 = vst.msk [vmem:[#allocation2] sm:$0xff] %vm486, -1e+30
          %488 = vst.msk [vmem:[#allocation2 + $0x8] sm:$0xff] %vm486, -1e+30
          %489 = vst.msk [vmem:[#allocation2 + $0x10] sm:$0xff] %vm486, -1e+30
          %490 = vst.msk [vmem:[#allocation2 + $0x18] sm:$0xff] %vm486, -1e+30
          %491 = vst.msk [vmem:[#allocation3] sm:$0xff] %vm486, 0.0
          %492 = vst.msk [vmem:[#allocation3 + $0x8] sm:$0xff] %vm486, 0.0
          %493 = vst.msk [vmem:[#allocation3 + $0x10] sm:$0xff] %vm486, 0.0
          %494 = vst.msk [vmem:[#allocation3 + $0x18] sm:$0xff] %vm486, 0.0
          %vm495 = vcmask 523264
          %496 = vst.msk [vmem:[#allocation4] sm:$0xff] %vm495, 0.0
          %497 = vst.msk [vmem:[#allocation4 + $0x8] sm:$0xff] %vm495, 0.0
          %498 = vst.msk [vmem:[#allocation4 + $0x10] sm:$0xff] %vm495, 0.0
          %499 = vst.msk [vmem:[#allocation4 + $0x18] sm:$0xff] %vm495, 0.0
        $region163: #{bert_token_classifier_forward.19} parent=146 // pred_fallthru
          _
        %v500 = vld [vmem:[%s467] sm:$0x1]
        %v501 = vld [vmem:[%s399] sm:$0xf]
        %v502 = vld [vmem:[%s399 + $0x4] sm:$0xf]
        %v503 = vunpack.c.l.bf16 %v501
        %v504 = vunpack.c.l.bf16 %v502
        %v505 = vmul.f32 %v503, 0.125
        %v506 = vmul.f32 %v504, 0.125
        %v507 = vpack.c.bf16 %v506, %v505
        %v508 = vld [vmem:[%s406] sm:$0xf]
        %v509 = vld [vmem:[%s406 + $0x4] sm:$0xf]
        %v511 = vlaneseq
        %v512 = vshrl.u32 %v511, 7
        %v513 = vsub.s32 0, %v512
        %v514 = vrot.slane %v500, %v513
        %v518 = vunpack.c.l.b16 %v508
        %v519 = vunpack.c.l.b16 %v509
        %v520 = vpack.c.b16 %v519, %v518
        %vm521 = vcmask 523264
        %v523 = vsel %vm521, %v507, 0
        %v526 = vsel %vm521, %v520, 0
        %528 = vmatprep.subr.bf16.mxu0 0
        %529 = vmatpush1.bf16.xpose.msra.mxu0 %v526
        %530 = vmatprep.subr.bf16.mxu0 0
        %531 = vmatpush1.bf16.xpose.msra.mxu0 0
        %532 = vmatprep.subr.bf16.mxu0 0
        %533 = vmatpush1.bf16.xpose.msra.mxu0 0
        %534 = vmatprep.subr.bf16.mxu0 0
        %535 = vmatpush1.bf16.xpose.msra.mxu0 0
        %536 = vmatprep.subr.bf16.mxu0 0
        %537 = vmatpush1.bf16.xpose.msra.mxu0 0
        %538 = vmatprep.subr.bf16.mxu0 0
        %539 = vmatpush1.bf16.xpose.msra.mxu0 0
        %540 = vmatprep.subr.bf16.mxu0 0
        %541 = vmatpush1.bf16.xpose.msra.mxu0 0
        %542 = vmatprep.subr.bf16.mxu0 0
        %543 = vmatpush1.bf16.xpose.msra.mxu0 0
        %544 = vmatprep.subr.bf16.mxu0 0
        %545 = vmatpush1.bf16.xpose.msra.mxu0 0
        %546 = vmatprep.subr.bf16.mxu0 0
        %547 = vmatpush1.bf16.xpose.msra.mxu0 0
        %548 = vmatprep.subr.bf16.mxu0 0
        %549 = vmatpush1.bf16.xpose.msra.mxu0 0
        %550 = vmatprep.subr.bf16.mxu0 0
        %551 = vmatpush1.bf16.xpose.msra.mxu0 0
        %552 = vmatprep.subr.bf16.mxu0 0
        %553 = vmatpush1.bf16.xpose.msra.mxu0 0
        %554 = vmatprep.subr.bf16.mxu0 0
        %555 = vmatpush1.bf16.xpose.msra.mxu0 0
        %556 = vmatprep.subr.bf16.mxu0 0
        %557 = vmatpush1.bf16.xpose.msra.mxu0 0
        %558 = vmatprep.subr.bf16.mxu0 0
        %559 = vmatpush1.bf16.xpose.msra.mxu0 0
        %560 = vmatprep.mubr.bf16.mxu0 0
        %561 = vmatmul.mubr.bf16.gmra.mrb[0].mxu0 %v523
        %v562 = vpop.f32.mrb[0].mxu0
        %v563 = vadd.f32 %v514, %v562
        %v564 = vpop.f32.mrb[0].mxu0
        %v565 = vpop.f32.mrb[0].mxu0
        %v566 = vadd.f32 %v514, %v565
        %v567 = vpop.f32.mrb[0].mxu0
        %568 = vdwg.mxu0
        %v569 = vld [vmem:[#allocation2] sm:$0xff]
        %v570 = vld [vmem:[#allocation2 + $0x8] sm:$0xff]
        %vm571 = vcmask 130048
        %v572 = vsel %vm571, %v563, -inf
        %573 = vmax.xlane.f32.xlu0 %v572
        %v574 = vpop.xlane.xlu0 %573
        %v575 = vsel %vm571, %v566, -inf
        %576 = vmax.xlane.f32.xlu0 %v575
        %v577 = vpop.xlane.xlu0 %576
        %v578 = vmax.f32 %v569, %v574
        %v579 = vmax.f32 %v570, %v577
        %v580 = vsub.f32 %v569, %v578
        %v581 = vsub.f32 %v570, %v579
        %v582 = vmul.f32 %v580, 1.442695
        %v583 = vpow.pop %v582
        %v584 = vmul.f32 %v581, 1.442695
        %v585 = vpow.pop %v584
        %587 = vset.pattern.permute.xlu0 0
        %588 = vperm.xlu0 %587, %v578
        %v589 = vpop.permute.xlu0 %588
        %592 = vset.pattern.permute.xlu0 0
        %593 = vperm.xlu0 %592, %v579
        %v594 = vpop.permute.xlu0 %593
        %v596 = vsub.f32 %v563, %v589
        %v597 = vsub.f32 %v566, %v594
        %v598 = vmul.f32 %v596, 1.442695
        %v599 = vpow.pop %v598
        %v600 = vmul.f32 %v597, 1.442695
        %v601 = vpow.pop %v600
        %v602 = vld [vmem:[#allocation3] sm:$0xff]
        %v603 = vld [vmem:[#allocation3 + $0x8] sm:$0xff]
        %v604 = vmul.f32 %v583, %v602
        %v605 = vmul.f32 %v585, %v603
        %v606 = vsel %vm571, %v599, 0.0
        %607 = vadd.xlane.f32.xlu0 %v606
        %v608 = vpop.xlane.xlu0 %607
        %v609 = vsel %vm571, %v601, 0.0
        %610 = vadd.xlane.f32.xlu0 %v609
        %v611 = vpop.xlane.xlu0 %610
        %v612 = vadd.f32 %v604, %v608
        %v613 = vadd.f32 %v605, %v611
        %vm614 = vcmask 7168
        %615 = vst.msk [vmem:[#allocation3] sm:$0xff] %vm614, %v612
        %616 = vst.msk [vmem:[#allocation3 + $0x8] sm:$0xff] %vm614, %v613
        %v617 = vld [vmem:[#allocation4] sm:$0xff]
        %v618 = vld [vmem:[#allocation4 + $0x8] sm:$0xff]
        %620 = vset.pattern.permute.xlu0 0
        %621 = vperm.xlu0 %620, %v583
        %v622 = vpop.permute.xlu0 %621
        %625 = vset.pattern.permute.xlu0 0
        %626 = vperm.xlu0 %625, %v585
        %v627 = vpop.permute.xlu0 %626
        %v629 = vmul.f32 %v622, %v617
        %v630 = vmul.f32 %v627, %v618
        %v631 = vpack.c.bf16 %v601, %v599
        %v632 = vld [vmem:[%s413] sm:$0xf]
        %v633 = vld [vmem:[%s413 + $0x4] sm:$0xf]
        %v636 = vunpack.c.l.b16 %v632
        %v637 = vunpack.c.l.b16 %v633
        %v638 = vpack.c.b16 %v637, %v636
        %v641 = vsel %vm571, %v631, 0
        %643 = vmatprep.subr.bf16.mxu0 0
        %644 = vmatpush1.bf16.msra.mxu0 %v638
        %645 = vmatprep.subr.bf16.mxu0 0
        %646 = vmatpush1.bf16.msra.mxu0 0
        %647 = vmatprep.subr.bf16.mxu0 0
        %648 = vmatpush1.bf16.msra.mxu0 0
        %649 = vmatprep.subr.bf16.mxu0 0
        %650 = vmatpush1.bf16.msra.mxu0 0
        %651 = vmatprep.subr.bf16.mxu0 0
        %652 = vmatpush1.bf16.msra.mxu0 0
        %653 = vmatprep.subr.bf16.mxu0 0
        %654 = vmatpush1.bf16.msra.mxu0 0
        %655 = vmatprep.subr.bf16.mxu0 0
        %656 = vmatpush1.bf16.msra.mxu0 0
        %657 = vmatprep.subr.bf16.mxu0 0
        %658 = vmatpush1.bf16.msra.mxu0 0
        %659 = vmatprep.subr.bf16.mxu0 0
        %660 = vmatpush1.bf16.msra.mxu0 0
        %661 = vmatprep.subr.bf16.mxu0 0
        %662 = vmatpush1.bf16.msra.mxu0 0
        %663 = vmatprep.subr.bf16.mxu0 0
        %664 = vmatpush1.bf16.msra.mxu0 0
        %665 = vmatprep.subr.bf16.mxu0 0
        %666 = vmatpush1.bf16.msra.mxu0 0
        %667 = vmatprep.subr.bf16.mxu0 0
        %668 = vmatpush1.bf16.msra.mxu0 0
        %669 = vmatprep.subr.bf16.mxu0 0
        %670 = vmatpush1.bf16.msra.mxu0 0
        %671 = vmatprep.subr.bf16.mxu0 0
        %672 = vmatpush1.bf16.msra.mxu0 0
        %673 = vmatprep.subr.bf16.mxu0 0
        %674 = vmatpush1.bf16.msra.mxu0 0
        %675 = vmatprep.mubr.bf16.mxu0 0
        %676 = vmatmul.mubr.bf16.gmra.mrb[0].mxu0 %v641
        %v677 = vpop.f32.mrb[0].mxu0
        %v678 = vadd.f32 0.0, %v677
        %v679 = vpop.f32.mrb[0].mxu0
        %v680 = vpop.f32.mrb[0].mxu0
        %v681 = vadd.f32 0.0, %v680
        %v682 = vpop.f32.mrb[0].mxu0
        %683 = vdwg.mxu0
        %v684 = vadd.f32 %v629, %v678
        %v685 = vadd.f32 %v630, %v681
        %686 = vst.msk [vmem:[#allocation4] sm:$0xff] %vm521, %v684
        %687 = vst.msk [vmem:[#allocation4 + $0x8] sm:$0xff] %vm521, %v685
        %688 = vst.msk [vmem:[#allocation2] sm:$0xff] %vm614, %v578
        %689 = vst.msk [vmem:[#allocation2 + $0x8] sm:$0xff] %vm614, %v579
        %v690 = vld [vmem:[%s406] sm:$0xf]
        %v691 = vld [vmem:[%s406 + $0x4] sm:$0xf]
        %693 = vrot.lane.b32.xlu0 %v507, 64
        %v694 = vpop.permute.xlu0 %693
        %v697 = vunpack.c.l.b16 %v690
        %v698 = vunpack.c.l.b16 %v691
        %v699 = vpack.c.b16 %v698, %v697
        %700 = vrot.lane.b32.xlu0 %v699, 64
        %v701 = vpop.permute.xlu0 %700
        %v703 = vsel %vm521, %v694, 0
        %v706 = vsel %vm521, %v701, 0
        %708 = vmatprep.subr.bf16.mxu0 0
        %709 = vmatpush1.bf16.xpose.msra.mxu0 %v706
        %710 = vmatprep.subr.bf16.mxu0 0
        %711 = vmatpush1.bf16.xpose.msra.mxu0 0
        %712 = vmatprep.subr.bf16.mxu0 0
        %713 = vmatpush1.bf16.xpose.msra.mxu0 0
        %714 = vmatprep.subr.bf16.mxu0 0
        %715 = vmatpush1.bf16.xpose.msra.mxu0 0
        %716 = vmatprep.subr.bf16.mxu0 0
        %717 = vmatpush1.bf16.xpose.msra.mxu0 0
        %718 = vmatprep.subr.bf16.mxu0 0
        %719 = vmatpush1.bf16.xpose.msra.mxu0 0
        %720 = vmatprep.subr.bf16.mxu0 0
        %721 = vmatpush1.bf16.xpose.msra.mxu0 0
        %722 = vmatprep.subr.bf16.mxu0 0
        %723 = vmatpush1.bf16.xpose.msra.mxu0 0
        %724 = vmatprep.subr.bf16.mxu0 0
        %725 = vmatpush1.bf16.xpose.msra.mxu0 0
        %726 = vmatprep.subr.bf16.mxu0 0
        %727 = vmatpush1.bf16.xpose.msra.mxu0 0
        %728 = vmatprep.subr.bf16.mxu0 0
        %729 = vmatpush1.bf16.xpose.msra.mxu0 0
        %730 = vmatprep.subr.bf16.mxu0 0
        %731 = vmatpush1.bf16.xpose.msra.mxu0 0
        %732 = vmatprep.subr.bf16.mxu0 0
        %733 = vmatpush1.bf16.xpose.msra.mxu0 0
        %734 = vmatprep.subr.bf16.mxu0 0
        %735 = vmatpush1.bf16.xpose.msra.mxu0 0
        %736 = vmatprep.subr.bf16.mxu0 0
        %737 = vmatpush1.bf16.xpose.msra.mxu0 0
        %738 = vmatprep.subr.bf16.mxu0 0
        %739 = vmatpush1.bf16.xpose.msra.mxu0 0
        %740 = vmatprep.mubr.bf16.mxu0 0
        %741 = vmatmul.mubr.bf16.gmra.mrb[0].mxu0 %v703
        %v742 = vpop.f32.mrb[0].mxu0
        %v743 = vadd.f32 %v514, %v742
        %v744 = vpop.f32.mrb[0].mxu0
        %v745 = vpop.f32.mrb[0].mxu0
        %v746 = vadd.f32 %v514, %v745
        %v747 = vpop.f32.mrb[0].mxu0
        %748 = vdwg.mxu0
        %s749 = scalar_lea.vmem [#allocation2], 16
        %v750 = vld [vmem:[%s749] sm:$0xff]
        %v751 = vld [vmem:[%s749 + $0x8] sm:$0xff]
        %v752 = vsel %vm571, %v743, -inf
        %753 = vmax.xlane.f32.xlu0 %v752
        %v754 = vpop.xlane.xlu0 %753
        %v755 = vsel %vm571, %v746, -inf
        %756 = vmax.xlane.f32.xlu0 %v755
        %v757 = vpop.xlane.xlu0 %756
        %v758 = vmax.f32 %v750, %v754
        %v759 = vmax.f32 %v751, %v757
        %v760 = vsub.f32 %v750, %v758
        %v761 = vsub.f32 %v751, %v759
        %v762 = vmul.f32 %v760, 1.442695
        %v763 = vpow.pop %v762
        %v764 = vmul.f32 %v761, 1.442695
        %v765 = vpow.pop %v764
        %767 = vset.pattern.permute.xlu0 0
        %768 = vperm.xlu0 %767, %v758
        %v769 = vpop.permute.xlu0 %768
        %772 = vset.pattern.permute.xlu0 0
        %773 = vperm.xlu0 %772, %v759
        %v774 = vpop.permute.xlu0 %773
        %v776 = vsub.f32 %v743, %v769
        %v777 = vsub.f32 %v746, %v774
        %v778 = vmul.f32 %v776, 1.442695
        %v779 = vpow.pop %v778
        %v780 = vmul.f32 %v777, 1.442695
        %v781 = vpow.pop %v780
        %s782 = scalar_lea.vmem [#allocation3], 16
        %v783 = vld [vmem:[%s782] sm:$0xff]
        %v784 = vld [vmem:[%s782 + $0x8] sm:$0xff]
        %v785 = vmul.f32 %v763, %v783
        %v786 = vmul.f32 %v765, %v784
        %v787 = vsel %vm571, %v779, 0.0
        %788 = vadd.xlane.f32.xlu0 %v787
        %v789 = vpop.xlane.xlu0 %788
        %v790 = vsel %vm571, %v781, 0.0
        %791 = vadd.xlane.f32.xlu0 %v790
        %v792 = vpop.xlane.xlu0 %791
        %v793 = vadd.f32 %v785, %v789
        %v794 = vadd.f32 %v786, %v792
        %795 = vst.msk [vmem:[%s782] sm:$0xff] %vm614, %v793
        %796 = vst.msk [vmem:[%s782 + $0x8] sm:$0xff] %vm614, %v794
        %s797 = scalar_lea.vmem [#allocation4], 16
        %v798 = vld [vmem:[%s797] sm:$0xff]
        %v799 = vld [vmem:[%s797 + $0x8] sm:$0xff]
        %801 = vset.pattern.permute.xlu0 0
        %802 = vperm.xlu0 %801, %v763
        %v803 = vpop.permute.xlu0 %802
        %806 = vset.pattern.permute.xlu0 0
        %807 = vperm.xlu0 %806, %v765
        %v808 = vpop.permute.xlu0 %807
        %v810 = vmul.f32 %v803, %v798
        %v811 = vmul.f32 %v808, %v799
        %v812 = vpack.c.bf16 %v781, %v779
        %v813 = vld [vmem:[%s413] sm:$0xf]
        %v814 = vld [vmem:[%s413 + $0x4] sm:$0xf]
        %v817 = vunpack.c.l.b16 %v813
        %v818 = vunpack.c.l.b16 %v814
        %v819 = vpack.c.b16 %v818, %v817
        %820 = vrot.lane.b32.xlu0 %v819, 64
        %v821 = vpop.permute.xlu0 %820
        %v824 = vsel %vm571, %v812, 0
        %826 = vmatprep.subr.bf16.mxu0 0
        %827 = vmatpush1.bf16.msra.mxu0 %v821
        %828 = vmatprep.subr.bf16.mxu0 0
        %829 = vmatpush1.bf16.msra.mxu0 0
        %830 = vmatprep.subr.bf16.mxu0 0
        %831 = vmatpush1.bf16.msra.mxu0 0
        %832 = vmatprep.subr.bf16.mxu0 0
        %833 = vmatpush1.bf16.msra.mxu0 0
        %834 = vmatprep.subr.bf16.mxu0 0
        %835 = vmatpush1.bf16.msra.mxu0 0
        %836 = vmatprep.subr.bf16.mxu0 0
        %837 = vmatpush1.bf16.msra.mxu0 0
        %838 = vmatprep.subr.bf16.mxu0 0
        %839 = vmatpush1.bf16.msra.mxu0 0
        %840 = vmatprep.subr.bf16.mxu0 0
        %841 = vmatpush1.bf16.msra.mxu0 0
        %842 = vmatprep.subr.bf16.mxu0 0
        %843 = vmatpush1.bf16.msra.mxu0 0
        %844 = vmatprep.subr.bf16.mxu0 0
        %845 = vmatpush1.bf16.msra.mxu0 0
        %846 = vmatprep.subr.bf16.mxu0 0
        %847 = vmatpush1.bf16.msra.mxu0 0
        %848 = vmatprep.subr.bf16.mxu0 0
        %849 = vmatpush1.bf16.msra.mxu0 0
        %850 = vmatprep.subr.bf16.mxu0 0
        %851 = vmatpush1.bf16.msra.mxu0 0
        %852 = vmatprep.subr.bf16.mxu0 0
        %853 = vmatpush1.bf16.msra.mxu0 0
        %854 = vmatprep.subr.bf16.mxu0 0
        %855 = vmatpush1.bf16.msra.mxu0 0
        %856 = vmatprep.subr.bf16.mxu0 0
        %857 = vmatpush1.bf16.msra.mxu0 0
        %858 = vmatprep.mubr.bf16.mxu0 0
        %859 = vmatmul.mubr.bf16.gmra.mrb[0].mxu0 %v824
        %v860 = vpop.f32.mrb[0].mxu0
        %v861 = vadd.f32 0.0, %v860
        %v862 = vpop.f32.mrb[0].mxu0
        %v863 = vpop.f32.mrb[0].mxu0
        %v864 = vadd.f32 0.0, %v863
        %v865 = vpop.f32.mrb[0].mxu0
        %866 = vdwg.mxu0
        %v867 = vadd.f32 %v810, %v861
        %v868 = vadd.f32 %v811, %v864
        %869 = vst.msk [vmem:[%s797] sm:$0xff] %vm521, %v867
        %870 = vst.msk [vmem:[%s797 + $0x8] sm:$0xff] %vm521, %v868
        %871 = vst.msk [vmem:[%s749] sm:$0xff] %vm614, %v758
        %872 = vst.msk [vmem:[%s749 + $0x8] sm:$0xff] %vm614, %v759
        // Predicated region
        $region164: #{bert_token_classifier_forward.19} parent=146 // pred_check
          %p873 = pneg %p482
        $region165: #{bert_token_classifier_forward.19} parent=146 // pred_check_branch
          %875 = sbr.rel (%p873) target = $region167
        $region166: #{bert_token_classifier_forward.19} parent=146 // pred_region
          %v876 = vld [vmem:[#allocation4] sm:$0xff]
          %v877 = vld [vmem:[#allocation4 + $0x8] sm:$0xff]
          %v878 = vld [vmem:[#allocation3] sm:$0xff]
          %v879 = vld [vmem:[#allocation3 + $0x8] sm:$0xff]
          %881 = vset.pattern.permute.xlu0 0
          %882 = vperm.xlu0 %881, %v878
          %v883 = vpop.permute.xlu0 %882
          %886 = vset.pattern.permute.xlu0 0
          %887 = vperm.xlu0 %886, %v879
          %v888 = vpop.permute.xlu0 %887
          %v890 = vrcp.pop %v883
          %v891 = vmul.f32 %v876, %v890
          %v892 = vrcp.pop %v888
          %v893 = vmul.f32 %v877, %v892
          %v894 = vld [vmem:[%s797] sm:$0xff]
          %v895 = vld [vmem:[%s797 + $0x8] sm:$0xff]
          %v896 = vld [vmem:[%s782] sm:$0xff]
          %v897 = vld [vmem:[%s782 + $0x8] sm:$0xff]
          %899 = vset.pattern.permute.xlu0 0
          %900 = vperm.xlu0 %899, %v896
          %v901 = vpop.permute.xlu0 %900
          %904 = vset.pattern.permute.xlu0 0
          %905 = vperm.xlu0 %904, %v897
          %v906 = vpop.permute.xlu0 %905
          %v908 = vrcp.pop %v901
          %v909 = vmul.f32 %v894, %v908
          %v910 = vrcp.pop %v906
          %v911 = vmul.f32 %v895, %v910
          %914 = vrot.lane.b32.xlu0 %v909, 64
          %v915 = vpop.permute.xlu0 %914
          %916 = vrot.lane.b32.xlu0 %v911, 64
          %v917 = vpop.permute.xlu0 %916
          %v920 = vsel %vm521, %v891, %v915
          %v921 = vsel %vm521, %v893, %v917
          %v922 = vpack.c.bf16 %v921, %v920
          %v924 = vunpack.c.l.b16 %v922
          %v925 = vunpack.c.h.b16 %v922
          %v926 = vpack.c.b16 %v924, %v924
          %v927 = vpack.c.b16 %v925, %v925
          %930 = vst [vmem:[%s479] sm:$0xf] %v926
          %931 = vst [vmem:[%s479 + $0x4] sm:$0xf] %v927
        $region167: #{bert_token_classifier_forward.19} parent=146 // pred_fallthru
          _
        %s932 = smul.u32 2, %s23
        %p933 = scmp.lt.s32.totalorder %s21, 1
        %s934 = scalar_select %p933, %s21, 1
        %p935 = scmp.lt.s32.totalorder %s932, 1
        %s936 = scalar_select %p935, %s932, 1
        %p937 = scmp.lt.s32.totalorder %s22, 0
        %s938 = scalar_select %p937, %s22, 0
        %s939 = sadd.s32 %s938, %s936
        %s940 = smul.addr %s934, 2
        %s941 = sadd.s32 %s939, %s940
        %s942 = smul.addr %s941, 4
        %s943 = scalar_lea.vmem %s4, %s942
        // Predicated region
        $region168: #{bert_token_classifier_forward.19} parent=146 // pred_check
          %p944 = pneg %p185
        $region169: #{bert_token_classifier_forward.19} parent=146 // pred_check_branch
          %946 = sbr.rel (%p944) target = $region171
        $region170: #{bert_token_classifier_forward.19} parent=146 // pred_region
          %s947 = smul.u32 2, %s23
        $region171: #{bert_token_classifier_forward.19} parent=146 // pred_fallthru
          _
      $region147: #{bert_token_classifier_forward.19} parent=5 // pred_fallthru
        _
      %p948 = scmp.le.s32.totalorder 2, %s10
      // Predicated region
      $region172: #{bert_token_classifier_forward.19} parent=5 // pred_check
        %p949 = pneg %p948
      $region173: #{bert_token_classifier_forward.19} parent=5 // pred_check_branch
        %951 = sbr.rel (%p949) target = $region175
      $region174: #{bert_token_classifier_forward.19} parent=5 // pred_region
        %s952 = ssub.s32 %s10, 2
        // Predicated region
        $region176: #{bert_token_classifier_forward.19} parent=174 // pred_check
          %p953 = pneg %p191
        $region177: #{bert_token_classifier_forward.19} parent=174 // pred_check_branch
          %955 = sbr.rel (%p953) target = $region179
        $region178: #{bert_token_classifier_forward.19} parent=174 // pred_region
          %s956 = smul.u32 2, %s27
          %p957 = scmp.lt.s32.totalorder %s25, 1
          %s958 = scalar_select %p957, %s25, 1
          %p959 = scmp.lt.s32.totalorder %s956, 1
          %s960 = scalar_select %p959, %s956, 1
          %p961 = scmp.lt.s32.totalorder %s26, 0
          %s962 = scalar_select %p961, %s26, 0
          %s963 = sadd.s32 %s962, %s960
          %s964 = smul.addr %s958, 2
          %s965 = sadd.s32 %s963, %s964
          %s966 = smul.addr %s965, 4
          %s967 = scalar_lea.vmem %s4, %s966
        $region179: #{bert_token_classifier_forward.19} parent=174 // pred_fallthru
          _
      $region175: #{bert_token_classifier_forward.19} parent=5 // pred_fallthru
        _
    $region6: #{bert_token_classifier_forward.19} parent=1 // loop_footer
      %s14 = sadd.s32 1, %s10
    $region7: #{bert_token_classifier_forward.19} parent=1 // loop_footer_branch
      %9 = sbr.rel target = $region3
    $region8: #{bert_token_classifier_forward.19} parent=1 // loop_exit
      _

// kernel: bert_token_classifier_forward.21
$region0: #{bert_token_classifier_forward.21}
  #allocation0 [shape = 'u32[]', space=smem, size = 0x4, offset = 0x4, fixed_abs, tag = 'smem constant byte address 0x4 - core index']
  #allocation1 [shape = 'u32[144,128]{1,0:T(1,128)}', space=vmem, size = 0x12000, scoped, tag = 'internal scratch']
  %s0 = inlined_call_operand.vmem [shape: bf16[32,128], index: 0, kind: input, shape index: {}]
  %s1 = inlined_call_operand.vmem [shape: bf16[32,128], index: 1, kind: input, shape index: {}]
  %s2 = inlined_call_operand.vmem [shape: f32[1,128], index: 2, kind: input, shape index: {}]
  %s3 = inlined_call_operand.vmem [shape: f32[1,128], index: 3, kind: input, shape index: {}]
  %s4 = inlined_call_operand.vmem [shape: bf16[32,128], index: 4, kind: output, shape index: {}]
  %s5 = sld [smem:[#allocation0]]
  $region26: #{bert_token_classifier_forward.21} parent=0
    _
  %s7 = ssub.s32 1, %s5
  %s8 = scalar_select 0, %s7, %s5
  // Predicated region
  $region2: #{bert_token_classifier_forward.21} parent=0 // pred_check
    _
  $region3: #{bert_token_classifier_forward.21} parent=0 // pred_check_branch
    %10 = sbr.rel (0) target = $region5
  $region4: #{bert_token_classifier_forward.21} parent=0 // pred_region
    _
  $region5: #{bert_token_classifier_forward.21} parent=0 // pred_fallthru
    _
  // Predicated region
  $region6: #{bert_token_classifier_forward.21} parent=0 // pred_check
    _
  $region7: #{bert_token_classifier_forward.21} parent=0 // pred_check_branch
    %12 = sbr.rel (0) target = $region9
  $region8: #{bert_token_classifier_forward.21} parent=0 // pred_region
    _
  $region9: #{bert_token_classifier_forward.21} parent=0 // pred_fallthru
    _
  // Predicated region
  $region10: #{bert_token_classifier_forward.21} parent=0 // pred_check
    _
  $region11: #{bert_token_classifier_forward.21} parent=0 // pred_check_branch
    %14 = sbr.rel (0) target = $region13
  $region12: #{bert_token_classifier_forward.21} parent=0 // pred_region
    _
  $region13: #{bert_token_classifier_forward.21} parent=0 // pred_fallthru
    _
  // Predicated region
  $region14: #{bert_token_classifier_forward.21} parent=0 // pred_check
    _
  $region15: #{bert_token_classifier_forward.21} parent=0 // pred_check_branch
    %16 = sbr.rel (0) target = $region17
  $region16: #{bert_token_classifier_forward.21} parent=0 // pred_region
    _
  $region17: #{bert_token_classifier_forward.21} parent=0 // pred_fallthru
    _
  %v17 = vld [vmem:[%s0] sm:$0xf]
  %v18 = vld [vmem:[%s0 + $0x4] sm:$0xf]
  %v19 = vld [vmem:[%s0 + $0x8] sm:$0xf]
  %v20 = vld [vmem:[%s0 + $0xc] sm:$0xf]
  %v21 = vunpack.c.l.bf16 %v17
  %v22 = vunpack.c.l.bf16 %v18
  %v23 = vunpack.c.l.bf16 %v19
  %v24 = vunpack.c.l.bf16 %v20
  %v25 = vld [vmem:[%s1] sm:$0xf]
  %v26 = vld [vmem:[%s1 + $0x4] sm:$0xf]
  %v27 = vld [vmem:[%s1 + $0x8] sm:$0xf]
  %v28 = vld [vmem:[%s1 + $0xc] sm:$0xf]
  %v29 = vunpack.c.l.bf16 %v25
  %v30 = vunpack.c.l.bf16 %v26
  %v31 = vunpack.c.l.bf16 %v27
  %v32 = vunpack.c.l.bf16 %v28
  %v33 = vadd.f32 %v21, %v29
  %v34 = vadd.f32 %v22, %v30
  %v35 = vadd.f32 %v23, %v31
  %v36 = vadd.f32 %v24, %v32
  %37 = vadd.xlane.f32.xlu0 %v33
  %v38 = vpop.xlane.xlu0 %37
  %39 = vadd.xlane.f32.xlu0 %v34
  %v40 = vpop.xlane.xlu0 %39
  %41 = vadd.xlane.f32.xlu0 %v35
  %v42 = vpop.xlane.xlu0 %41
  %43 = vadd.xlane.f32.xlu0 %v36
  %v44 = vpop.xlane.xlu0 %43
  %v45 = vrcp.pop 128.0
  %v46 = vmul.f32 %v38, %v45
  %v47 = vmul.f32 %v40, %v45
  %v48 = vmul.f32 %v42, %v45
  %v49 = vmul.f32 %v44, %v45
  %v50 = vsub.f32 %v33, %v46
  %v51 = vsub.f32 %v34, %v47
  %v52 = vsub.f32 %v35, %v48
  %v53 = vsub.f32 %v36, %v49
  %v54 = vmul.f32 %v50, %v50
  %v55 = vmul.f32 %v51, %v51
  %v56 = vmul.f32 %v52, %v52
  %v57 = vmul.f32 %v53, %v53
  %58 = vadd.xlane.f32.xlu0 %v54
  %v59 = vpop.xlane.xlu0 %58
  %60 = vadd.xlane.f32.xlu0 %v55
  %v61 = vpop.xlane.xlu0 %60
  %62 = vadd.xlane.f32.xlu0 %v56
  %v63 = vpop.xlane.xlu0 %62
  %64 = vadd.xlane.f32.xlu0 %v57
  %v65 = vpop.xlane.xlu0 %64
  %v66 = vmul.f32 %v59, %v45
  %v67 = vmul.f32 %v61, %v45
  %v68 = vmul.f32 %v63, %v45
  %v69 = vmul.f32 %v65, %v45
  %v70 = vadd.f32 %v66, 1e-12
  %v71 = vadd.f32 %v67, 1e-12
  %v72 = vadd.f32 %v68, 1e-12
  %v73 = vadd.f32 %v69, 1e-12
  %v74 = vrsqrt.pop %v70
  %v75 = vrsqrt.pop %v71
  %v76 = vrsqrt.pop %v72
  %v77 = vrsqrt.pop %v73
  %v78 = vmul.f32 %v50, %v74
  %v79 = vmul.f32 %v51, %v75
  %v80 = vmul.f32 %v52, %v76
  %v81 = vmul.f32 %v53, %v77
  %v82 = vld [vmem:[%s2] sm:$0x1]
  %v84 = vlaneseq
  %v85 = vshrl.u32 %v84, 7
  %v86 = vsub.s32 0, %v85
  %v87 = vrot.slane %v82, %v86
  %v89 = vmul.f32 %v78, %v87
  %v90 = vmul.f32 %v79, %v87
  %v91 = vmul.f32 %v80, %v87
  %v92 = vmul.f32 %v81, %v87
  %v93 = vld [vmem:[%s3] sm:$0x1]
  %v95 = vlaneseq
  %v96 = vshrl.u32 %v95, 7
  %v97 = vsub.s32 0, %v96
  %v98 = vrot.slane %v93, %v97
  %v100 = vadd.f32 %v89, %v98
  %v101 = vadd.f32 %v90, %v98
  %v102 = vadd.f32 %v91, %v98
  %v103 = vadd.f32 %v92, %v98
  %v104 = vpack.c.bf16 %v101, %v100
  %v105 = vpack.c.bf16 %v103, %v102
  %v108 = vunpack.c.l.b16 %v104
  %v109 = vunpack.c.h.b16 %v104
  %v110 = vunpack.c.l.b16 %v105
  %v111 = vunpack.c.h.b16 %v105
  %v112 = vpack.c.b16 %v108, %v108
  %v113 = vpack.c.b16 %v109, %v109
  %v114 = vpack.c.b16 %v110, %v110
  %v115 = vpack.c.b16 %v111, %v111
  %120 = vst [vmem:[%s4] sm:$0xf] %v112
  %121 = vst [vmem:[%s4 + $0x4] sm:$0xf] %v113
  %122 = vst [vmem:[%s4 + $0x8] sm:$0xf] %v114
  %123 = vst [vmem:[%s4 + $0xc] sm:$0xf] %v115
  // Predicated region
  $region18: #{bert_token_classifier_forward.21} parent=0 // pred_check
    _
  $region19: #{bert_token_classifier_forward.21} parent=0 // pred_check_branch
    %125 = sbr.rel (0) target = $region21
  $region20: #{bert_token_classifier_forward.21} parent=0 // pred_region
    _
  $region21: #{bert_token_classifier_forward.21} parent=0 // pred_fallthru
    _
  // Predicated region
  $region22: #{bert_token_classifier_forward.21} parent=0 // pred_check
    _
  $region23: #{bert_token_classifier_forward.21} parent=0 // pred_check_branch
    %127 = sbr.rel (0) target = $region25
  $region24: #{bert_token_classifier_forward.21} parent=0 // pred_region
    _
  $region25: #{bert_token_classifier_forward.21} parent=0 // pred_fallthru
    _

// kernel: bert_token_classifier_forward.23
$region0: #{bert_token_classifier_forward.23}
  #allocation0 [shape = 'u32[]', space=smem, size = 0x4, offset = 0x4, fixed_abs, tag = 'smem constant byte address 0x4 - core index']
  #allocation1 [shape = 'u32[144,128]{1,0:T(1,128)}', space=vmem, size = 0x12000, scoped, tag = 'internal scratch']
  %s0 = inlined_call_operand.vmem [shape: bf16[32,256], index: 0, kind: input, shape index: {}]
  %s1 = inlined_call_operand.vmem [shape: bf16[256,128], index: 1, kind: input, shape index: {}]
  %s2 = inlined_call_operand.vmem [shape: f32[1,128], index: 2, kind: input, shape index: {}]
  %s3 = inlined_call_operand.vmem [shape: bf16[32,128], index: 3, kind: output, shape index: {}]
  %s4 = sld [smem:[#allocation0]]
  $region22: #{bert_token_classifier_forward.23} parent=0
    _
  %s6 = ssub.s32 1, %s4
  %s7 = scalar_select 0, %s6, %s4
  // Predicated region
  $region2: #{bert_token_classifier_forward.23} parent=0 // pred_check
    _
  $region3: #{bert_token_classifier_forward.23} parent=0 // pred_check_branch
    %9 = sbr.rel (0) target = $region5
  $region4: #{bert_token_classifier_forward.23} parent=0 // pred_region
    _
  $region5: #{bert_token_classifier_forward.23} parent=0 // pred_fallthru
    _
  // Predicated region
  $region6: #{bert_token_classifier_forward.23} parent=0 // pred_check
    _
  $region7: #{bert_token_classifier_forward.23} parent=0 // pred_check_branch
    %11 = sbr.rel (0) target = $region9
  $region8: #{bert_token_classifier_forward.23} parent=0 // pred_region
    _
  $region9: #{bert_token_classifier_forward.23} parent=0 // pred_fallthru
    _
  // Predicated region
  $region10: #{bert_token_classifier_forward.23} parent=0 // pred_check
    _
  $region11: #{bert_token_classifier_forward.23} parent=0 // pred_check_branch
    %13 = sbr.rel (0) target = $region13
  $region12: #{bert_token_classifier_forward.23} parent=0 // pred_region
    _
  $region13: #{bert_token_classifier_forward.23} parent=0 // pred_fallthru
    _
  %v15 = vld [vmem:[%s0] sm:$0xff]
  %v16 = vld [vmem:[%s0 + $0x8] sm:$0xff]
  %v17 = vld [vmem:[%s0 + $0x10] sm:$0xff]
  %v18 = vld [vmem:[%s0 + $0x18] sm:$0xff]
  %v19 = vld [vmem:[%s1] sm:$0xf]
  %v20 = vld [vmem:[%s1 + $0x4] sm:$0xf]
  %v21 = vld [vmem:[%s1 + $0x8] sm:$0xf]
  %v22 = vld [vmem:[%s1 + $0xc] sm:$0xf]
  %v23 = vld [vmem:[%s1 + $0x10] sm:$0xf]
  %v24 = vld [vmem:[%s1 + $0x14] sm:$0xf]
  %v25 = vld [vmem:[%s1 + $0x18] sm:$0xf]
  %v26 = vld [vmem:[%s1 + $0x1c] sm:$0xf]
  %v27 = vld [vmem:[%s1 + $0x20] sm:$0xf]
  %v28 = vld [vmem:[%s1 + $0x24] sm:$0xf]
  %v29 = vld [vmem:[%s1 + $0x28] sm:$0xf]
  %v30 = vld [vmem:[%s1 + $0x2c] sm:$0xf]
  %v31 = vld [vmem:[%s1 + $0x30] sm:$0xf]
  %v32 = vld [vmem:[%s1 + $0x34] sm:$0xf]
  %v33 = vld [vmem:[%s1 + $0x38] sm:$0xf]
  %v34 = vld [vmem:[%s1 + $0x3c] sm:$0xf]
  %v35 = vld [vmem:[%s1 + $0x40] sm:$0xf]
  %v36 = vld [vmem:[%s1 + $0x44] sm:$0xf]
  %v37 = vld [vmem:[%s1 + $0x48] sm:$0xf]
  %v38 = vld [vmem:[%s1 + $0x4c] sm:$0xf]
  %v39 = vld [vmem:[%s1 + $0x50] sm:$0xf]
  %v40 = vld [vmem:[%s1 + $0x54] sm:$0xf]
  %v41 = vld [vmem:[%s1 + $0x58] sm:$0xf]
  %v42 = vld [vmem:[%s1 + $0x5c] sm:$0xf]
  %v43 = vld [vmem:[%s1 + $0x60] sm:$0xf]
  %v44 = vld [vmem:[%s1 + $0x64] sm:$0xf]
  %v45 = vld [vmem:[%s1 + $0x68] sm:$0xf]
  %v46 = vld [vmem:[%s1 + $0x6c] sm:$0xf]
  %v47 = vld [vmem:[%s1 + $0x70] sm:$0xf]
  %v48 = vld [vmem:[%s1 + $0x74] sm:$0xf]
  %v49 = vld [vmem:[%s1 + $0x78] sm:$0xf]
  %v50 = vld [vmem:[%s1 + $0x7c] sm:$0xf]
  %v51 = vld [vmem:[%s2] sm:$0x1]
  %v53 = vlaneseq
  %v54 = vshrl.u32 %v53, 7
  %v55 = vsub.s32 0, %v54
  %v56 = vrot.slane %v51, %v55
  %v62 = vunpack.c.l.b16 %v15
  %v63 = vunpack.c.h.b16 %v15
  %v64 = vunpack.c.l.b16 %v16
  %v65 = vunpack.c.h.b16 %v16
  %v66 = vunpack.c.l.b16 %v17
  %v67 = vunpack.c.h.b16 %v17
  %v68 = vunpack.c.l.b16 %v18
  %v69 = vunpack.c.h.b16 %v18
  %v70 = vpack.c.b16 %v64, %v62
  %v71 = vpack.c.b16 %v65, %v63
  %v72 = vpack.c.b16 %v68, %v66
  %v73 = vpack.c.b16 %v69, %v67
  %v110 = vunpack.c.l.b16 %v19
  %v111 = vunpack.c.l.b16 %v20
  %v112 = vunpack.c.l.b16 %v21
  %v113 = vunpack.c.l.b16 %v22
  %v114 = vunpack.c.l.b16 %v23
  %v115 = vunpack.c.l.b16 %v24
  %v116 = vunpack.c.l.b16 %v25
  %v117 = vunpack.c.l.b16 %v26
  %v118 = vunpack.c.l.b16 %v27
  %v119 = vunpack.c.l.b16 %v28
  %v120 = vunpack.c.l.b16 %v29
  %v121 = vunpack.c.l.b16 %v30
  %v122 = vunpack.c.l.b16 %v31
  %v123 = vunpack.c.l.b16 %v32
  %v124 = vunpack.c.l.b16 %v33
  %v125 = vunpack.c.l.b16 %v34
  %v126 = vunpack.c.l.b16 %v35
  %v127 = vunpack.c.l.b16 %v36
  %v128 = vunpack.c.l.b16 %v37
  %v129 = vunpack.c.l.b16 %v38
  %v130 = vunpack.c.l.b16 %v39
  %v131 = vunpack.c.l.b16 %v40
  %v132 = vunpack.c.l.b16 %v41
  %v133 = vunpack.c.l.b16 %v42
  %v134 = vunpack.c.l.b16 %v43
  %v135 = vunpack.c.l.b16 %v44
  %v136 = vunpack.c.l.b16 %v45
  %v137 = vunpack.c.l.b16 %v46
  %v138 = vunpack.c.l.b16 %v47
  %v139 = vunpack.c.l.b16 %v48
  %v140 = vunpack.c.l.b16 %v49
  %v141 = vunpack.c.l.b16 %v50
  %v142 = vpack.c.b16 %v111, %v110
  %v143 = vpack.c.b16 %v113, %v112
  %v144 = vpack.c.b16 %v115, %v114
  %v145 = vpack.c.b16 %v117, %v116
  %v146 = vpack.c.b16 %v119, %v118
  %v147 = vpack.c.b16 %v121, %v120
  %v148 = vpack.c.b16 %v123, %v122
  %v149 = vpack.c.b16 %v125, %v124
  %v150 = vpack.c.b16 %v127, %v126
  %v151 = vpack.c.b16 %v129, %v128
  %v152 = vpack.c.b16 %v131, %v130
  %v153 = vpack.c.b16 %v133, %v132
  %v154 = vpack.c.b16 %v135, %v134
  %v155 = vpack.c.b16 %v137, %v136
  %v156 = vpack.c.b16 %v139, %v138
  %v157 = vpack.c.b16 %v141, %v140
  %174 = vmatprep.subr.bf16.mxu0 0
  %175 = vmatpush1.bf16.msra.mxu0 %v142
  %176 = vmatprep.subr.bf16.mxu0 0
  %177 = vmatpush1.bf16.msra.mxu0 %v143
  %178 = vmatprep.subr.bf16.mxu0 0
  %179 = vmatpush1.bf16.msra.mxu0 %v144
  %180 = vmatprep.subr.bf16.mxu0 0
  %181 = vmatpush1.bf16.msra.mxu0 %v145
  %182 = vmatprep.subr.bf16.mxu0 0
  %183 = vmatpush1.bf16.msra.mxu0 %v146
  %184 = vmatprep.subr.bf16.mxu0 0
  %185 = vmatpush1.bf16.msra.mxu0 %v147
  %186 = vmatprep.subr.bf16.mxu0 0
  %187 = vmatpush1.bf16.msra.mxu0 %v148
  %188 = vmatprep.subr.bf16.mxu0 0
  %189 = vmatpush1.bf16.msra.mxu0 %v149
  %190 = vmatprep.subr.bf16.mxu0 0
  %191 = vmatpush1.bf16.msra.mxu0 %v150
  %192 = vmatprep.subr.bf16.mxu0 0
  %193 = vmatpush1.bf16.msra.mxu0 %v151
  %194 = vmatprep.subr.bf16.mxu0 0
  %195 = vmatpush1.bf16.msra.mxu0 %v152
  %196 = vmatprep.subr.bf16.mxu0 0
  %197 = vmatpush1.bf16.msra.mxu0 %v153
  %198 = vmatprep.subr.bf16.mxu0 0
  %199 = vmatpush1.bf16.msra.mxu0 %v154
  %200 = vmatprep.subr.bf16.mxu0 0
  %201 = vmatpush1.bf16.msra.mxu0 %v155
  %202 = vmatprep.subr.bf16.mxu0 0
  %203 = vmatpush1.bf16.msra.mxu0 %v156
  %204 = vmatprep.subr.bf16.mxu0 0
  %205 = vmatpush1.bf16.msra.mxu0 %v157
  %206 = vmatprep.mubr.bf16.mxu0 %v71
  %207 = vmatmul.mubr.bf16.gmra.mrb[0].mxu0 %v70
  %v208 = vpop.f32.mrb[0].mxu0
  %v209 = vadd.f32 %v56, %v208
  %v210 = vpop.f32.mrb[0].mxu0
  %v211 = vpop.f32.mrb[0].mxu0
  %v212 = vadd.f32 %v56, %v211
  %v213 = vpop.f32.mrb[0].mxu0
  %214 = vmatprep.mubr.bf16.mxu0 %v73
  %215 = vmatmul.mubr.bf16.gmra.mrb[0].mxu0 %v72
  %v216 = vpop.f32.mrb[0].mxu0
  %v217 = vadd.f32 %v56, %v216
  %v218 = vpop.f32.mrb[0].mxu0
  %v219 = vpop.f32.mrb[0].mxu0
  %v220 = vadd.f32 %v56, %v219
  %v221 = vpop.f32.mrb[0].mxu0
  %222 = vdwg.mxu0
  %v223 = vpack.c.bf16 %v212, %v209
  %v224 = vpack.c.bf16 %v220, %v217
  %v227 = vunpack.c.l.b16 %v223
  %v228 = vunpack.c.h.b16 %v223
  %v229 = vunpack.c.l.b16 %v224
  %v230 = vunpack.c.h.b16 %v224
  %v231 = vpack.c.b16 %v227, %v227
  %v232 = vpack.c.b16 %v228, %v228
  %v233 = vpack.c.b16 %v229, %v229
  %v234 = vpack.c.b16 %v230, %v230
  %239 = vst [vmem:[%s3] sm:$0xf] %v231
  %240 = vst [vmem:[%s3 + $0x4] sm:$0xf] %v232
  %241 = vst [vmem:[%s3 + $0x8] sm:$0xf] %v233
  %242 = vst [vmem:[%s3 + $0xc] sm:$0xf] %v234
  // Predicated region
  $region14: #{bert_token_classifier_forward.23} parent=0 // pred_check
    _
  $region15: #{bert_token_classifier_forward.23} parent=0 // pred_check_branch
    %244 = sbr.rel (0) target = $region17
  $region16: #{bert_token_classifier_forward.23} parent=0 // pred_region
    _
  $region17: #{bert_token_classifier_forward.23} parent=0 // pred_fallthru
    _
  // Predicated region
  $region18: #{bert_token_classifier_forward.23} parent=0 // pred_check
    _
  $region19: #{bert_token_classifier_forward.23} parent=0 // pred_check_branch
    %246 = sbr.rel (0) target = $region21
  $region20: #{bert_token_classifier_forward.23} parent=0 // pred_region
    _
  $region21: #{bert_token_classifier_forward.23} parent=0 // pred_fallthru
    _

// kernel: bert_token_classifier_forward.22
$region0: #{bert_token_classifier_forward.22}
  #allocation0 [shape = 'u32[]', space=smem, size = 0x4, offset = 0x4, fixed_abs, tag = 'smem constant byte address 0x4 - core index']
  #allocation1 [shape = 'u32[144,128]{1,0:T(1,128)}', space=vmem, size = 0x12000, scoped, tag = 'internal scratch']
  %s0 = inlined_call_operand.vmem [shape: bf16[32,128], index: 0, kind: input, shape index: {}]
  %s1 = inlined_call_operand.vmem [shape: bf16[128,256], index: 1, kind: input, shape index: {}]
  %s2 = inlined_call_operand.vmem [shape: f32[1,256], index: 2, kind: input, shape index: {}]
  %s3 = inlined_call_operand.vmem [shape: bf16[32,256], index: 3, kind: output, shape index: {}]
  %s4 = sld [smem:[#allocation0]]
  $region22: #{bert_token_classifier_forward.22} parent=0
    _
  %s6 = ssub.s32 1, %s4
  %s7 = scalar_select 0, %s6, %s4
  // Predicated region
  $region2: #{bert_token_classifier_forward.22} parent=0 // pred_check
    _
  $region3: #{bert_token_classifier_forward.22} parent=0 // pred_check_branch
    %9 = sbr.rel (0) target = $region5
  $region4: #{bert_token_classifier_forward.22} parent=0 // pred_region
    _
  $region5: #{bert_token_classifier_forward.22} parent=0 // pred_fallthru
    _
  // Predicated region
  $region6: #{bert_token_classifier_forward.22} parent=0 // pred_check
    _
  $region7: #{bert_token_classifier_forward.22} parent=0 // pred_check_branch
    %11 = sbr.rel (0) target = $region9
  $region8: #{bert_token_classifier_forward.22} parent=0 // pred_region
    _
  $region9: #{bert_token_classifier_forward.22} parent=0 // pred_fallthru
    _
  // Predicated region
  $region10: #{bert_token_classifier_forward.22} parent=0 // pred_check
    _
  $region11: #{bert_token_classifier_forward.22} parent=0 // pred_check_branch
    %13 = sbr.rel (0) target = $region13
  $region12: #{bert_token_classifier_forward.22} parent=0 // pred_region
    _
  $region13: #{bert_token_classifier_forward.22} parent=0 // pred_fallthru
    _
  %v15 = vld [vmem:[%s0] sm:$0xf]
  %v16 = vld [vmem:[%s0 + $0x4] sm:$0xf]
  %v17 = vld [vmem:[%s0 + $0x8] sm:$0xf]
  %v18 = vld [vmem:[%s0 + $0xc] sm:$0xf]
  %v19 = vld [vmem:[%s1] sm:$0xff]
  %v20 = vld [vmem:[%s1 + $0x8] sm:$0xff]
  %v21 = vld [vmem:[%s1 + $0x10] sm:$0xff]
  %v22 = vld [vmem:[%s1 + $0x18] sm:$0xff]
  %v23 = vld [vmem:[%s1 + $0x20] sm:$0xff]
  %v24 = vld [vmem:[%s1 + $0x28] sm:$0xff]
  %v25 = vld [vmem:[%s1 + $0x30] sm:$0xff]
  %v26 = vld [vmem:[%s1 + $0x38] sm:$0xff]
  %v27 = vld [vmem:[%s1 + $0x40] sm:$0xff]
  %v28 = vld [vmem:[%s1 + $0x48] sm:$0xff]
  %v29 = vld [vmem:[%s1 + $0x50] sm:$0xff]
  %v30 = vld [vmem:[%s1 + $0x58] sm:$0xff]
  %v31 = vld [vmem:[%s1 + $0x60] sm:$0xff]
  %v32 = vld [vmem:[%s1 + $0x68] sm:$0xff]
  %v33 = vld [vmem:[%s1 + $0x70] sm:$0xff]
  %v34 = vld [vmem:[%s1 + $0x78] sm:$0xff]
  %v35 = vld [vmem:[%s2] sm:$0x3]
  %v37 = vlaneseq
  %v38 = vshrl.u32 %v37, 7
  %v39 = vsub.s32 0, %v38
  %v40 = vrot.slane %v35, %v39
  %v41 = vlaneseq
  %v42 = vshrl.u32 %v41, 7
  %v43 = vsub.s32 1, %v42
  %v44 = vrot.slane %v35, %v43
  %v51 = vunpack.c.l.b16 %v15
  %v52 = vunpack.c.l.b16 %v16
  %v53 = vunpack.c.l.b16 %v17
  %v54 = vunpack.c.l.b16 %v18
  %v55 = vpack.c.b16 %v52, %v51
  %v56 = vpack.c.b16 %v54, %v53
  %v75 = vunpack.c.l.b16 %v19
  %v76 = vunpack.c.h.b16 %v19
  %v77 = vunpack.c.l.b16 %v20
  %v78 = vunpack.c.h.b16 %v20
  %v79 = vunpack.c.l.b16 %v21
  %v80 = vunpack.c.h.b16 %v21
  %v81 = vunpack.c.l.b16 %v22
  %v82 = vunpack.c.h.b16 %v22
  %v83 = vunpack.c.l.b16 %v23
  %v84 = vunpack.c.h.b16 %v23
  %v85 = vunpack.c.l.b16 %v24
  %v86 = vunpack.c.h.b16 %v24
  %v87 = vunpack.c.l.b16 %v25
  %v88 = vunpack.c.h.b16 %v25
  %v89 = vunpack.c.l.b16 %v26
  %v90 = vunpack.c.h.b16 %v26
  %v91 = vunpack.c.l.b16 %v27
  %v92 = vunpack.c.h.b16 %v27
  %v93 = vunpack.c.l.b16 %v28
  %v94 = vunpack.c.h.b16 %v28
  %v95 = vunpack.c.l.b16 %v29
  %v96 = vunpack.c.h.b16 %v29
  %v97 = vunpack.c.l.b16 %v30
  %v98 = vunpack.c.h.b16 %v30
  %v99 = vunpack.c.l.b16 %v31
  %v100 = vunpack.c.h.b16 %v31
  %v101 = vunpack.c.l.b16 %v32
  %v102 = vunpack.c.h.b16 %v32
  %v103 = vunpack.c.l.b16 %v33
  %v104 = vunpack.c.h.b16 %v33
  %v105 = vunpack.c.l.b16 %v34
  %v106 = vunpack.c.h.b16 %v34
  %v107 = vpack.c.b16 %v77, %v75
  %v108 = vpack.c.b16 %v78, %v76
  %v109 = vpack.c.b16 %v81, %v79
  %v110 = vpack.c.b16 %v82, %v80
  %v111 = vpack.c.b16 %v85, %v83
  %v112 = vpack.c.b16 %v86, %v84
  %v113 = vpack.c.b16 %v89, %v87
  %v114 = vpack.c.b16 %v90, %v88
  %v115 = vpack.c.b16 %v93, %v91
  %v116 = vpack.c.b16 %v94, %v92
  %v117 = vpack.c.b16 %v97, %v95
  %v118 = vpack.c.b16 %v98, %v96
  %v119 = vpack.c.b16 %v101, %v99
  %v120 = vpack.c.b16 %v102, %v100
  %v121 = vpack.c.b16 %v105, %v103
  %v122 = vpack.c.b16 %v106, %v104
  %139 = vmatprep.subr.bf16.mxu0 %v108
  %140 = vmatpush1.bf16.msra.mxu0 %v107
  %141 = vmatprep.subr.bf16.mxu0 %v110
  %142 = vmatpush1.bf16.msra.mxu0 %v109
  %143 = vmatprep.subr.bf16.mxu0 %v112
  %144 = vmatpush1.bf16.msra.mxu0 %v111
  %145 = vmatprep.subr.bf16.mxu0 %v114
  %146 = vmatpush1.bf16.msra.mxu0 %v113
  %147 = vmatprep.subr.bf16.mxu0 %v116
  %148 = vmatpush1.bf16.msra.mxu0 %v115
  %149 = vmatprep.subr.bf16.mxu0 %v118
  %150 = vmatpush1.bf16.msra.mxu0 %v117
  %151 = vmatprep.subr.bf16.mxu0 %v120
  %152 = vmatpush1.bf16.msra.mxu0 %v119
  %153 = vmatprep.subr.bf16.mxu0 %v122
  %154 = vmatpush1.bf16.msra.mxu0 %v121
  %155 = vmatprep.subr.bf16.mxu0 0
  %156 = vmatpush1.bf16.msra.mxu0 0
  %157 = vmatprep.subr.bf16.mxu0 0
  %158 = vmatpush1.bf16.msra.mxu0 0
  %159 = vmatprep.subr.bf16.mxu0 0
  %160 = vmatpush1.bf16.msra.mxu0 0
  %161 = vmatprep.subr.bf16.mxu0 0
  %162 = vmatpush1.bf16.msra.mxu0 0
  %163 = vmatprep.subr.bf16.mxu0 0
  %164 = vmatpush1.bf16.msra.mxu0 0
  %165 = vmatprep.subr.bf16.mxu0 0
  %166 = vmatpush1.bf16.msra.mxu0 0
  %167 = vmatprep.subr.bf16.mxu0 0
  %168 = vmatpush1.bf16.msra.mxu0 0
  %169 = vmatprep.subr.bf16.mxu0 0
  %170 = vmatpush1.bf16.msra.mxu0 0
  %171 = vmatprep.mubr.bf16.mxu0 0
  %172 = vmatmul.mubr.bf16.gmra.mrb[0].mxu0 %v55
  %v173 = vpop.f32.mrb[0].mxu0
  %v174 = vadd.f32 %v40, %v173
  %v175 = vpop.f32.mrb[0].mxu0
  %v176 = vadd.f32 %v44, %v175
  %v177 = vpop.f32.mrb[0].mxu0
  %v178 = vadd.f32 %v40, %v177
  %v179 = vpop.f32.mrb[0].mxu0
  %v180 = vadd.f32 %v44, %v179
  %181 = vmatprep.mubr.bf16.mxu0 0
  %182 = vmatmul.mubr.bf16.gmra.mrb[0].mxu0 %v56
  %v183 = vpop.f32.mrb[0].mxu0
  %v184 = vadd.f32 %v40, %v183
  %v185 = vpop.f32.mrb[0].mxu0
  %v186 = vadd.f32 %v44, %v185
  %v187 = vpop.f32.mrb[0].mxu0
  %v188 = vadd.f32 %v40, %v187
  %v189 = vpop.f32.mrb[0].mxu0
  %v190 = vadd.f32 %v44, %v189
  %191 = vdwg.mxu0
  %v192 = vmul.f32 %v174, 0.5
  %v193 = vmul.f32 %v176, 0.5
  %v194 = vmul.f32 %v178, 0.5
  %v195 = vmul.f32 %v180, 0.5
  %v196 = vmul.f32 %v184, 0.5
  %v197 = vmul.f32 %v186, 0.5
  %v198 = vmul.f32 %v188, 0.5
  %v199 = vmul.f32 %v190, 0.5
  %v200 = vmul.f32 %v174, 0.044715
  %v201 = vmul.f32 %v176, 0.044715
  %v202 = vmul.f32 %v178, 0.044715
  %v203 = vmul.f32 %v180, 0.044715
  %v204 = vmul.f32 %v184, 0.044715
  %v205 = vmul.f32 %v186, 0.044715
  %v206 = vmul.f32 %v188, 0.044715
  %v207 = vmul.f32 %v190, 0.044715
  %v208 = vmul.f32 %v200, %v174
  %v209 = vmul.f32 %v201, %v176
  %v210 = vmul.f32 %v202, %v178
  %v211 = vmul.f32 %v203, %v180
  %v212 = vmul.f32 %v204, %v184
  %v213 = vmul.f32 %v205, %v186
  %v214 = vmul.f32 %v206, %v188
  %v215 = vmul.f32 %v207, %v190
  %v216 = vmul.f32 %v208, %v174
  %v217 = vmul.f32 %v209, %v176
  %v218 = vmul.f32 %v210, %v178
  %v219 = vmul.f32 %v211, %v180
  %v220 = vmul.f32 %v212, %v184
  %v221 = vmul.f32 %v213, %v186
  %v222 = vmul.f32 %v214, %v188
  %v223 = vmul.f32 %v215, %v190
  %v224 = vadd.f32 %v174, %v216
  %v225 = vadd.f32 %v176, %v217
  %v226 = vadd.f32 %v178, %v218
  %v227 = vadd.f32 %v180, %v219
  %v228 = vadd.f32 %v184, %v220
  %v229 = vadd.f32 %v186, %v221
  %v230 = vadd.f32 %v188, %v222
  %v231 = vadd.f32 %v190, %v223
  %v232 = vmul.f32 %v224, 0.7978846
  %v233 = vmul.f32 %v225, 0.7978846
  %v234 = vmul.f32 %v226, 0.7978846
  %v235 = vmul.f32 %v227, 0.7978846
  %v236 = vmul.f32 %v228, 0.7978846
  %v237 = vmul.f32 %v229, 0.7978846
  %v238 = vmul.f32 %v230, 0.7978846
  %v239 = vmul.f32 %v231, 0.7978846
  %v240 = vtanh.pop %v232
  %v241 = vtanh.pop %v233
  %v242 = vtanh.pop %v234
  %v243 = vtanh.pop %v235
  %v244 = vtanh.pop %v236
  %v245 = vtanh.pop %v237
  %v246 = vtanh.pop %v238
  %v247 = vtanh.pop %v239
  %v248 = vadd.f32 %v240, 1.0
  %v249 = vadd.f32 %v241, 1.0
  %v250 = vadd.f32 %v242, 1.0
  %v251 = vadd.f32 %v243, 1.0
  %v252 = vadd.f32 %v244, 1.0
  %v253 = vadd.f32 %v245, 1.0
  %v254 = vadd.f32 %v246, 1.0
  %v255 = vadd.f32 %v247, 1.0
  %v256 = vmul.f32 %v192, %v248
  %v257 = vmul.f32 %v193, %v249
  %v258 = vmul.f32 %v194, %v250
  %v259 = vmul.f32 %v195, %v251
  %v260 = vmul.f32 %v196, %v252
  %v261 = vmul.f32 %v197, %v253
  %v262 = vmul.f32 %v198, %v254
  %v263 = vmul.f32 %v199, %v255
  %v264 = vpack.c.bf16 %v258, %v256
  %v265 = vpack.c.bf16 %v259, %v257
  %v266 = vpack.c.bf16 %v262, %v260
  %v267 = vpack.c.bf16 %v263, %v261
  %v272 = vunpack.c.l.b16 %v264
  %v273 = vunpack.c.l.b16 %v265
  %v274 = vunpack.c.h.b16 %v264
  %v275 = vunpack.c.h.b16 %v265
  %v276 = vunpack.c.l.b16 %v266
  %v277 = vunpack.c.l.b16 %v267
  %v278 = vunpack.c.h.b16 %v266
  %v279 = vunpack.c.h.b16 %v267
  %v280 = vpack.c.b16 %v273, %v272
  %v281 = vpack.c.b16 %v275, %v274
  %v282 = vpack.c.b16 %v277, %v276
  %v283 = vpack.c.b16 %v279, %v278
  %288 = vst [vmem:[%s3] sm:$0xff] %v280
  %289 = vst [vmem:[%s3 + $0x8] sm:$0xff] %v281
  %290 = vst [vmem:[%s3 + $0x10] sm:$0xff] %v282
  %291 = vst [vmem:[%s3 + $0x18] sm:$0xff] %v283
  // Predicated region
  $region14: #{bert_token_classifier_forward.22} parent=0 // pred_check
    _
  $region15: #{bert_token_classifier_forward.22} parent=0 // pred_check_branch
    %293 = sbr.rel (0) target = $region17
  $region16: #{bert_token_classifier_forward.22} parent=0 // pred_region
    _
  $region17: #{bert_token_classifier_forward.22} parent=0 // pred_fallthru
    _
  // Predicated region
  $region18: #{bert_token_classifier_forward.22} parent=0 // pred_check
    _
  $region19: #{bert_token_classifier_forward.22} parent=0 // pred_check_branch
    %295 = sbr.rel (0) target = $region21
  $region20: #{bert_token_classifier_forward.22} parent=0 // pred_region
    _
  $region21: #{bert_token_classifier_forward.22} parent=0 // pred_fallthru
    _

// kernel: bert_token_classifier_forward.32
$region0: #{bert_token_classifier_forward.32}
  #allocation0 [shape = 'u32[]', space=smem, size = 0x4, offset = 0x4, fixed_abs, tag = 'smem constant byte address 0x4 - core index']
  #allocation1 [shape = 'u32[144,128]{1,0:T(1,128)}', space=vmem, size = 0x12000, scoped, tag = 'internal scratch']
  %s0 = inlined_call_operand.vmem [shape: bf16[32,128], index: 0, kind: input, shape index: {}]
  %s1 = inlined_call_operand.vmem [shape: bf16[128,128], index: 1, kind: input, shape index: {}]
  %s2 = inlined_call_operand.vmem [shape: f32[1,128], index: 2, kind: input, shape index: {}]
  %s3 = inlined_call_operand.vmem [shape: f32[32,128], index: 3, kind: output, shape index: {}]
  %s4 = sld [smem:[#allocation0]]
  $region22: #{bert_token_classifier_forward.32} parent=0
    _
  %s6 = ssub.s32 1, %s4
  %s7 = scalar_select 0, %s6, %s4
  // Predicated region
  $region2: #{bert_token_classifier_forward.32} parent=0 // pred_check
    _
  $region3: #{bert_token_classifier_forward.32} parent=0 // pred_check_branch
    %9 = sbr.rel (0) target = $region5
  $region4: #{bert_token_classifier_forward.32} parent=0 // pred_region
    _
  $region5: #{bert_token_classifier_forward.32} parent=0 // pred_fallthru
    _
  // Predicated region
  $region6: #{bert_token_classifier_forward.32} parent=0 // pred_check
    _
  $region7: #{bert_token_classifier_forward.32} parent=0 // pred_check_branch
    %11 = sbr.rel (0) target = $region9
  $region8: #{bert_token_classifier_forward.32} parent=0 // pred_region
    _
  $region9: #{bert_token_classifier_forward.32} parent=0 // pred_fallthru
    _
  // Predicated region
  $region10: #{bert_token_classifier_forward.32} parent=0 // pred_check
    _
  $region11: #{bert_token_classifier_forward.32} parent=0 // pred_check_branch
    %13 = sbr.rel (0) target = $region13
  $region12: #{bert_token_classifier_forward.32} parent=0 // pred_region
    _
  $region13: #{bert_token_classifier_forward.32} parent=0 // pred_fallthru
    _
  %v15 = vld [vmem:[%s0] sm:$0xf]
  %v16 = vld [vmem:[%s0 + $0x4] sm:$0xf]
  %v17 = vld [vmem:[%s0 + $0x8] sm:$0xf]
  %v18 = vld [vmem:[%s0 + $0xc] sm:$0xf]
  %v19 = vld [vmem:[%s1] sm:$0xf]
  %v20 = vld [vmem:[%s1 + $0x4] sm:$0xf]
  %v21 = vld [vmem:[%s1 + $0x8] sm:$0xf]
  %v22 = vld [vmem:[%s1 + $0xc] sm:$0xf]
  %v23 = vld [vmem:[%s1 + $0x10] sm:$0xf]
  %v24 = vld [vmem:[%s1 + $0x14] sm:$0xf]
  %v25 = vld [vmem:[%s1 + $0x18] sm:$0xf]
  %v26 = vld [vmem:[%s1 + $0x1c] sm:$0xf]
  %v27 = vld [vmem:[%s1 + $0x20] sm:$0xf]
  %v28 = vld [vmem:[%s1 + $0x24] sm:$0xf]
  %v29 = vld [vmem:[%s1 + $0x28] sm:$0xf]
  %v30 = vld [vmem:[%s1 + $0x2c] sm:$0xf]
  %v31 = vld [vmem:[%s1 + $0x30] sm:$0xf]
  %v32 = vld [vmem:[%s1 + $0x34] sm:$0xf]
  %v33 = vld [vmem:[%s1 + $0x38] sm:$0xf]
  %v34 = vld [vmem:[%s1 + $0x3c] sm:$0xf]
  %v35 = vld [vmem:[%s2] sm:$0x1]
  %v37 = vlaneseq
  %v38 = vshrl.u32 %v37, 7
  %v39 = vsub.s32 0, %v38
  %v40 = vrot.slane %v35, %v39
  %v46 = vunpack.c.l.b16 %v15
  %v47 = vunpack.c.l.b16 %v16
  %v48 = vunpack.c.l.b16 %v17
  %v49 = vunpack.c.l.b16 %v18
  %v50 = vpack.c.b16 %v47, %v46
  %v51 = vpack.c.b16 %v49, %v48
  %v70 = vunpack.c.l.b16 %v19
  %v71 = vunpack.c.l.b16 %v20
  %v72 = vunpack.c.l.b16 %v21
  %v73 = vunpack.c.l.b16 %v22
  %v74 = vunpack.c.l.b16 %v23
  %v75 = vunpack.c.l.b16 %v24
  %v76 = vunpack.c.l.b16 %v25
  %v77 = vunpack.c.l.b16 %v26
  %v78 = vunpack.c.l.b16 %v27
  %v79 = vunpack.c.l.b16 %v28
  %v80 = vunpack.c.l.b16 %v29
  %v81 = vunpack.c.l.b16 %v30
  %v82 = vunpack.c.l.b16 %v31
  %v83 = vunpack.c.l.b16 %v32
  %v84 = vunpack.c.l.b16 %v33
  %v85 = vunpack.c.l.b16 %v34
  %v86 = vpack.c.b16 %v71, %v70
  %v87 = vpack.c.b16 %v73, %v72
  %v88 = vpack.c.b16 %v75, %v74
  %v89 = vpack.c.b16 %v77, %v76
  %v90 = vpack.c.b16 %v79, %v78
  %v91 = vpack.c.b16 %v81, %v80
  %v92 = vpack.c.b16 %v83, %v82
  %v93 = vpack.c.b16 %v85, %v84
  %102 = vmatprep.subr.bf16.mxu0 0
  %103 = vmatpush1.bf16.msra.mxu0 %v86
  %104 = vmatprep.subr.bf16.mxu0 0
  %105 = vmatpush1.bf16.msra.mxu0 %v87
  %106 = vmatprep.subr.bf16.mxu0 0
  %107 = vmatpush1.bf16.msra.mxu0 %v88
  %108 = vmatprep.subr.bf16.mxu0 0
  %109 = vmatpush1.bf16.msra.mxu0 %v89
  %110 = vmatprep.subr.bf16.mxu0 0
  %111 = vmatpush1.bf16.msra.mxu0 %v90
  %112 = vmatprep.subr.bf16.mxu0 0
  %113 = vmatpush1.bf16.msra.mxu0 %v91
  %114 = vmatprep.subr.bf16.mxu0 0
  %115 = vmatpush1.bf16.msra.mxu0 %v92
  %116 = vmatprep.subr.bf16.mxu0 0
  %117 = vmatpush1.bf16.msra.mxu0 %v93
  %118 = vmatprep.subr.bf16.mxu0 0
  %119 = vmatpush1.bf16.msra.mxu0 0
  %120 = vmatprep.subr.bf16.mxu0 0
  %121 = vmatpush1.bf16.msra.mxu0 0
  %122 = vmatprep.subr.bf16.mxu0 0
  %123 = vmatpush1.bf16.msra.mxu0 0
  %124 = vmatprep.subr.bf16.mxu0 0
  %125 = vmatpush1.bf16.msra.mxu0 0
  %126 = vmatprep.subr.bf16.mxu0 0
  %127 = vmatpush1.bf16.msra.mxu0 0
  %128 = vmatprep.subr.bf16.mxu0 0
  %129 = vmatpush1.bf16.msra.mxu0 0
  %130 = vmatprep.subr.bf16.mxu0 0
  %131 = vmatpush1.bf16.msra.mxu0 0
  %132 = vmatprep.subr.bf16.mxu0 0
  %133 = vmatpush1.bf16.msra.mxu0 0
  %134 = vmatprep.mubr.bf16.mxu0 0
  %135 = vmatmul.mubr.bf16.gmra.mrb[0].mxu0 %v50
  %v136 = vpop.f32.mrb[0].mxu0
  %v137 = vadd.f32 %v40, %v136
  %v138 = vpop.f32.mrb[0].mxu0
  %v139 = vpop.f32.mrb[0].mxu0
  %v140 = vadd.f32 %v40, %v139
  %v141 = vpop.f32.mrb[0].mxu0
  %142 = vmatprep.mubr.bf16.mxu0 0
  %143 = vmatmul.mubr.bf16.gmra.mrb[0].mxu0 %v51
  %v144 = vpop.f32.mrb[0].mxu0
  %v145 = vadd.f32 %v40, %v144
  %v146 = vpop.f32.mrb[0].mxu0
  %v147 = vpop.f32.mrb[0].mxu0
  %v148 = vadd.f32 %v40, %v147
  %v149 = vpop.f32.mrb[0].mxu0
  %150 = vdwg.mxu0
  %151 = vst [vmem:[%s3] sm:$0xff] %v137
  %152 = vst [vmem:[%s3 + $0x8] sm:$0xff] %v140
  %153 = vst [vmem:[%s3 + $0x10] sm:$0xff] %v145
  %154 = vst [vmem:[%s3 + $0x18] sm:$0xff] %v148
  // Predicated region
  $region14: #{bert_token_classifier_forward.32} parent=0 // pred_check
    _
  $region15: #{bert_token_classifier_forward.32} parent=0 // pred_check_branch
    %156 = sbr.rel (0) target = $region17
  $region16: #{bert_token_classifier_forward.32} parent=0 // pred_region
    _
  $region17: #{bert_token_classifier_forward.32} parent=0 // pred_fallthru
    _
  // Predicated region
  $region18: #{bert_token_classifier_forward.32} parent=0 // pred_check
    _
  $region19: #{bert_token_classifier_forward.32} parent=0 // pred_check_branch
    %158 = sbr.rel (0) target = $region21
  $region20: #{bert_token_classifier_forward.32} parent=0 // pred_region
    _
  $region21: #{bert_token_classifier_forward.32} parent=0 // pred_fallthru
    _

// kernel: bert_token_classifier_forward.33
$region0: #{bert_token_classifier_forward.33}
  #allocation0 [shape = 'u32[]', space=smem, size = 0x4, offset = 0x4, fixed_abs, tag = 'smem constant byte address 0x4 - core index']
  #allocation1 [shape = 'u32[144,128]{1,0:T(1,128)}', space=vmem, size = 0x12000, scoped, tag = 'internal scratch']
  #allocation2 [shape = 'f32[1,1]{1,0:T(1,128)}', space=vmem, size = 0x200, scoped, tag = 'scratch operand']
  #allocation3 [shape = 'f32[1,1]{1,0:T(1,128)}', space=vmem, size = 0x200, scoped, tag = 'scratch operand']
  %s0 = inlined_call_operand.vmem [shape: f32[32,128], index: 0, kind: input, shape index: {}]
  %s1 = inlined_call_operand.vmem [shape: s32[32,1], index: 1, kind: input, shape index: {}]
  %s2 = inlined_call_operand.vmem [shape: f32[32,1], index: 2, kind: input, shape index: {}]
  %s3 = inlined_call_operand.hbm [shape: f32[1,1], index: 3, kind: output, shape index: {}]
  %s4 = sld [smem:[#allocation0]]
  $region30: #{bert_token_classifier_forward.33} parent=0
    _
  %s6 = ssub.s32 1, %s4
  %s7 = scalar_select 0, %s6, %s4
  $region1: #{bert_token_classifier_forward.33} parent=0
    #allocation4 [shape = 'u8[512]{0}', space=vmem, size = 0x400, scoped, tag = 'output window, operand 0, single buffered']
    #allocation5 [shape = 's32[1]{0}', space=sflag, size = 0x4, scoped, tag = 'scoped memory for bert_token_classifier_forward.33']
    %8 = vsyncpa [#allocation5], 0
    // Predicated region
    $region2: #{bert_token_classifier_forward.33} parent=1 // pred_check
      _
    $region3: #{bert_token_classifier_forward.33} parent=1 // pred_check_branch
      %10 = sbr.rel (0) target = $region5
    $region4: #{bert_token_classifier_forward.33} parent=1 // pred_region
      _
    $region5: #{bert_token_classifier_forward.33} parent=1 // pred_fallthru
      _
    // Predicated region
    $region6: #{bert_token_classifier_forward.33} parent=1 // pred_check
      _
    $region7: #{bert_token_classifier_forward.33} parent=1 // pred_check_branch
      %12 = sbr.rel (0) target = $region9
    $region8: #{bert_token_classifier_forward.33} parent=1 // pred_region
      _
    $region9: #{bert_token_classifier_forward.33} parent=1 // pred_fallthru
      _
    // Predicated region
    $region10: #{bert_token_classifier_forward.33} parent=1 // pred_check
      _
    $region11: #{bert_token_classifier_forward.33} parent=1 // pred_check_branch
      %14 = sbr.rel (0) target = $region13
    $region12: #{bert_token_classifier_forward.33} parent=1 // pred_region
      _
    $region13: #{bert_token_classifier_forward.33} parent=1 // pred_fallthru
      _
    %p15 = scmp.eq.s32.totalorder 0, 0
    // Predicated region
    $region14: #{bert_token_classifier_forward.33} parent=1 // pred_check
      %p16 = pneg %p15
    $region15: #{bert_token_classifier_forward.33} parent=1 // pred_check_branch
      %18 = sbr.rel (%p16) target = $region17
    $region16: #{bert_token_classifier_forward.33} parent=1 // pred_region
      %vm19 = vcmask 0
      %20 = vst.msk [vmem:[#allocation2] sm:$0x1] %vm19, 0.0
      %21 = vst.msk [vmem:[#allocation3] sm:$0x1] %vm19, 0.0
    $region17: #{bert_token_classifier_forward.33} parent=1 // pred_fallthru
      _
    %v22 = vld [vmem:[%s0] sm:$0xff]
    %v23 = vld [vmem:[%s0 + $0x8] sm:$0xff]
    %v24 = vld [vmem:[%s0 + $0x10] sm:$0xff]
    %v25 = vld [vmem:[%s0 + $0x18] sm:$0xff]
    %v26 = vld [vmem:[%s1] sm:$0xff]
    %v27 = vld [vmem:[%s1 + $0x8] sm:$0xff]
    %v28 = vld [vmem:[%s1 + $0x10] sm:$0xff]
    %v29 = vld [vmem:[%s1 + $0x18] sm:$0xff]
    %v30 = vld [vmem:[%s2] sm:$0xff]
    %v31 = vld [vmem:[%s2 + $0x8] sm:$0xff]
    %v32 = vld [vmem:[%s2 + $0x10] sm:$0xff]
    %v33 = vld [vmem:[%s2 + $0x18] sm:$0xff]
    %34 = vmax.xlane.f32.xlu0 %v22
    %v35 = vpop.xlane.xlu0 %34
    %36 = vmax.xlane.f32.xlu0 %v23
    %v37 = vpop.xlane.xlu0 %36
    %38 = vmax.xlane.f32.xlu0 %v24
    %v39 = vpop.xlane.xlu0 %38
    %40 = vmax.xlane.f32.xlu0 %v25
    %v41 = vpop.xlane.xlu0 %40
    %v42 = vsub.f32 %v22, %v35
    %v43 = vsub.f32 %v23, %v37
    %v44 = vsub.f32 %v24, %v39
    %v45 = vsub.f32 %v25, %v41
    %v46 = vmul.f32 %v42, 1.442695
    %v47 = vpow.pop %v46
    %v48 = vmul.f32 %v43, 1.442695
    %v49 = vpow.pop %v48
    %v50 = vmul.f32 %v44, 1.442695
    %v51 = vpow.pop %v50
    %v52 = vmul.f32 %v45, 1.442695
    %v53 = vpow.pop %v52
    %54 = vadd.xlane.f32.xlu0 %v47
    %v55 = vpop.xlane.xlu0 %54
    %56 = vadd.xlane.f32.xlu0 %v49
    %v57 = vpop.xlane.xlu0 %56
    %58 = vadd.xlane.f32.xlu0 %v51
    %v59 = vpop.xlane.xlu0 %58
    %60 = vadd.xlane.f32.xlu0 %v53
    %v61 = vpop.xlane.xlu0 %60
    %v62 = vlog2.pop %v55
    %v63 = vmul.f32 %v62, 0.6931472
    %v64 = vlog2.pop %v57
    %v65 = vmul.f32 %v64, 0.6931472
    %v66 = vlog2.pop %v59
    %v67 = vmul.f32 %v66, 0.6931472
    %v68 = vlog2.pop %v61
    %v69 = vmul.f32 %v68, 0.6931472
    %v70 = vlaneseq
    %v71 = vand.u32 %v70, 127
    %72 = vset.pattern.permute.xlu0 0
    %73 = vperm.xlu0 %72, %v26
    %v74 = vpop.permute.xlu0 %73
    %75 = vset.pattern.permute.xlu0 0
    %76 = vperm.xlu0 %75, %v27
    %v77 = vpop.permute.xlu0 %76
    %78 = vset.pattern.permute.xlu0 0
    %79 = vperm.xlu0 %78, %v28
    %v80 = vpop.permute.xlu0 %79
    %81 = vset.pattern.permute.xlu0 0
    %82 = vperm.xlu0 %81, %v29
    %v83 = vpop.permute.xlu0 %82
    %vm84 = vcmp.eq.s32.totalorder %v71, %v74
    %vm85 = vcmp.eq.s32.totalorder %v71, %v77
    %vm86 = vcmp.eq.s32.totalorder %v71, %v80
    %vm87 = vcmp.eq.s32.totalorder %v71, %v83
    %v88 = vsel %vm84, %v42, 0.0
    %v89 = vsel %vm85, %v43, 0.0
    %v90 = vsel %vm86, %v44, 0.0
    %v91 = vsel %vm87, %v45, 0.0
    %92 = vadd.xlane.f32.xlu0 %v88
    %v93 = vpop.xlane.xlu0 %92
    %94 = vadd.xlane.f32.xlu0 %v89
    %v95 = vpop.xlane.xlu0 %94
    %96 = vadd.xlane.f32.xlu0 %v90
    %v97 = vpop.xlane.xlu0 %96
    %98 = vadd.xlane.f32.xlu0 %v91
    %v99 = vpop.xlane.xlu0 %98
    %v100 = vsub.f32 %v63, %v93
    %v101 = vsub.f32 %v65, %v95
    %v102 = vsub.f32 %v67, %v97
    %v103 = vsub.f32 %v69, %v99
    %v104 = vld [vmem:[#allocation2] sm:$0x1]
    %v105 = vmul.f32 %v100, %v30
    %v106 = vmul.f32 %v101, %v31
    %v107 = vmul.f32 %v102, %v32
    %v108 = vmul.f32 %v103, %v33
    %vm109 = vcmask 7168
    %v110 = vsel %vm109, %v105, 0.0
    %v111 = vsel %vm109, %v106, 0.0
    %v112 = vadd.f32 %v110, %v111
    %v113 = vsel %vm109, %v107, 0.0
    %v114 = vadd.f32 %v112, %v113
    %v115 = vsel %vm109, %v108, 0.0
    %v116 = vadd.f32 %v114, %v115
    %v117 = vrot.slane %v116, 4
    %v118 = vadd.f32 %v116, %v117
    %v119 = vrot.slane %v118, 2
    %v120 = vadd.f32 %v118, %v119
    %v121 = vrot.slane %v120, 1
    %v122 = vadd.f32 %v120, %v121
    %v123 = vadd.f32 %v104, %v122
    %vm124 = vcmask 0
    %125 = vst.msk [vmem:[#allocation2] sm:$0x1] %vm124, %v123
    %v126 = vld [vmem:[#allocation3] sm:$0x1]
    %v127 = vsel %vm109, %v30, 0.0
    %v128 = vsel %vm109, %v31, 0.0
    %v129 = vadd.f32 %v127, %v128
    %v130 = vsel %vm109, %v32, 0.0
    %v131 = vadd.f32 %v129, %v130
    %v132 = vsel %vm109, %v33, 0.0
    %v133 = vadd.f32 %v131, %v132
    %v134 = vrot.slane %v133, 4
    %v135 = vadd.f32 %v133, %v134
    %v136 = vrot.slane %v135, 2
    %v137 = vadd.f32 %v135, %v136
    %v138 = vrot.slane %v137, 1
    %v139 = vadd.f32 %v137, %v138
    %v140 = vadd.f32 %v126, %v139
    %141 = vst.msk [vmem:[#allocation3] sm:$0x1] %vm124, %v140
    // Predicated region
    $region18: #{bert_token_classifier_forward.33} parent=1 // pred_check
      %p142 = pneg %p15
    $region19: #{bert_token_classifier_forward.33} parent=1 // pred_check_branch
      %144 = sbr.rel (%p142) target = $region21
    $region20: #{bert_token_classifier_forward.33} parent=1 // pred_region
      %v145 = vld [vmem:[#allocation2] sm:$0x1]
      %v146 = vld [vmem:[#allocation3] sm:$0x1]
      %v147 = vmax.f32 %v146, 1.0
      %v148 = vrcp.pop %v147
      %v149 = vmul.f32 %v145, %v148
      %150 = vst.msk [vmem:[#allocation4] sm:$0x1] %vm124, %v149
    $region21: #{bert_token_classifier_forward.33} parent=1 // pred_fallthru
      _
    // Predicated region
    $region22: #{bert_token_classifier_forward.33} parent=1 // pred_check
      _
    $region23: #{bert_token_classifier_forward.33} parent=1 // pred_check_branch
      %152 = sbr.rel (0) target = $region25
    $region24: #{bert_token_classifier_forward.33} parent=1 // pred_region
      %s154 = ssub.s32 16, 16
      %155 = vsyncadd [#allocation5], %s154
      %s157 = sshll.u32 [#allocation4], 4
      %s158 = int_to_ptr.vmem [resolvable:$true] %s157
      %160 = dma.vmem_to_hbm [thread:$0]  %s158, 16, %s3, [#allocation5]
    $region25: #{bert_token_classifier_forward.33} parent=1 // pred_fallthru
      _
    // Predicated region
    $region26: #{bert_token_classifier_forward.33} parent=1 // pred_check
      _
    $region27: #{bert_token_classifier_forward.33} parent=1 // pred_check_branch
      %162 = sbr.rel (0) target = $region29
    $region28: #{bert_token_classifier_forward.33} parent=1 // pred_region
      %163 = dma.done [#allocation5], 16
    $region29: #{bert_token_classifier_forward.33} parent=1 // pred_fallthru
      _
    %164 = vsyncpa [#allocation5], 1

</llo_original>
